<compile_context>
chip_gen: v5e
topology: v5e:2x2
jax: 0.10.0
libtpu: 0.0.40
codegen_flags: <defaults>
</compile_context>

<pallas_src>
import functools

import jax
import jax.numpy as jnp
from jax.experimental import pallas as pl
from jax.experimental.pallas import tpu as pltpu

EPS = 1e-5
LANE = 128
VMEM_LIMIT = 32 * 1024 * 1024  # stay well under v7x's 64 MiB physical VMEM


# ----------------------------- small helpers ---------------------------------

def _round_up(x, m):
    return (x + m - 1) // m * m


def _pick_tm(m, cap=1024):
    """Largest divisor of m that is <= cap and a multiple of 8 (sublane)."""
    cap = min(cap, m)
    for t in range(cap, 7, -1):
        if m % t == 0 and t % 8 == 0:
            return t
    return m  # fallback: single block


def _cparams():
    return pltpu.CompilerParams(dimension_semantics=("parallel",),
                                vmem_limit_bytes=VMEM_LIMIT)


def _row_spec(tm, c):
    return pl.BlockSpec((tm, c), lambda i: (i, 0))


def _resident_spec(shape):
    zeros = (0,) * len(shape)
    return pl.BlockSpec(shape, lambda i: zeros)


def _pad2(w, r, c):
    return jnp.pad(w, ((0, r - w.shape[0]), (0, c - w.shape[1])))


def _pad_row(v, c):
    return jnp.pad(v, ((0, 0), (0, c - v.shape[1])))


def _bn_fold(pstats, count, gamma, beta):
    """Partial (sum, sumsq) -> per-channel BN scale/shift (training-mode stats)."""
    s = jnp.sum(pstats, axis=0)                       # (2, C)
    mean = s[0] / count
    var = jnp.maximum(s[1] / count - mean * mean, 0.0)  # biased variance
    scale = gamma[0] * jax.lax.rsqrt(var + EPS)
    shift = beta[0] - mean * scale
    return scale[None, :].astype(jnp.float32), shift[None, :].astype(jnp.float32)


def _stats_rows(yf):
    return jnp.concatenate([jnp.sum(yf, axis=0, keepdims=True),
                            jnp.sum(yf * yf, axis=0, keepdims=True)], axis=0)


# ----------------------------- kernels ----------------------------------------

def _conv1_kernel(x_ref, w_ref, y_ref, ps_ref):
    # 1x1 conv tile (no bias: BN cancels it) + per-tile BN1 partial stats.
    y = jnp.dot(x_ref[...], w_ref[...], preferred_element_type=jnp.float32)
    yb = y.astype(y_ref.dtype)
    yf = yb.astype(jnp.float32)
    y_ref[...] = yb
    ps_ref[0] = _stats_rows(yf)


def _bn_apply_relu_kernel(x_ref, sc_ref, sh_ref, o_ref):
    y = x_ref[...].astype(jnp.float32) * sc_ref[...] + sh_ref[...]
    o_ref[...] = jnp.maximum(y, 0.0).astype(o_ref.dtype)


def _make_conv2_kernel(row_start, col_start, ho, wo):
    # 3x3 conv for one image: every tap is a contiguous (ho, wo) window of the
    # (parity-repacked) padded activation held in VMEM -> no im2col in HBM.
    def kernel(xp_ref, w_ref, y_ref, ps_ref):
        cm = w_ref.shape[-1]
        acc = jnp.zeros((ho * wo, cm), jnp.float32)
        for k in range(9):  # static unroll over taps; accumulate in f32
            lhs = xp_ref[0, pl.ds(row_start[k], ho), pl.ds(col_start[k], wo), :]
            acc = acc + jnp.dot(lhs.reshape(ho * wo, cm), w_ref[k],
                                preferred_element_type=jnp.float32)
        yb = acc.astype(y_ref.dtype)
        yf = yb.astype(jnp.float32)
        y_ref[0] = yb
        ps_ref[0] = _stats_rows(yf)
    return kernel


def _bn_relu_conv3_kernel(x_ref, sc_ref, sh_ref, w_ref, y_ref, ps_ref):
    # BN2-apply + ReLU fused as prologue of the conv3 (1x1) matmul, plus BN3
    # partial stats on the output tile.
    a = jnp.maximum(x_ref[...].astype(jnp.float32) * sc_ref[...] + sh_ref[...], 0.0)
    y = jnp.dot(a.astype(jnp.bfloat16), w_ref[...],
                preferred_element_type=jnp.float32)
    yb = y.astype(y_ref.dtype)
    yf = yb.astype(jnp.float32)
    y_ref[...] = yb
    ps_ref[0] = _stats_rows(yf)


def _bn_add_relu_proj_kernel(y3_ref, sc_ref, sh_ref, xs_ref, ws_ref, bs_ref, o_ref):
    # shortcut projection matmul + BN3-apply + add + ReLU (fused final kernel).
    s = jnp.dot(xs_ref[...], ws_ref[...], preferred_element_type=jnp.float32)
    s = s + bs_ref[...]
    y = y3_ref[...].astype(jnp.float32) * sc_ref[...] + sh_ref[...]
    o_ref[...] = jnp.maximum(y + s, 0.0).astype(o_ref.dtype)


def _bn_add_relu_id_kernel(y3_ref, sc_ref, sh_ref, s_ref, o_ref):
    y = y3_ref[...].astype(jnp.float32) * sc_ref[...] + sh_ref[...]
    o_ref[...] = jnp.maximum(y + s_ref[...].astype(jnp.float32), 0.0).astype(o_ref.dtype)


# ------------------------- pallas_call wrappers --------------------------------

def conv1x1_with_stats(x2d, w, tm):
    m, ci = x2d.shape
    co = w.shape[1]
    nm = m // tm
    return pl.pallas_call(
        _conv1_kernel,
        out_shape=(jax.ShapeDtypeStruct((m, co), jnp.bfloat16),
                   jax.ShapeDtypeStruct((nm, 2, co), jnp.float32)),
        grid=(nm,),
        in_specs=[_row_spec(tm, ci), _resident_spec((ci, co))],
        out_specs=[_row_spec(tm, co),
                   pl.BlockSpec((1, 2, co), lambda i: (i, 0, 0))],
        compiler_params=_cparams(),
    )(x2d, w)


def bn_apply_relu(x, scale, shift, tm):
    m, c = x.shape
    nm = m // tm
    return pl.pallas_call(
        _bn_apply_relu_kernel,
        out_shape=jax.ShapeDtypeStruct((m, c), jnp.bfloat16),
        grid=(nm,),
        in_specs=[_row_spec(tm, c), _resident_spec((1, c)), _resident_spec((1, c))],
        out_specs=_row_spec(tm, c),
        compiler_params=_cparams(),
    )(x, scale, shift)


def conv3x3_with_stats(xp, w2, row_start, col_start, ho, wo):
    n, rp, cp, cm = xp.shape
    kernel = _make_conv2_kernel(tuple(row_start), tuple(col_start), ho, wo)
    return pl.pallas_call(
        kernel,
        out_shape=(jax.ShapeDtypeStruct((n, ho * wo, cm), jnp.bfloat16),
                   jax.ShapeDtypeStruct((n, 2, cm), jnp.float32)),
        grid=(n,),
        in_specs=[pl.BlockSpec((1, rp, cp, cm), lambda i: (i, 0, 0, 0)),
                  pl.BlockSpec((9, cm, cm), lambda i: (0, 0, 0))],
        out_specs=[pl.BlockSpec((1, ho * wo, cm), lambda i: (i, 0, 0)),
                   pl.BlockSpec((1, 2, cm), lambda i: (i, 0, 0))],
        compiler_params=_cparams(),
    )(xp, w2)


def bn_relu_conv1x1_with_stats(x, scale, shift, w, tm):
    m, ci = x.shape
    co = w.shape[1]
    nm = m // tm
    return pl.pallas_call(
        _bn_relu_conv3_kernel,
        out_shape=(jax.ShapeDtypeStruct((m, co), jnp.bfloat16),
                   jax.ShapeDtypeStruct((nm, 2, co), jnp.float32)),
        grid=(nm,),
        in_specs=[_row_spec(tm, ci), _resident_spec((1, ci)), _resident_spec((1, ci)),
                  _resident_spec((ci, co))],
        out_specs=[_row_spec(tm, co),
                   pl.BlockSpec((1, 2, co), lambda i: (i, 0, 0))],
        compiler_params=_cparams(),
    )(x, scale, shift, w)


def bn_add_relu_proj(y3, scale, shift, xs, ws, bs, tm):
    m, co = y3.shape
    ci = xs.shape[1]
    nm = m // tm
    return pl.pallas_call(
        _bn_add_relu_proj_kernel,
        out_shape=jax.ShapeDtypeStruct((m, co), jnp.float32),
        grid=(nm,),
        in_specs=[_row_spec(tm, co), _resident_spec((1, co)), _resident_spec((1, co)),
                  _row_spec(tm, ci), _resident_spec((ci, co)), _resident_spec((1, co))],
        out_specs=_row_spec(tm, co),
        compiler_params=_cparams(),
    )(y3, scale, shift, xs, ws, bs)


def bn_add_relu_identity(y3, scale, shift, s, tm):
    m, co = y3.shape
    nm = m // tm
    return pl.pallas_call(
        _bn_add_relu_id_kernel,
        out_shape=jax.ShapeDtypeStruct((m, co), jnp.float32),
        grid=(nm,),
        in_specs=[_row_spec(tm, co), _resident_spec((1, co)), _resident_spec((1, co)),
                  _row_spec(tm, co)],
        out_specs=_row_spec(tm, co),
        compiler_params=_cparams(),
    )(y3, scale, shift, s)


# ------------------------------ module forward ---------------------------------

def res_bottleneck_block(x_nchw, params, *, downsampling=True, projection=True):
    """Forward of ResBottleNeckBlock. x_nchw: (N, Cin, H, W) -> (N, Cout, Ho, Wo)."""
    n, cin, h, w = x_nchw.shape
    stride = 2 if downsampling else 1
    ho, wo = h // stride, w // stride
    cmid = params["w1"].shape[1]
    cout = params["w3"].shape[1]

    if not projection and (downsampling or cin != cout):
        raise ValueError("identity shortcut requires stride=1 and Cin == Cout")
    if stride == 2 and (h % 2 or w % 2):
        raise ValueError("downsampling path requires even H and W")

    bf16 = jnp.bfloat16
    cin_p = _round_up(cin, LANE)
    cm_p = _round_up(cmid, LANE)
    co_p = _round_up(cout, LANE)

    # Lane-pad parameters with zeros: padded channels stay exactly zero through
    # the whole block (gamma/beta pads are zero too).
    w1 = _pad2(params["w1"], cin_p, cm_p).astype(bf16)
    w2 = jnp.pad(params["w2"],
                 ((0, 0), (0, cm_p - cmid), (0, cm_p - cmid))).astype(bf16)
    w3 = _pad2(params["w3"], cm_p, co_p).astype(bf16)
    ws = _pad2(params["ws"], cin_p, co_p).astype(bf16)
    bs = _pad_row(params["bs"], co_p).astype(jnp.float32)
    g1, bt1 = _pad_row(params["g1"], cm_p), _pad_row(params["bt1"], cm_p)
    g2, bt2 = _pad_row(params["g2"], cm_p), _pad_row(params["bt2"], cm_p)
    g3, bt3 = _pad_row(params["g3"], co_p), _pad_row(params["bt3"], co_p)

    # NCHW -> NHWC once, lane-pad channels, bf16 matmul operands.
    x = jnp.transpose(x_nchw, (0, 2, 3, 1)).astype(jnp.float32)
    x_p = jnp.pad(x, ((0, 0), (0, 0), (0, 0), (0, cin_p - cin)))
    x_bf = x_p.astype(bf16)

    # ---- conv1 (1x1) + BN1 stats, then BN1-apply + ReLU ----
    m1 = n * h * w
    tm1 = _pick_tm(m1)
    y1, ps1 = conv1x1_with_stats(x_bf.reshape(m1, cin_p), w1, tm1)
    sc1, sh1 = _bn_fold(ps1, float(m1), g1, bt1)
    y1a = bn_apply_relu(y1, sc1, sh1, tm1)

    # ---- spatial zero-pad (padding=1); for stride 2, parity-repack so each
    #      3x3 tap is a contiguous (Ho, Wo) window (no 9x im2col) ----
    y1a = y1a.reshape(n, h, w, cm_p)
    y1p = jnp.pad(y1a, ((0, 0), (1, 1), (1, 1), (0, 0)))
    hp, wp = h + 2, w + 2
    if stride == 2:
        hp2, wp2 = hp // 2, wp // 2
        xp = (y1p.reshape(n, hp2, 2, wp2, 2, cm_p)
                  .transpose(0, 2, 1, 4, 3, 5)
                  .reshape(n, hp, wp, cm_p))
        r_start = [(kh % 2) * hp2 + kh // 2 for kh in range(3)]
        c_start = [(kw % 2) * wp2 + kw // 2 for kw in range(3)]
    else:
        xp = y1p
        r_start = [0, 1, 2]
        c_start = [0, 1, 2]
    taps_r = [r_start[k // 3] for k in range(9)]
    taps_c = [c_start[k % 3] for k in range(9)]

    # ---- conv2 (3x3, stride) + BN2 stats ----
    y2, ps2 = conv3x3_with_stats(xp, w2, taps_r, taps_c, ho, wo)
    m2 = n * ho * wo
    sc2, sh2 = _bn_fold(ps2, float(m2), g2, bt2)

    # ---- BN2-apply + ReLU + conv3 (1x1) + BN3 stats (fused) ----
    tm2 = _pick_tm(m2)
    y3, ps3 = bn_relu_conv1x1_with_stats(y2.reshape(m2, cm_p), sc2, sh2, w3, tm2)
    sc3, sh3 = _bn_fold(ps3, float(m2), g3, bt3)

    # ---- shortcut + BN3-apply + add + ReLU (fused) ----
    if projection:
        xs = x_bf[:, ::stride, ::stride, :].reshape(m2, cin_p)
        out = bn_add_relu_proj(y3, sc3, sh3, xs, ws, bs, tm2)
    else:
        out = bn_add_relu_identity(y3, sc3, sh3, x_p.reshape(m2, cin_p), tm2)

    out = out.reshape(n, ho, wo, co_p)[..., :cout]
    # TODO(synk): keep NHWC if the downstream consumer accepts it (saves a pass).
    return jnp.transpose(out, (0, 3, 1, 2))


# ------------------------------ parameter init ----------------------------------

def init_params(key, cin, cmid, cout):
    # Conv biases b1/b2/b3 are omitted: training-mode BatchNorm subtracts the
    # per-channel mean right after each conv, so they are mathematically dead.
    ks = jax.random.split(key, 11)
    f32 = jnp.float32
    return {
        "w1": 0.1 * jax.random.normal(ks[0], (cin, cmid), f32),
        "w2": 0.1 * jax.random.normal(ks[1], (9, cmid, cmid), f32),
        "w3": 0.1 * jax.random.normal(ks[2], (cmid, cout), f32),
        "ws": 0.1 * jax.random.normal(ks[3], (cin, cout), f32),
        "bs": 0.1 * jax.random.normal(ks[4], (1, cout), f32),
        "g1": 1.0 + 0.1 * jax.random.normal(ks[5], (1, cmid), f32),
        "bt1": 0.1 * jax.random.normal(ks[6], (1, cmid), f32),
        "g2": 1.0 + 0.1 * jax.random.normal(ks[7], (1, cmid), f32),
        "bt2": 0.1 * jax.random.normal(ks[8], (1, cmid), f32),
        "g3": 1.0 + 0.1 * jax.random.normal(ks[9], (1, cout), f32),
        "bt3": 0.1 * jax.random.normal(ks[10], (1, cout), f32),
    }


# ----------------------------------- main ----------------------------------------

if __name__ == "__main__":
    N, Cin, H, W = 2, 4, 16, 16
    Cmid, Cout = 8, 16

    key = jax.random.PRNGKey(0)
    kx, kp = jax.random.split(key)
    x = jax.random.normal(kx, (N, Cin, H, W), jnp.float32)
    params = init_params(kp, Cin, Cmid, Cout)

    fwd = jax.jit(functools.partial(res_bottleneck_block,
                                    downsampling=True, projection=True))
    out = jax.block_until_ready(fwd(x, params))

    assert out.shape == (N, Cout, H // 2, W // 2), out.shape
    assert bool(jnp.all(jnp.isfinite(out)))
    assert bool(jnp.all(out >= 0.0))  # final ReLU

    print("KERNEL_OK")
</pallas_src>

<mosaic_0001>
module attributes {stable_mosaic.version = 11 : i64} {
  func.func @_bn_apply_relu_kernel(%arg0: i32, %arg1: memref<512x128xbf16, #tpu.memory_space<vmem>>, %arg2: memref<1x128xf32, #tpu.memory_space<vmem>>, %arg3: memref<1x128xf32, #tpu.memory_space<vmem>>, %arg4: memref<512x128xbf16, #tpu.memory_space<vmem>>) attributes {dimension_semantics = [#tpu.dimension_semantics<parallel>], iteration_bounds = array<i64: 1>, scalar_prefetch = 0 : i64, scratch_operands = 0 : i64, tpu.core_type = #tpu.core_type<tc>, window_params = [{transform_indices = @transform_0, window_bounds = array<i64: 512, 128>}, {pipeline_mode = #tpu.pipeline_mode<synchronous>, transform_indices = @transform_1, window_bounds = array<i64: 1, 128>}, {pipeline_mode = #tpu.pipeline_mode<synchronous>, transform_indices = @transform_2, window_bounds = array<i64: 1, 128>}, {transform_indices = @transform_3, window_bounds = array<i64: 512, 128>}]} {
    %c0 = arith.constant 0 : index
    %c0_0 = arith.constant 0 : index
    %0 = vector.load %arg1[%c0, %c0_0] : memref<512x128xbf16, #tpu.memory_space<vmem>>, vector<512x128xbf16>
    %1 = arith.extf %0 : vector<512x128xbf16> to vector<512x128xf32>
    %c0_1 = arith.constant 0 : index
    %c0_2 = arith.constant 0 : index
    %2 = vector.load %arg2[%c0_1, %c0_2] : memref<1x128xf32, #tpu.memory_space<vmem>>, vector<1x128xf32>
    %3 = vector.broadcast %2 : vector<1x128xf32> to vector<512x128xf32>
    %4 = arith.mulf %1, %3 : vector<512x128xf32>
    %c0_3 = arith.constant 0 : index
    %c0_4 = arith.constant 0 : index
    %5 = vector.load %arg3[%c0_3, %c0_4] : memref<1x128xf32, #tpu.memory_space<vmem>>, vector<1x128xf32>
    %6 = vector.broadcast %5 : vector<1x128xf32> to vector<512x128xf32>
    %7 = arith.addf %4, %6 : vector<512x128xf32>
    %cst = arith.constant 0.000000e+00 : f32
    %8 = vector.broadcast %cst : f32 to vector<512x128xf32>
    %9 = arith.maximumf %7, %8 : vector<512x128xf32>
    %10 = arith.truncf %9 : vector<512x128xf32> to vector<512x128xbf16>
    %c0_5 = arith.constant 0 : index
    %c0_6 = arith.constant 0 : index
    %11 = vector.load %arg4[%c0_5, %c0_6] : memref<512x128xbf16, #tpu.memory_space<vmem>>, vector<512x128xbf16>
    tpu.vector_store %arg4[%c0_5, %c0_6], %10 {strides = array<i32>} : memref<512x128xbf16, #tpu.memory_space<vmem>>, vector<512x128xbf16>,
    return
  }
  func.func @transform_0(%arg0: i32) -> (i32, i32) {
    %c0_i32 = arith.constant 0 : i32
    %c0_i32_0 = arith.constant 0 : i32
    return %arg0, %c0_i32 : i32, i32
  }
  func.func @transform_1(%arg0: i32) -> (i32, i32) {
    %c0_i32 = arith.constant 0 : i32
    %c0_i32_0 = arith.constant 0 : i32
    %c0_i32_1 = arith.constant 0 : i32
    return %c0_i32, %c0_i32_0 : i32, i32
  }
  func.func @transform_2(%arg0: i32) -> (i32, i32) {
    %c0_i32 = arith.constant 0 : i32
    %c0_i32_0 = arith.constant 0 : i32
    %c0_i32_1 = arith.constant 0 : i32
    return %c0_i32, %c0_i32_0 : i32, i32
  }
  func.func @transform_3(%arg0: i32) -> (i32, i32) {
    %c0_i32 = arith.constant 0 : i32
    %c0_i32_0 = arith.constant 0 : i32
    return %arg0, %c0_i32 : i32, i32
  }
}

module attributes {stable_mosaic.version = 11 : i64} {
  func.func @_conv1_kernel(%arg0: i32, %arg1: memref<512x128xbf16, #tpu.memory_space<vmem>>, %arg2: memref<128x128xbf16, #tpu.memory_space<vmem>>, %arg3: memref<512x128xbf16, #tpu.memory_space<vmem>>, %arg4: memref<1x2x128xf32, #tpu.memory_space<vmem>>) attributes {dimension_semantics = [#tpu.dimension_semantics<parallel>], iteration_bounds = array<i64: 1>, scalar_prefetch = 0 : i64, scratch_operands = 0 : i64, tpu.core_type = #tpu.core_type<tc>, window_params = [{transform_indices = @transform_0, window_bounds = array<i64: 512, 128>}, {pipeline_mode = #tpu.pipeline_mode<synchronous>, transform_indices = @transform_1, window_bounds = array<i64: 128, 128>}, {transform_indices = @transform_2, window_bounds = array<i64: 512, 128>}, {transform_indices = @transform_3, window_bounds = array<i64: 1, 2, 128>}]} {
    %c0 = arith.constant 0 : index
    %c0_0 = arith.constant 0 : index
    %0 = vector.load %arg1[%c0, %c0_0] : memref<512x128xbf16, #tpu.memory_space<vmem>>, vector<512x128xbf16>
    %c0_1 = arith.constant 0 : index
    %c0_2 = arith.constant 0 : index
    %1 = vector.load %arg2[%c0_1, %c0_2] : memref<128x128xbf16, #tpu.memory_space<vmem>>, vector<128x128xbf16>
    %cst = arith.constant dense<0.000000e+00> : vector<512x128xf32>
    %2 = tpu.matmul %0, %1, %cst {dimension_numbers = #tpu.dot_dimension_numbers<[1], [0], [0], [1], [0, 0, 1, 1], [], []>} : vector<512x128xbf16>, vector<128x128xbf16>, vector<512x128xf32> -> vector<512x128xf32>
    %3 = arith.truncf %2 : vector<512x128xf32> to vector<512x128xbf16>
    %4 = arith.extf %3 : vector<512x128xbf16> to vector<512x128xf32>
    %c0_3 = arith.constant 0 : index
    %c0_4 = arith.constant 0 : index
    %5 = vector.load %arg3[%c0_3, %c0_4] : memref<512x128xbf16, #tpu.memory_space<vmem>>, vector<512x128xbf16>
    tpu.vector_store %arg3[%c0_3, %c0_4], %3 {strides = array<i32>} : memref<512x128xbf16, #tpu.memory_space<vmem>>, vector<512x128xbf16>,
    %cst_5 = arith.constant dense<0.000000e+00> : vector<128xf32>
    %6 = vector.multi_reduction <add>, %4, %cst_5 [0] : vector<512x128xf32> to vector<128xf32>
    %7 = vector.shape_cast %6 : vector<128xf32> to vector<1x128xf32>
    %8 = arith.mulf %4, %4 : vector<512x128xf32>
    %cst_6 = arith.constant dense<0.000000e+00> : vector<128xf32>
    %9 = vector.multi_reduction <add>, %8, %cst_6 [0] : vector<512x128xf32> to vector<128xf32>
    %10 = vector.shape_cast %9 : vector<128xf32> to vector<1x128xf32>
    %11 = tpu.concatenate %7, %10 in 0 : vector<1x128xf32>, vector<1x128xf32> -> vector<2x128xf32>
    %c0_7 = arith.constant 0 : index
    %c0_8 = arith.constant 0 : index
    %c0_9 = arith.constant 0 : index
    %12 = vector.load %arg4[%c0_7, %c0_8, %c0_9] : memref<1x2x128xf32, #tpu.memory_space<vmem>>, vector<1x2x128xf32>
    %13 = vector.shape_cast %12 : vector<1x2x128xf32> to vector<2x128xf32>
    %14 = vector.shape_cast %11 : vector<2x128xf32> to vector<1x2x128xf32>
    tpu.vector_store %arg4[%c0_7, %c0_8, %c0_9], %14 {strides = array<i32>} : memref<1x2x128xf32, #tpu.memory_space<vmem>>, vector<1x2x128xf32>,
    return
  }
  func.func @transform_0(%arg0: i32) -> (i32, i32) {
    %c0_i32 = arith.constant 0 : i32
    %c0_i32_0 = arith.constant 0 : i32
    return %arg0, %c0_i32 : i32, i32
  }
  func.func @transform_1(%arg0: i32) -> (i32, i32) {
    %c0_i32 = arith.constant 0 : i32
    %c0_i32_0 = arith.constant 0 : i32
    %c0_i32_1 = arith.constant 0 : i32
    return %c0_i32, %c0_i32_0 : i32, i32
  }
  func.func @transform_2(%arg0: i32) -> (i32, i32) {
    %c0_i32 = arith.constant 0 : i32
    %c0_i32_0 = arith.constant 0 : i32
    return %arg0, %c0_i32 : i32, i32
  }
  func.func @transform_3(%arg0: i32) -> (i32, i32, i32) {
    %c0_i32 = arith.constant 0 : i32
    %c0_i32_0 = arith.constant 0 : i32
    %c0_i32_1 = arith.constant 0 : i32
    return %arg0, %c0_i32, %c0_i32_0 : i32, i32, i32
  }
}

module attributes {stable_mosaic.version = 11 : i64} {
  func.func @kernel(%arg0: i32, %arg1: memref<1x18x18x128xbf16, #tpu.memory_space<vmem>>, %arg2: memref<9x128x128xbf16, #tpu.memory_space<vmem>>, %arg3: memref<1x64x128xbf16, #tpu.memory_space<vmem>>, %arg4: memref<1x2x128xf32, #tpu.memory_space<vmem>>) attributes {dimension_semantics = [#tpu.dimension_semantics<parallel>], iteration_bounds = array<i64: 2>, scalar_prefetch = 0 : i64, scratch_operands = 0 : i64, tpu.core_type = #tpu.core_type<tc>, window_params = [{transform_indices = @transform_0, window_bounds = array<i64: 1, 18, 18, 128>}, {pipeline_mode = #tpu.pipeline_mode<synchronous>, transform_indices = @transform_1, window_bounds = array<i64: 9, 128, 128>}, {transform_indices = @transform_2, window_bounds = array<i64: 1, 64, 128>}, {transform_indices = @transform_3, window_bounds = array<i64: 1, 2, 128>}]} {
    %cst = arith.constant 0.000000e+00 : f32
    %0 = vector.broadcast %cst : f32 to vector<64x128xf32>
    %c0 = arith.constant 0 : index
    %c0_0 = arith.constant 0 : index
    %c0_1 = arith.constant 0 : index
    %c0_2 = arith.constant 0 : index
    %1 = vector.load %arg1[%c0, %c0_0, %c0_1, %c0_2] : memref<1x18x18x128xbf16, #tpu.memory_space<vmem>>, vector<1x8x8x128xbf16>
    %2 = vector.shape_cast %1 : vector<1x8x8x128xbf16> to vector<8x8x128xbf16>
    %3 = vector.shape_cast %2 : vector<8x8x128xbf16> to vector<64x128xbf16>
    %c0_3 = arith.constant 0 : index
    %c0_4 = arith.constant 0 : index
    %c0_5 = arith.constant 0 : index
    %4 = vector.load %arg2[%c0_3, %c0_4, %c0_5] : memref<9x128x128xbf16, #tpu.memory_space<vmem>>, vector<1x128x128xbf16>
    %5 = vector.shape_cast %4 : vector<1x128x128xbf16> to vector<128x128xbf16>
    %cst_6 = arith.constant dense<0.000000e+00> : vector<64x128xf32>
    %6 = tpu.matmul %3, %5, %cst_6 {dimension_numbers = #tpu.dot_dimension_numbers<[1], [0], [0], [1], [0, 0, 1, 1], [], []>} : vector<64x128xbf16>, vector<128x128xbf16>, vector<64x128xf32> -> vector<64x128xf32>
    %7 = arith.addf %0, %6 : vector<64x128xf32>
    %c0_7 = arith.constant 0 : index
    %c0_8 = arith.constant 0 : index
    %c9 = arith.constant 9 : index
    %c0_9 = arith.constant 0 : index
    %8 = vector.load %arg1[%c0_7, %c0_8, %c9, %c0_9] : memref<1x18x18x128xbf16, #tpu.memory_space<vmem>>, vector<1x8x8x128xbf16>
    %9 = vector.shape_cast %8 : vector<1x8x8x128xbf16> to vector<8x8x128xbf16>
    %10 = vector.shape_cast %9 : vector<8x8x128xbf16> to vector<64x128xbf16>
    %c1 = arith.constant 1 : index
    %c0_10 = arith.constant 0 : index
    %c0_11 = arith.constant 0 : index
    %11 = vector.load %arg2[%c1, %c0_10, %c0_11] : memref<9x128x128xbf16, #tpu.memory_space<vmem>>, vector<1x128x128xbf16>
    %12 = vector.shape_cast %11 : vector<1x128x128xbf16> to vector<128x128xbf16>
    %cst_12 = arith.constant dense<0.000000e+00> : vector<64x128xf32>
    %13 = tpu.matmul %10, %12, %cst_12 {dimension_numbers = #tpu.dot_dimension_numbers<[1], [0], [0], [1], [0, 0, 1, 1], [], []>} : vector<64x128xbf16>, vector<128x128xbf16>, vector<64x128xf32> -> vector<64x128xf32>
    %14 = arith.addf %7, %13 : vector<64x128xf32>
    %c0_13 = arith.constant 0 : index
    %c0_14 = arith.constant 0 : index
    %c1_15 = arith.constant 1 : index
    %c0_16 = arith.constant 0 : index
    %15 = vector.load %arg1[%c0_13, %c0_14, %c1_15, %c0_16] : memref<1x18x18x128xbf16, #tpu.memory_space<vmem>>, vector<1x8x8x128xbf16>
    %16 = vector.shape_cast %15 : vector<1x8x8x128xbf16> to vector<8x8x128xbf16>
    %17 = vector.shape_cast %16 : vector<8x8x128xbf16> to vector<64x128xbf16>
    %c2 = arith.constant 2 : index
    %c0_17 = arith.constant 0 : index
    %c0_18 = arith.constant 0 : index
    %18 = vector.load %arg2[%c2, %c0_17, %c0_18] : memref<9x128x128xbf16, #tpu.memory_space<vmem>>, vector<1x128x128xbf16>
    %19 = vector.shape_cast %18 : vector<1x128x128xbf16> to vector<128x128xbf16>
    %cst_19 = arith.constant dense<0.000000e+00> : vector<64x128xf32>
    %20 = tpu.matmul %17, %19, %cst_19 {dimension_numbers = #tpu.dot_dimension_numbers<[1], [0], [0], [1], [0, 0, 1, 1], [], []>} : vector<64x128xbf16>, vector<128x128xbf16>, vector<64x128xf32> -> vector<64x128xf32>
    %21 = arith.addf %14, %20 : vector<64x128xf32>
    %c0_20 = arith.constant 0 : index
    %c9_21 = arith.constant 9 : index
    %c0_22 = arith.constant 0 : index
    %c0_23 = arith.constant 0 : index
    %22 = vector.load %arg1[%c0_20, %c9_21, %c0_22, %c0_23] : memref<1x18x18x128xbf16, #tpu.memory_space<vmem>>, vector<1x8x8x128xbf16>
    %23 = vector.shape_cast %22 : vector<1x8x8x128xbf16> to vector<8x8x128xbf16>
    %24 = vector.shape_cast %23 : vector<8x8x128xbf16> to vector<64x128xbf16>
    %c3 = arith.constant 3 : index
    %c0_24 = arith.constant 0 : index
    %c0_25 = arith.constant 0 : index
    %25 = vector.load %arg2[%c3, %c0_24, %c0_25] : memref<9x128x128xbf16, #tpu.memory_space<vmem>>, vector<1x128x128xbf16>
    %26 = vector.shape_cast %25 : vector<1x128x128xbf16> to vector<128x128xbf16>
    %cst_26 = arith.constant dense<0.000000e+00> : vector<64x128xf32>
    %27 = tpu.matmul %24, %26, %cst_26 {dimension_numbers = #tpu.dot_dimension_numbers<[1], [0], [0], [1], [0, 0, 1, 1], [], []>} : vector<64x128xbf16>, vector<128x128xbf16>, vector<64x128xf32> -> vector<64x128xf32>
    %28 = arith.addf %21, %27 : vector<64x128xf32>
    %c0_27 = arith.constant 0 : index
    %c9_28 = arith.constant 9 : index
    %c9_29 = arith.constant 9 : index
    %c0_30 = arith.constant 0 : index
    %29 = vector.load %arg1[%c0_27, %c9_28, %c9_29, %c0_30] : memref<1x18x18x128xbf16, #tpu.memory_space<vmem>>, vector<1x8x8x128xbf16>
    %30 = vector.shape_cast %29 : vector<1x8x8x128xbf16> to vector<8x8x128xbf16>
    %31 = vector.shape_cast %30 : vector<8x8x128xbf16> to vector<64x128xbf16>
    %c4 = arith.constant 4 : index
    %c0_31 = arith.constant 0 : index
    %c0_32 = arith.constant 0 : index
    %32 = vector.load %arg2[%c4, %c0_31, %c0_32] : memref<9x128x128xbf16, #tpu.memory_space<vmem>>, vector<1x128x128xbf16>
    %33 = vector.shape_cast %32 : vector<1x128x128xbf16> to vector<128x128xbf16>
    %cst_33 = arith.constant dense<0.000000e+00> : vector<64x128xf32>
    %34 = tpu.matmul %31, %33, %cst_33 {dimension_numbers = #tpu.dot_dimension_numbers<[1], [0], [0], [1], [0, 0, 1, 1], [], []>} : vector<64x128xbf16>, vector<128x128xbf16>, vector<64x128xf32> -> vector<64x128xf32>
    %35 = arith.addf %28, %34 : vector<64x128xf32>
    %c0_34 = arith.constant 0 : index
    %c9_35 = arith.constant 9 : index
    %c1_36 = arith.constant 1 : index
    %c0_37 = arith.constant 0 : index
    %36 = vector.load %arg1[%c0_34, %c9_35, %c1_36, %c0_37] : memref<1x18x18x128xbf16, #tpu.memory_space<vmem>>, vector<1x8x8x128xbf16>
    %37 = vector.shape_cast %36 : vector<1x8x8x128xbf16> to vector<8x8x128xbf16>
    %38 = vector.shape_cast %37 : vector<8x8x128xbf16> to vector<64x128xbf16>
    %c5 = arith.constant 5 : index
    %c0_38 = arith.constant 0 : index
    %c0_39 = arith.constant 0 : index
    %39 = vector.load %arg2[%c5, %c0_38, %c0_39] : memref<9x128x128xbf16, #tpu.memory_space<vmem>>, vector<1x128x128xbf16>
    %40 = vector.shape_cast %39 : vector<1x128x128xbf16> to vector<128x128xbf16>
    %cst_40 = arith.constant dense<0.000000e+00> : vector<64x128xf32>
    %41 = tpu.matmul %38, %40, %cst_40 {dimension_numbers = #tpu.dot_dimension_numbers<[1], [0], [0], [1], [0, 0, 1, 1], [], []>} : vector<64x128xbf16>, vector<128x128xbf16>, vector<64x128xf32> -> vector<64x128xf32>
    %42 = arith.addf %35, %41 : vector<64x128xf32>
    %c0_41 = arith.constant 0 : index
    %c1_42 = arith.constant 1 : index
    %c0_43 = arith.constant 0 : index
    %c0_44 = arith.constant 0 : index
    %43 = vector.load %arg1[%c0_41, %c1_42, %c0_43, %c0_44] : memref<1x18x18x128xbf16, #tpu.memory_space<vmem>>, vector<1x8x8x128xbf16>
    %44 = vector.shape_cast %43 : vector<1x8x8x128xbf16> to vector<8x8x128xbf16>
    %45 = vector.shape_cast %44 : vector<8x8x128xbf16> to vector<64x128xbf16>
    %c6 = arith.constant 6 : index
    %c0_45 = arith.constant 0 : index
    %c0_46 = arith.constant 0 : index
    %46 = vector.load %arg2[%c6, %c0_45, %c0_46] : memref<9x128x128xbf16, #tpu.memory_space<vmem>>, vector<1x128x128xbf16>
    %47 = vector.shape_cast %46 : vector<1x128x128xbf16> to vector<128x128xbf16>
    %cst_47 = arith.constant dense<0.000000e+00> : vector<64x128xf32>
    %48 = tpu.matmul %45, %47, %cst_47 {dimension_numbers = #tpu.dot_dimension_numbers<[1], [0], [0], [1], [0, 0, 1, 1], [], []>} : vector<64x128xbf16>, vector<128x128xbf16>, vector<64x128xf32> -> vector<64x128xf32>
    %49 = arith.addf %42, %48 : vector<64x128xf32>
    %c0_48 = arith.constant 0 : index
    %c1_49 = arith.constant 1 : index
    %c9_50 = arith.constant 9 : index
    %c0_51 = arith.constant 0 : index
    %50 = vector.load %arg1[%c0_48, %c1_49, %c9_50, %c0_51] : memref<1x18x18x128xbf16, #tpu.memory_space<vmem>>, vector<1x8x8x128xbf16>
    %51 = vector.shape_cast %50 : vector<1x8x8x128xbf16> to vector<8x8x128xbf16>
    %52 = vector.shape_cast %51 : vector<8x8x128xbf16> to vector<64x128xbf16>
    %c7 = arith.constant 7 : index
    %c0_52 = arith.constant 0 : index
    %c0_53 = arith.constant 0 : index
    %53 = vector.load %arg2[%c7, %c0_52, %c0_53] : memref<9x128x128xbf16, #tpu.memory_space<vmem>>, vector<1x128x128xbf16>
    %54 = vector.shape_cast %53 : vector<1x128x128xbf16> to vector<128x128xbf16>
    %cst_54 = arith.constant dense<0.000000e+00> : vector<64x128xf32>
    %55 = tpu.matmul %52, %54, %cst_54 {dimension_numbers = #tpu.dot_dimension_numbers<[1], [0], [0], [1], [0, 0, 1, 1], [], []>} : vector<64x128xbf16>, vector<128x128xbf16>, vector<64x128xf32> -> vector<64x128xf32>
    %56 = arith.addf %49, %55 : vector<64x128xf32>
    %c0_55 = arith.constant 0 : index
    %c1_56 = arith.constant 1 : index
    %c1_57 = arith.constant 1 : index
    %c0_58 = arith.constant 0 : index
    %57 = vector.load %arg1[%c0_55, %c1_56, %c1_57, %c0_58] : memref<1x18x18x128xbf16, #tpu.memory_space<vmem>>, vector<1x8x8x128xbf16>
    %58 = vector.shape_cast %57 : vector<1x8x8x128xbf16> to vector<8x8x128xbf16>
    %59 = vector.shape_cast %58 : vector<8x8x128xbf16> to vector<64x128xbf16>
    %c8 = arith.constant 8 : index
    %c0_59 = arith.constant 0 : index
    %c0_60 = arith.constant 0 : index
    %60 = vector.load %arg2[%c8, %c0_59, %c0_60] : memref<9x128x128xbf16, #tpu.memory_space<vmem>>, vector<1x128x128xbf16>
    %61 = vector.shape_cast %60 : vector<1x128x128xbf16> to vector<128x128xbf16>
    %cst_61 = arith.constant dense<0.000000e+00> : vector<64x128xf32>
    %62 = tpu.matmul %59, %61, %cst_61 {dimension_numbers = #tpu.dot_dimension_numbers<[1], [0], [0], [1], [0, 0, 1, 1], [], []>} : vector<64x128xbf16>, vector<128x128xbf16>, vector<64x128xf32> -> vector<64x128xf32>
    %63 = arith.addf %56, %62 : vector<64x128xf32>
    %64 = arith.truncf %63 : vector<64x128xf32> to vector<64x128xbf16>
    %65 = arith.extf %64 : vector<64x128xbf16> to vector<64x128xf32>
    %c0_62 = arith.constant 0 : index
    %c0_63 = arith.constant 0 : index
    %c0_64 = arith.constant 0 : index
    %66 = vector.load %arg3[%c0_62, %c0_63, %c0_64] : memref<1x64x128xbf16, #tpu.memory_space<vmem>>, vector<1x64x128xbf16>
    %67 = vector.shape_cast %66 : vector<1x64x128xbf16> to vector<64x128xbf16>
    %68 = vector.shape_cast %64 : vector<64x128xbf16> to vector<1x64x128xbf16>
    tpu.vector_store %arg3[%c0_62, %c0_63, %c0_64], %68 {strides = array<i32>} : memref<1x64x128xbf16, #tpu.memory_space<vmem>>, vector<1x64x128xbf16>,
    %cst_65 = arith.constant dense<0.000000e+00> : vector<128xf32>
    %69 = vector.multi_reduction <add>, %65, %cst_65 [0] : vector<64x128xf32> to vector<128xf32>
    %70 = vector.shape_cast %69 : vector<128xf32> to vector<1x128xf32>
    %71 = arith.mulf %65, %65 : vector<64x128xf32>
    %cst_66 = arith.constant dense<0.000000e+00> : vector<128xf32>
    %72 = vector.multi_reduction <add>, %71, %cst_66 [0] : vector<64x128xf32> to vector<128xf32>
    %73 = vector.shape_cast %72 : vector<128xf32> to vector<1x128xf32>
    %74 = tpu.concatenate %70, %73 in 0 : vector<1x128xf32>, vector<1x128xf32> -> vector<2x128xf32>
    %c0_67 = arith.constant 0 : index
    %c0_68 = arith.constant 0 : index
    %c0_69 = arith.constant 0 : index
    %75 = vector.load %arg4[%c0_67, %c0_68, %c0_69] : memref<1x2x128xf32, #tpu.memory_space<vmem>>, vector<1x2x128xf32>
    %76 = vector.shape_cast %75 : vector<1x2x128xf32> to vector<2x128xf32>
    %77 = vector.shape_cast %74 : vector<2x128xf32> to vector<1x2x128xf32>
    tpu.vector_store %arg4[%c0_67, %c0_68, %c0_69], %77 {strides = array<i32>} : memref<1x2x128xf32, #tpu.memory_space<vmem>>, vector<1x2x128xf32>,
    return
  }
  func.func @transform_0(%arg0: i32) -> (i32, i32, i32, i32) {
    %c0_i32 = arith.constant 0 : i32
    %c0_i32_0 = arith.constant 0 : i32
    %c0_i32_1 = arith.constant 0 : i32
    %c0_i32_2 = arith.constant 0 : i32
    return %arg0, %c0_i32, %c0_i32_0, %c0_i32_1 : i32, i32, i32, i32
  }
  func.func @transform_1(%arg0: i32) -> (i32, i32, i32) {
    %c0_i32 = arith.constant 0 : i32
    %c0_i32_0 = arith.constant 0 : i32
    %c0_i32_1 = arith.constant 0 : i32
    %c0_i32_2 = arith.constant 0 : i32
    return %c0_i32, %c0_i32_0, %c0_i32_1 : i32, i32, i32
  }
  func.func @transform_2(%arg0: i32) -> (i32, i32, i32) {
    %c0_i32 = arith.constant 0 : i32
    %c0_i32_0 = arith.constant 0 : i32
    %c0_i32_1 = arith.constant 0 : i32
    return %arg0, %c0_i32, %c0_i32_0 : i32, i32, i32
  }
  func.func @transform_3(%arg0: i32) -> (i32, i32, i32) {
    %c0_i32 = arith.constant 0 : i32
    %c0_i32_0 = arith.constant 0 : i32
    %c0_i32_1 = arith.constant 0 : i32
    return %arg0, %c0_i32, %c0_i32_0 : i32, i32, i32
  }
}

module attributes {stable_mosaic.version = 11 : i64} {
  func.func @_bn_relu_conv3_kernel(%arg0: i32, %arg1: memref<128x128xbf16, #tpu.memory_space<vmem>>, %arg2: memref<1x128xf32, #tpu.memory_space<vmem>>, %arg3: memref<1x128xf32, #tpu.memory_space<vmem>>, %arg4: memref<128x128xbf16, #tpu.memory_space<vmem>>, %arg5: memref<128x128xbf16, #tpu.memory_space<vmem>>, %arg6: memref<1x2x128xf32, #tpu.memory_space<vmem>>) attributes {dimension_semantics = [#tpu.dimension_semantics<parallel>], iteration_bounds = array<i64: 1>, scalar_prefetch = 0 : i64, scratch_operands = 0 : i64, tpu.core_type = #tpu.core_type<tc>, window_params = [{transform_indices = @transform_0, window_bounds = array<i64: 128, 128>}, {pipeline_mode = #tpu.pipeline_mode<synchronous>, transform_indices = @transform_1, window_bounds = array<i64: 1, 128>}, {pipeline_mode = #tpu.pipeline_mode<synchronous>, transform_indices = @transform_2, window_bounds = array<i64: 1, 128>}, {pipeline_mode = #tpu.pipeline_mode<synchronous>, transform_indices = @transform_3, window_bounds = array<i64: 128, 128>}, {transform_indices = @transform_4, window_bounds = array<i64: 128, 128>}, {transform_indices = @transform_5, window_bounds = array<i64: 1, 2, 128>}]} {
    %c0 = arith.constant 0 : index
    %c0_0 = arith.constant 0 : index
    %0 = vector.load %arg1[%c0, %c0_0] : memref<128x128xbf16, #tpu.memory_space<vmem>>, vector<128x128xbf16>
    %1 = arith.extf %0 : vector<128x128xbf16> to vector<128x128xf32>
    %c0_1 = arith.constant 0 : index
    %c0_2 = arith.constant 0 : index
    %2 = vector.load %arg2[%c0_1, %c0_2] : memref<1x128xf32, #tpu.memory_space<vmem>>, vector<1x128xf32>
    %3 = vector.broadcast %2 : vector<1x128xf32> to vector<128x128xf32>
    %4 = arith.mulf %1, %3 : vector<128x128xf32>
    %c0_3 = arith.constant 0 : index
    %c0_4 = arith.constant 0 : index
    %5 = vector.load %arg3[%c0_3, %c0_4] : memref<1x128xf32, #tpu.memory_space<vmem>>, vector<1x128xf32>
    %6 = vector.broadcast %5 : vector<1x128xf32> to vector<128x128xf32>
    %7 = arith.addf %4, %6 : vector<128x128xf32>
    %cst = arith.constant 0.000000e+00 : f32
    %8 = vector.broadcast %cst : f32 to vector<128x128xf32>
    %9 = arith.maximumf %7, %8 : vector<128x128xf32>
    %10 = arith.truncf %9 : vector<128x128xf32> to vector<128x128xbf16>
    %c0_5 = arith.constant 0 : index
    %c0_6 = arith.constant 0 : index
    %11 = vector.load %arg4[%c0_5, %c0_6] : memref<128x128xbf16, #tpu.memory_space<vmem>>, vector<128x128xbf16>
    %cst_7 = arith.constant dense<0.000000e+00> : vector<128x128xf32>
    %12 = tpu.matmul %10, %11, %cst_7 {dimension_numbers = #tpu.dot_dimension_numbers<[1], [0], [0], [1], [0, 0, 1, 1], [], []>} : vector<128x128xbf16>, vector<128x128xbf16>, vector<128x128xf32> -> vector<128x128xf32>
    %13 = arith.truncf %12 : vector<128x128xf32> to vector<128x128xbf16>
    %14 = arith.extf %13 : vector<128x128xbf16> to vector<128x128xf32>
    %c0_8 = arith.constant 0 : index
    %c0_9 = arith.constant 0 : index
    %15 = vector.load %arg5[%c0_8, %c0_9] : memref<128x128xbf16, #tpu.memory_space<vmem>>, vector<128x128xbf16>
    tpu.vector_store %arg5[%c0_8, %c0_9], %13 {strides = array<i32>} : memref<128x128xbf16, #tpu.memory_space<vmem>>, vector<128x128xbf16>,
    %cst_10 = arith.constant dense<0.000000e+00> : vector<128xf32>
    %16 = vector.multi_reduction <add>, %14, %cst_10 [0] : vector<128x128xf32> to vector<128xf32>
    %17 = vector.shape_cast %16 : vector<128xf32> to vector<1x128xf32>
    %18 = arith.mulf %14, %14 : vector<128x128xf32>
    %cst_11 = arith.constant dense<0.000000e+00> : vector<128xf32>
    %19 = vector.multi_reduction <add>, %18, %cst_11 [0] : vector<128x128xf32> to vector<128xf32>
    %20 = vector.shape_cast %19 : vector<128xf32> to vector<1x128xf32>
    %21 = tpu.concatenate %17, %20 in 0 : vector<1x128xf32>, vector<1x128xf32> -> vector<2x128xf32>
    %c0_12 = arith.constant 0 : index
    %c0_13 = arith.constant 0 : index
    %c0_14 = arith.constant 0 : index
    %22 = vector.load %arg6[%c0_12, %c0_13, %c0_14] : memref<1x2x128xf32, #tpu.memory_space<vmem>>, vector<1x2x128xf32>
    %23 = vector.shape_cast %22 : vector<1x2x128xf32> to vector<2x128xf32>
    %24 = vector.shape_cast %21 : vector<2x128xf32> to vector<1x2x128xf32>
    tpu.vector_store %arg6[%c0_12, %c0_13, %c0_14], %24 {strides = array<i32>} : memref<1x2x128xf32, #tpu.memory_space<vmem>>, vector<1x2x128xf32>,
    return
  }
  func.func @transform_0(%arg0: i32) -> (i32, i32) {
    %c0_i32 = arith.constant 0 : i32
    %c0_i32_0 = arith.constant 0 : i32
    return %arg0, %c0_i32 : i32, i32
  }
  func.func @transform_1(%arg0: i32) -> (i32, i32) {
    %c0_i32 = arith.constant 0 : i32
    %c0_i32_0 = arith.constant 0 : i32
    %c0_i32_1 = arith.constant 0 : i32
    return %c0_i32, %c0_i32_0 : i32, i32
  }
  func.func @transform_2(%arg0: i32) -> (i32, i32) {
    %c0_i32 = arith.constant 0 : i32
    %c0_i32_0 = arith.constant 0 : i32
    %c0_i32_1 = arith.constant 0 : i32
    return %c0_i32, %c0_i32_0 : i32, i32
  }
  func.func @transform_3(%arg0: i32) -> (i32, i32) {
    %c0_i32 = arith.constant 0 : i32
    %c0_i32_0 = arith.constant 0 : i32
    %c0_i32_1 = arith.constant 0 : i32
    return %c0_i32, %c0_i32_0 : i32, i32
  }
  func.func @transform_4(%arg0: i32) -> (i32, i32) {
    %c0_i32 = arith.constant 0 : i32
    %c0_i32_0 = arith.constant 0 : i32
    return %arg0, %c0_i32 : i32, i32
  }
  func.func @transform_5(%arg0: i32) -> (i32, i32, i32) {
    %c0_i32 = arith.constant 0 : i32
    %c0_i32_0 = arith.constant 0 : i32
    %c0_i32_1 = arith.constant 0 : i32
    return %arg0, %c0_i32, %c0_i32_0 : i32, i32, i32
  }
}

module attributes {stable_mosaic.version = 11 : i64} {
  func.func @_bn_add_relu_proj_kernel(%arg0: i32, %arg1: memref<128x128xbf16, #tpu.memory_space<vmem>>, %arg2: memref<1x128xf32, #tpu.memory_space<vmem>>, %arg3: memref<1x128xf32, #tpu.memory_space<vmem>>, %arg4: memref<128x128xbf16, #tpu.memory_space<vmem>>, %arg5: memref<128x128xbf16, #tpu.memory_space<vmem>>, %arg6: memref<1x128xf32, #tpu.memory_space<vmem>>, %arg7: memref<128x128xf32, #tpu.memory_space<vmem>>) attributes {dimension_semantics = [#tpu.dimension_semantics<parallel>], iteration_bounds = array<i64: 1>, scalar_prefetch = 0 : i64, scratch_operands = 0 : i64, tpu.core_type = #tpu.core_type<tc>, window_params = [{transform_indices = @transform_0, window_bounds = array<i64: 128, 128>}, {pipeline_mode = #tpu.pipeline_mode<synchronous>, transform_indices = @transform_1, window_bounds = array<i64: 1, 128>}, {pipeline_mode = #tpu.pipeline_mode<synchronous>, transform_indices = @transform_2, window_bounds = array<i64: 1, 128>}, {transform_indices = @transform_3, window_bounds = array<i64: 128, 128>}, {pipeline_mode = #tpu.pipeline_mode<synchronous>, transform_indices = @transform_4, window_bounds = array<i64: 128, 128>}, {pipeline_mode = #tpu.pipeline_mode<synchronous>, transform_indices = @transform_5, window_bounds = array<i64: 1, 128>}, {transform_indices = @transform_6, window_bounds = array<i64: 128, 128>}]} {
    %c0 = arith.constant 0 : index
    %c0_0 = arith.constant 0 : index
    %0 = vector.load %arg4[%c0, %c0_0] : memref<128x128xbf16, #tpu.memory_space<vmem>>, vector<128x128xbf16>
    %c0_1 = arith.constant 0 : index
    %c0_2 = arith.constant 0 : index
    %1 = vector.load %arg5[%c0_1, %c0_2] : memref<128x128xbf16, #tpu.memory_space<vmem>>, vector<128x128xbf16>
    %cst = arith.constant dense<0.000000e+00> : vector<128x128xf32>
    %2 = tpu.matmul %0, %1, %cst {dimension_numbers = #tpu.dot_dimension_numbers<[1], [0], [0], [1], [0, 0, 1, 1], [], []>} : vector<128x128xbf16>, vector<128x128xbf16>, vector<128x128xf32> -> vector<128x128xf32>
    %c0_3 = arith.constant 0 : index
    %c0_4 = arith.constant 0 : index
    %3 = vector.load %arg6[%c0_3, %c0_4] : memref<1x128xf32, #tpu.memory_space<vmem>>, vector<1x128xf32>
    %4 = vector.broadcast %3 : vector<1x128xf32> to vector<128x128xf32>
    %5 = arith.addf %2, %4 : vector<128x128xf32>
    %c0_5 = arith.constant 0 : index
    %c0_6 = arith.constant 0 : index
    %6 = vector.load %arg1[%c0_5, %c0_6] : memref<128x128xbf16, #tpu.memory_space<vmem>>, vector<128x128xbf16>
    %7 = arith.extf %6 : vector<128x128xbf16> to vector<128x128xf32>
    %c0_7 = arith.constant 0 : index
    %c0_8 = arith.constant 0 : index
    %8 = vector.load %arg2[%c0_7, %c0_8] : memref<1x128xf32, #tpu.memory_space<vmem>>, vector<1x128xf32>
    %9 = vector.broadcast %8 : vector<1x128xf32> to vector<128x128xf32>
    %10 = arith.mulf %7, %9 : vector<128x128xf32>
    %c0_9 = arith.constant 0 : index
    %c0_10 = arith.constant 0 : index
    %11 = vector.load %arg3[%c0_9, %c0_10] : memref<1x128xf32, #tpu.memory_space<vmem>>, vector<1x128xf32>
    %12 = vector.broadcast %11 : vector<1x128xf32> to vector<128x128xf32>
    %13 = arith.addf %10, %12 : vector<128x128xf32>
    %14 = arith.addf %13, %5 : vector<128x128xf32>
    %cst_11 = arith.constant 0.000000e+00 : f32
    %15 = vector.broadcast %cst_11 : f32 to vector<128x128xf32>
    %16 = arith.maximumf %14, %15 : vector<128x128xf32>
    %c0_12 = arith.constant 0 : index
    %c0_13 = arith.constant 0 : index
    %17 = vector.load %arg7[%c0_12, %c0_13] : memref<128x128xf32, #tpu.memory_space<vmem>>, vector<128x128xf32>
    tpu.vector_store %arg7[%c0_12, %c0_13], %16 {strides = array<i32>} : memref<128x128xf32, #tpu.memory_space<vmem>>, vector<128x128xf32>,
    return
  }
  func.func @transform_0(%arg0: i32) -> (i32, i32) {
    %c0_i32 = arith.constant 0 : i32
    %c0_i32_0 = arith.constant 0 : i32
    return %arg0, %c0_i32 : i32, i32
  }
  func.func @transform_1(%arg0: i32) -> (i32, i32) {
    %c0_i32 = arith.constant 0 : i32
    %c0_i32_0 = arith.constant 0 : i32
    %c0_i32_1 = arith.constant 0 : i32
    return %c0_i32, %c0_i32_0 : i32, i32
  }
  func.func @transform_2(%arg0: i32) -> (i32, i32) {
    %c0_i32 = arith.constant 0 : i32
    %c0_i32_0 = arith.constant 0 : i32
    %c0_i32_1 = arith.constant 0 : i32
    return %c0_i32, %c0_i32_0 : i32, i32
  }
  func.func @transform_3(%arg0: i32) -> (i32, i32) {
    %c0_i32 = arith.constant 0 : i32
    %c0_i32_0 = arith.constant 0 : i32
    return %arg0, %c0_i32 : i32, i32
  }
  func.func @transform_4(%arg0: i32) -> (i32, i32) {
    %c0_i32 = arith.constant 0 : i32
    %c0_i32_0 = arith.constant 0 : i32
    %c0_i32_1 = arith.constant 0 : i32
    return %c0_i32, %c0_i32_0 : i32, i32
  }
  func.func @transform_5(%arg0: i32) -> (i32, i32) {
    %c0_i32 = arith.constant 0 : i32
    %c0_i32_0 = arith.constant 0 : i32
    %c0_i32_1 = arith.constant 0 : i32
    return %c0_i32, %c0_i32_0 : i32, i32
  }
  func.func @transform_6(%arg0: i32) -> (i32, i32) {
    %c0_i32 = arith.constant 0 : i32
    %c0_i32_0 = arith.constant 0 : i32
    return %arg0, %c0_i32 : i32, i32
  }
}

</mosaic_0001>

<llo_original>
// kernel: res_bottleneck_block.6
$region0: #{res_bottleneck_block.6}
  #allocation0 [shape = 'u32[]', space=smem, size = 0x4, offset = 0x4, fixed_abs, tag = 'smem constant byte address 0x4 - core index']
  #allocation1 [shape = 'u32[72,128]{1,0:T(1,128)}', space=vmem, size = 0x9000, scoped, tag = 'internal scratch']
  %s0 = inlined_call_operand.vmem [shape: bf16[512,128], index: 0, kind: input, shape index: {}]
  %s1 = inlined_call_operand.vmem [shape: f32[1,128], index: 1, kind: input, shape index: {}]
  %s2 = inlined_call_operand.vmem [shape: f32[1,128], index: 2, kind: input, shape index: {}]
  %s3 = inlined_call_operand.vmem [shape: bf16[512,128], index: 3, kind: output, shape index: {}]
  %s4 = sld [smem:[#allocation0]]
  $region22: #{res_bottleneck_block.6} parent=0
    _
  %s6 = ssub.s32 1, %s4
  %s7 = scalar_select 0, %s6, %s4
  // Predicated region
  $region2: #{res_bottleneck_block.6} parent=0 // pred_check
    _
  $region3: #{res_bottleneck_block.6} parent=0 // pred_check_branch
    %9 = sbr.rel (0) target = $region5
  $region4: #{res_bottleneck_block.6} parent=0 // pred_region
    _
  $region5: #{res_bottleneck_block.6} parent=0 // pred_fallthru
    _
  // Predicated region
  $region6: #{res_bottleneck_block.6} parent=0 // pred_check
    _
  $region7: #{res_bottleneck_block.6} parent=0 // pred_check_branch
    %11 = sbr.rel (0) target = $region9
  $region8: #{res_bottleneck_block.6} parent=0 // pred_region
    _
  $region9: #{res_bottleneck_block.6} parent=0 // pred_fallthru
    _
  // Predicated region
  $region10: #{res_bottleneck_block.6} parent=0 // pred_check
    _
  $region11: #{res_bottleneck_block.6} parent=0 // pred_check_branch
    %13 = sbr.rel (0) target = $region13
  $region12: #{res_bottleneck_block.6} parent=0 // pred_region
    _
  $region13: #{res_bottleneck_block.6} parent=0 // pred_fallthru
    _
  %v14 = vld [vmem:[%s0] sm:$0xf]
  %v15 = vld [vmem:[%s0 + $0x4] sm:$0xf]
  %v16 = vld [vmem:[%s0 + $0x8] sm:$0xf]
  %v17 = vld [vmem:[%s0 + $0xc] sm:$0xf]
  %v18 = vld [vmem:[%s0 + $0x10] sm:$0xf]
  %v19 = vld [vmem:[%s0 + $0x14] sm:$0xf]
  %v20 = vld [vmem:[%s0 + $0x18] sm:$0xf]
  %v21 = vld [vmem:[%s0 + $0x1c] sm:$0xf]
  %v22 = vld [vmem:[%s0 + $0x20] sm:$0xf]
  %v23 = vld [vmem:[%s0 + $0x24] sm:$0xf]
  %v24 = vld [vmem:[%s0 + $0x28] sm:$0xf]
  %v25 = vld [vmem:[%s0 + $0x2c] sm:$0xf]
  %v26 = vld [vmem:[%s0 + $0x30] sm:$0xf]
  %v27 = vld [vmem:[%s0 + $0x34] sm:$0xf]
  %v28 = vld [vmem:[%s0 + $0x38] sm:$0xf]
  %v29 = vld [vmem:[%s0 + $0x3c] sm:$0xf]
  %v30 = vld [vmem:[%s0 + $0x40] sm:$0xf]
  %v31 = vld [vmem:[%s0 + $0x44] sm:$0xf]
  %v32 = vld [vmem:[%s0 + $0x48] sm:$0xf]
  %v33 = vld [vmem:[%s0 + $0x4c] sm:$0xf]
  %v34 = vld [vmem:[%s0 + $0x50] sm:$0xf]
  %v35 = vld [vmem:[%s0 + $0x54] sm:$0xf]
  %v36 = vld [vmem:[%s0 + $0x58] sm:$0xf]
  %v37 = vld [vmem:[%s0 + $0x5c] sm:$0xf]
  %v38 = vld [vmem:[%s0 + $0x60] sm:$0xf]
  %v39 = vld [vmem:[%s0 + $0x64] sm:$0xf]
  %v40 = vld [vmem:[%s0 + $0x68] sm:$0xf]
  %v41 = vld [vmem:[%s0 + $0x6c] sm:$0xf]
  %v42 = vld [vmem:[%s0 + $0x70] sm:$0xf]
  %v43 = vld [vmem:[%s0 + $0x74] sm:$0xf]
  %v44 = vld [vmem:[%s0 + $0x78] sm:$0xf]
  %v45 = vld [vmem:[%s0 + $0x7c] sm:$0xf]
  %v46 = vld [vmem:[%s0 + $0x80] sm:$0xf]
  %v47 = vld [vmem:[%s0 + $0x84] sm:$0xf]
  %v48 = vld [vmem:[%s0 + $0x88] sm:$0xf]
  %v49 = vld [vmem:[%s0 + $0x8c] sm:$0xf]
  %v50 = vld [vmem:[%s0 + $0x90] sm:$0xf]
  %v51 = vld [vmem:[%s0 + $0x94] sm:$0xf]
  %v52 = vld [vmem:[%s0 + $0x98] sm:$0xf]
  %v53 = vld [vmem:[%s0 + $0x9c] sm:$0xf]
  %v54 = vld [vmem:[%s0 + $0xa0] sm:$0xf]
  %v55 = vld [vmem:[%s0 + $0xa4] sm:$0xf]
  %v56 = vld [vmem:[%s0 + $0xa8] sm:$0xf]
  %v57 = vld [vmem:[%s0 + $0xac] sm:$0xf]
  %v58 = vld [vmem:[%s0 + $0xb0] sm:$0xf]
  %v59 = vld [vmem:[%s0 + $0xb4] sm:$0xf]
  %v60 = vld [vmem:[%s0 + $0xb8] sm:$0xf]
  %v61 = vld [vmem:[%s0 + $0xbc] sm:$0xf]
  %v62 = vld [vmem:[%s0 + $0xc0] sm:$0xf]
  %v63 = vld [vmem:[%s0 + $0xc4] sm:$0xf]
  %v64 = vld [vmem:[%s0 + $0xc8] sm:$0xf]
  %v65 = vld [vmem:[%s0 + $0xcc] sm:$0xf]
  %v66 = vld [vmem:[%s0 + $0xd0] sm:$0xf]
  %v67 = vld [vmem:[%s0 + $0xd4] sm:$0xf]
  %v68 = vld [vmem:[%s0 + $0xd8] sm:$0xf]
  %v69 = vld [vmem:[%s0 + $0xdc] sm:$0xf]
  %v70 = vld [vmem:[%s0 + $0xe0] sm:$0xf]
  %v71 = vld [vmem:[%s0 + $0xe4] sm:$0xf]
  %v72 = vld [vmem:[%s0 + $0xe8] sm:$0xf]
  %v73 = vld [vmem:[%s0 + $0xec] sm:$0xf]
  %v74 = vld [vmem:[%s0 + $0xf0] sm:$0xf]
  %v75 = vld [vmem:[%s0 + $0xf4] sm:$0xf]
  %v76 = vld [vmem:[%s0 + $0xf8] sm:$0xf]
  %v77 = vld [vmem:[%s0 + $0xfc] sm:$0xf]
  %v78 = vunpack.c.l.bf16 %v14
  %v79 = vunpack.c.l.bf16 %v15
  %v80 = vunpack.c.l.bf16 %v16
  %v81 = vunpack.c.l.bf16 %v17
  %v82 = vunpack.c.l.bf16 %v18
  %v83 = vunpack.c.l.bf16 %v19
  %v84 = vunpack.c.l.bf16 %v20
  %v85 = vunpack.c.l.bf16 %v21
  %v86 = vunpack.c.l.bf16 %v22
  %v87 = vunpack.c.l.bf16 %v23
  %v88 = vunpack.c.l.bf16 %v24
  %v89 = vunpack.c.l.bf16 %v25
  %v90 = vunpack.c.l.bf16 %v26
  %v91 = vunpack.c.l.bf16 %v27
  %v92 = vunpack.c.l.bf16 %v28
  %v93 = vunpack.c.l.bf16 %v29
  %v94 = vunpack.c.l.bf16 %v30
  %v95 = vunpack.c.l.bf16 %v31
  %v96 = vunpack.c.l.bf16 %v32
  %v97 = vunpack.c.l.bf16 %v33
  %v98 = vunpack.c.l.bf16 %v34
  %v99 = vunpack.c.l.bf16 %v35
  %v100 = vunpack.c.l.bf16 %v36
  %v101 = vunpack.c.l.bf16 %v37
  %v102 = vunpack.c.l.bf16 %v38
  %v103 = vunpack.c.l.bf16 %v39
  %v104 = vunpack.c.l.bf16 %v40
  %v105 = vunpack.c.l.bf16 %v41
  %v106 = vunpack.c.l.bf16 %v42
  %v107 = vunpack.c.l.bf16 %v43
  %v108 = vunpack.c.l.bf16 %v44
  %v109 = vunpack.c.l.bf16 %v45
  %v110 = vunpack.c.l.bf16 %v46
  %v111 = vunpack.c.l.bf16 %v47
  %v112 = vunpack.c.l.bf16 %v48
  %v113 = vunpack.c.l.bf16 %v49
  %v114 = vunpack.c.l.bf16 %v50
  %v115 = vunpack.c.l.bf16 %v51
  %v116 = vunpack.c.l.bf16 %v52
  %v117 = vunpack.c.l.bf16 %v53
  %v118 = vunpack.c.l.bf16 %v54
  %v119 = vunpack.c.l.bf16 %v55
  %v120 = vunpack.c.l.bf16 %v56
  %v121 = vunpack.c.l.bf16 %v57
  %v122 = vunpack.c.l.bf16 %v58
  %v123 = vunpack.c.l.bf16 %v59
  %v124 = vunpack.c.l.bf16 %v60
  %v125 = vunpack.c.l.bf16 %v61
  %v126 = vunpack.c.l.bf16 %v62
  %v127 = vunpack.c.l.bf16 %v63
  %v128 = vunpack.c.l.bf16 %v64
  %v129 = vunpack.c.l.bf16 %v65
  %v130 = vunpack.c.l.bf16 %v66
  %v131 = vunpack.c.l.bf16 %v67
  %v132 = vunpack.c.l.bf16 %v68
  %v133 = vunpack.c.l.bf16 %v69
  %v134 = vunpack.c.l.bf16 %v70
  %v135 = vunpack.c.l.bf16 %v71
  %v136 = vunpack.c.l.bf16 %v72
  %v137 = vunpack.c.l.bf16 %v73
  %v138 = vunpack.c.l.bf16 %v74
  %v139 = vunpack.c.l.bf16 %v75
  %v140 = vunpack.c.l.bf16 %v76
  %v141 = vunpack.c.l.bf16 %v77
  %v142 = vld [vmem:[%s1] sm:$0x1]
  %v144 = vperm.slane %v142, 0
  %v146 = vmul.f32 %v78, %v144
  %v147 = vmul.f32 %v79, %v144
  %v148 = vmul.f32 %v80, %v144
  %v149 = vmul.f32 %v81, %v144
  %v150 = vmul.f32 %v82, %v144
  %v151 = vmul.f32 %v83, %v144
  %v152 = vmul.f32 %v84, %v144
  %v153 = vmul.f32 %v85, %v144
  %v154 = vmul.f32 %v86, %v144
  %v155 = vmul.f32 %v87, %v144
  %v156 = vmul.f32 %v88, %v144
  %v157 = vmul.f32 %v89, %v144
  %v158 = vmul.f32 %v90, %v144
  %v159 = vmul.f32 %v91, %v144
  %v160 = vmul.f32 %v92, %v144
  %v161 = vmul.f32 %v93, %v144
  %v162 = vmul.f32 %v94, %v144
  %v163 = vmul.f32 %v95, %v144
  %v164 = vmul.f32 %v96, %v144
  %v165 = vmul.f32 %v97, %v144
  %v166 = vmul.f32 %v98, %v144
  %v167 = vmul.f32 %v99, %v144
  %v168 = vmul.f32 %v100, %v144
  %v169 = vmul.f32 %v101, %v144
  %v170 = vmul.f32 %v102, %v144
  %v171 = vmul.f32 %v103, %v144
  %v172 = vmul.f32 %v104, %v144
  %v173 = vmul.f32 %v105, %v144
  %v174 = vmul.f32 %v106, %v144
  %v175 = vmul.f32 %v107, %v144
  %v176 = vmul.f32 %v108, %v144
  %v177 = vmul.f32 %v109, %v144
  %v178 = vmul.f32 %v110, %v144
  %v179 = vmul.f32 %v111, %v144
  %v180 = vmul.f32 %v112, %v144
  %v181 = vmul.f32 %v113, %v144
  %v182 = vmul.f32 %v114, %v144
  %v183 = vmul.f32 %v115, %v144
  %v184 = vmul.f32 %v116, %v144
  %v185 = vmul.f32 %v117, %v144
  %v186 = vmul.f32 %v118, %v144
  %v187 = vmul.f32 %v119, %v144
  %v188 = vmul.f32 %v120, %v144
  %v189 = vmul.f32 %v121, %v144
  %v190 = vmul.f32 %v122, %v144
  %v191 = vmul.f32 %v123, %v144
  %v192 = vmul.f32 %v124, %v144
  %v193 = vmul.f32 %v125, %v144
  %v194 = vmul.f32 %v126, %v144
  %v195 = vmul.f32 %v127, %v144
  %v196 = vmul.f32 %v128, %v144
  %v197 = vmul.f32 %v129, %v144
  %v198 = vmul.f32 %v130, %v144
  %v199 = vmul.f32 %v131, %v144
  %v200 = vmul.f32 %v132, %v144
  %v201 = vmul.f32 %v133, %v144
  %v202 = vmul.f32 %v134, %v144
  %v203 = vmul.f32 %v135, %v144
  %v204 = vmul.f32 %v136, %v144
  %v205 = vmul.f32 %v137, %v144
  %v206 = vmul.f32 %v138, %v144
  %v207 = vmul.f32 %v139, %v144
  %v208 = vmul.f32 %v140, %v144
  %v209 = vmul.f32 %v141, %v144
  %v210 = vld [vmem:[%s2] sm:$0x1]
  %v212 = vperm.slane %v210, 0
  %v214 = vadd.f32 %v146, %v212
  %v215 = vadd.f32 %v147, %v212
  %v216 = vadd.f32 %v148, %v212
  %v217 = vadd.f32 %v149, %v212
  %v218 = vadd.f32 %v150, %v212
  %v219 = vadd.f32 %v151, %v212
  %v220 = vadd.f32 %v152, %v212
  %v221 = vadd.f32 %v153, %v212
  %v222 = vadd.f32 %v154, %v212
  %v223 = vadd.f32 %v155, %v212
  %v224 = vadd.f32 %v156, %v212
  %v225 = vadd.f32 %v157, %v212
  %v226 = vadd.f32 %v158, %v212
  %v227 = vadd.f32 %v159, %v212
  %v228 = vadd.f32 %v160, %v212
  %v229 = vadd.f32 %v161, %v212
  %v230 = vadd.f32 %v162, %v212
  %v231 = vadd.f32 %v163, %v212
  %v232 = vadd.f32 %v164, %v212
  %v233 = vadd.f32 %v165, %v212
  %v234 = vadd.f32 %v166, %v212
  %v235 = vadd.f32 %v167, %v212
  %v236 = vadd.f32 %v168, %v212
  %v237 = vadd.f32 %v169, %v212
  %v238 = vadd.f32 %v170, %v212
  %v239 = vadd.f32 %v171, %v212
  %v240 = vadd.f32 %v172, %v212
  %v241 = vadd.f32 %v173, %v212
  %v242 = vadd.f32 %v174, %v212
  %v243 = vadd.f32 %v175, %v212
  %v244 = vadd.f32 %v176, %v212
  %v245 = vadd.f32 %v177, %v212
  %v246 = vadd.f32 %v178, %v212
  %v247 = vadd.f32 %v179, %v212
  %v248 = vadd.f32 %v180, %v212
  %v249 = vadd.f32 %v181, %v212
  %v250 = vadd.f32 %v182, %v212
  %v251 = vadd.f32 %v183, %v212
  %v252 = vadd.f32 %v184, %v212
  %v253 = vadd.f32 %v185, %v212
  %v254 = vadd.f32 %v186, %v212
  %v255 = vadd.f32 %v187, %v212
  %v256 = vadd.f32 %v188, %v212
  %v257 = vadd.f32 %v189, %v212
  %v258 = vadd.f32 %v190, %v212
  %v259 = vadd.f32 %v191, %v212
  %v260 = vadd.f32 %v192, %v212
  %v261 = vadd.f32 %v193, %v212
  %v262 = vadd.f32 %v194, %v212
  %v263 = vadd.f32 %v195, %v212
  %v264 = vadd.f32 %v196, %v212
  %v265 = vadd.f32 %v197, %v212
  %v266 = vadd.f32 %v198, %v212
  %v267 = vadd.f32 %v199, %v212
  %v268 = vadd.f32 %v200, %v212
  %v269 = vadd.f32 %v201, %v212
  %v270 = vadd.f32 %v202, %v212
  %v271 = vadd.f32 %v203, %v212
  %v272 = vadd.f32 %v204, %v212
  %v273 = vadd.f32 %v205, %v212
  %v274 = vadd.f32 %v206, %v212
  %v275 = vadd.f32 %v207, %v212
  %v276 = vadd.f32 %v208, %v212
  %v277 = vadd.f32 %v209, %v212
  %v278 = vmax.f32 %v214, 0.0
  %v279 = vmax.f32 %v215, 0.0
  %v280 = vmax.f32 %v216, 0.0
  %v281 = vmax.f32 %v217, 0.0
  %v282 = vmax.f32 %v218, 0.0
  %v283 = vmax.f32 %v219, 0.0
  %v284 = vmax.f32 %v220, 0.0
  %v285 = vmax.f32 %v221, 0.0
  %v286 = vmax.f32 %v222, 0.0
  %v287 = vmax.f32 %v223, 0.0
  %v288 = vmax.f32 %v224, 0.0
  %v289 = vmax.f32 %v225, 0.0
  %v290 = vmax.f32 %v226, 0.0
  %v291 = vmax.f32 %v227, 0.0
  %v292 = vmax.f32 %v228, 0.0
  %v293 = vmax.f32 %v229, 0.0
  %v294 = vmax.f32 %v230, 0.0
  %v295 = vmax.f32 %v231, 0.0
  %v296 = vmax.f32 %v232, 0.0
  %v297 = vmax.f32 %v233, 0.0
  %v298 = vmax.f32 %v234, 0.0
  %v299 = vmax.f32 %v235, 0.0
  %v300 = vmax.f32 %v236, 0.0
  %v301 = vmax.f32 %v237, 0.0
  %v302 = vmax.f32 %v238, 0.0
  %v303 = vmax.f32 %v239, 0.0
  %v304 = vmax.f32 %v240, 0.0
  %v305 = vmax.f32 %v241, 0.0
  %v306 = vmax.f32 %v242, 0.0
  %v307 = vmax.f32 %v243, 0.0
  %v308 = vmax.f32 %v244, 0.0
  %v309 = vmax.f32 %v245, 0.0
  %v310 = vmax.f32 %v246, 0.0
  %v311 = vmax.f32 %v247, 0.0
  %v312 = vmax.f32 %v248, 0.0
  %v313 = vmax.f32 %v249, 0.0
  %v314 = vmax.f32 %v250, 0.0
  %v315 = vmax.f32 %v251, 0.0
  %v316 = vmax.f32 %v252, 0.0
  %v317 = vmax.f32 %v253, 0.0
  %v318 = vmax.f32 %v254, 0.0
  %v319 = vmax.f32 %v255, 0.0
  %v320 = vmax.f32 %v256, 0.0
  %v321 = vmax.f32 %v257, 0.0
  %v322 = vmax.f32 %v258, 0.0
  %v323 = vmax.f32 %v259, 0.0
  %v324 = vmax.f32 %v260, 0.0
  %v325 = vmax.f32 %v261, 0.0
  %v326 = vmax.f32 %v262, 0.0
  %v327 = vmax.f32 %v263, 0.0
  %v328 = vmax.f32 %v264, 0.0
  %v329 = vmax.f32 %v265, 0.0
  %v330 = vmax.f32 %v266, 0.0
  %v331 = vmax.f32 %v267, 0.0
  %v332 = vmax.f32 %v268, 0.0
  %v333 = vmax.f32 %v269, 0.0
  %v334 = vmax.f32 %v270, 0.0
  %v335 = vmax.f32 %v271, 0.0
  %v336 = vmax.f32 %v272, 0.0
  %v337 = vmax.f32 %v273, 0.0
  %v338 = vmax.f32 %v274, 0.0
  %v339 = vmax.f32 %v275, 0.0
  %v340 = vmax.f32 %v276, 0.0
  %v341 = vmax.f32 %v277, 0.0
  %v342 = vpack.c.bf16 %v278, %v278
  %v343 = vpack.c.bf16 %v279, %v279
  %v344 = vpack.c.bf16 %v280, %v280
  %v345 = vpack.c.bf16 %v281, %v281
  %v346 = vpack.c.bf16 %v282, %v282
  %v347 = vpack.c.bf16 %v283, %v283
  %v348 = vpack.c.bf16 %v284, %v284
  %v349 = vpack.c.bf16 %v285, %v285
  %v350 = vpack.c.bf16 %v286, %v286
  %v351 = vpack.c.bf16 %v287, %v287
  %v352 = vpack.c.bf16 %v288, %v288
  %v353 = vpack.c.bf16 %v289, %v289
  %v354 = vpack.c.bf16 %v290, %v290
  %v355 = vpack.c.bf16 %v291, %v291
  %v356 = vpack.c.bf16 %v292, %v292
  %v357 = vpack.c.bf16 %v293, %v293
  %v358 = vpack.c.bf16 %v294, %v294
  %v359 = vpack.c.bf16 %v295, %v295
  %v360 = vpack.c.bf16 %v296, %v296
  %v361 = vpack.c.bf16 %v297, %v297
  %v362 = vpack.c.bf16 %v298, %v298
  %v363 = vpack.c.bf16 %v299, %v299
  %v364 = vpack.c.bf16 %v300, %v300
  %v365 = vpack.c.bf16 %v301, %v301
  %v366 = vpack.c.bf16 %v302, %v302
  %v367 = vpack.c.bf16 %v303, %v303
  %v368 = vpack.c.bf16 %v304, %v304
  %v369 = vpack.c.bf16 %v305, %v305
  %v370 = vpack.c.bf16 %v306, %v306
  %v371 = vpack.c.bf16 %v307, %v307
  %v372 = vpack.c.bf16 %v308, %v308
  %v373 = vpack.c.bf16 %v309, %v309
  %v374 = vpack.c.bf16 %v310, %v310
  %v375 = vpack.c.bf16 %v311, %v311
  %v376 = vpack.c.bf16 %v312, %v312
  %v377 = vpack.c.bf16 %v313, %v313
  %v378 = vpack.c.bf16 %v314, %v314
  %v379 = vpack.c.bf16 %v315, %v315
  %v380 = vpack.c.bf16 %v316, %v316
  %v381 = vpack.c.bf16 %v317, %v317
  %v382 = vpack.c.bf16 %v318, %v318
  %v383 = vpack.c.bf16 %v319, %v319
  %v384 = vpack.c.bf16 %v320, %v320
  %v385 = vpack.c.bf16 %v321, %v321
  %v386 = vpack.c.bf16 %v322, %v322
  %v387 = vpack.c.bf16 %v323, %v323
  %v388 = vpack.c.bf16 %v324, %v324
  %v389 = vpack.c.bf16 %v325, %v325
  %v390 = vpack.c.bf16 %v326, %v326
  %v391 = vpack.c.bf16 %v327, %v327
  %v392 = vpack.c.bf16 %v328, %v328
  %v393 = vpack.c.bf16 %v329, %v329
  %v394 = vpack.c.bf16 %v330, %v330
  %v395 = vpack.c.bf16 %v331, %v331
  %v396 = vpack.c.bf16 %v332, %v332
  %v397 = vpack.c.bf16 %v333, %v333
  %v398 = vpack.c.bf16 %v334, %v334
  %v399 = vpack.c.bf16 %v335, %v335
  %v400 = vpack.c.bf16 %v336, %v336
  %v401 = vpack.c.bf16 %v337, %v337
  %v402 = vpack.c.bf16 %v338, %v338
  %v403 = vpack.c.bf16 %v339, %v339
  %v404 = vpack.c.bf16 %v340, %v340
  %v405 = vpack.c.bf16 %v341, %v341
  %406 = vst [vmem:[%s3] sm:$0xf] %v342
  %407 = vst [vmem:[%s3 + $0x4] sm:$0xf] %v343
  %408 = vst [vmem:[%s3 + $0x8] sm:$0xf] %v344
  %409 = vst [vmem:[%s3 + $0xc] sm:$0xf] %v345
  %410 = vst [vmem:[%s3 + $0x10] sm:$0xf] %v346
  %411 = vst [vmem:[%s3 + $0x14] sm:$0xf] %v347
  %412 = vst [vmem:[%s3 + $0x18] sm:$0xf] %v348
  %413 = vst [vmem:[%s3 + $0x1c] sm:$0xf] %v349
  %414 = vst [vmem:[%s3 + $0x20] sm:$0xf] %v350
  %415 = vst [vmem:[%s3 + $0x24] sm:$0xf] %v351
  %416 = vst [vmem:[%s3 + $0x28] sm:$0xf] %v352
  %417 = vst [vmem:[%s3 + $0x2c] sm:$0xf] %v353
  %418 = vst [vmem:[%s3 + $0x30] sm:$0xf] %v354
  %419 = vst [vmem:[%s3 + $0x34] sm:$0xf] %v355
  %420 = vst [vmem:[%s3 + $0x38] sm:$0xf] %v356
  %421 = vst [vmem:[%s3 + $0x3c] sm:$0xf] %v357
  %422 = vst [vmem:[%s3 + $0x40] sm:$0xf] %v358
  %423 = vst [vmem:[%s3 + $0x44] sm:$0xf] %v359
  %424 = vst [vmem:[%s3 + $0x48] sm:$0xf] %v360
  %425 = vst [vmem:[%s3 + $0x4c] sm:$0xf] %v361
  %426 = vst [vmem:[%s3 + $0x50] sm:$0xf] %v362
  %427 = vst [vmem:[%s3 + $0x54] sm:$0xf] %v363
  %428 = vst [vmem:[%s3 + $0x58] sm:$0xf] %v364
  %429 = vst [vmem:[%s3 + $0x5c] sm:$0xf] %v365
  %430 = vst [vmem:[%s3 + $0x60] sm:$0xf] %v366
  %431 = vst [vmem:[%s3 + $0x64] sm:$0xf] %v367
  %432 = vst [vmem:[%s3 + $0x68] sm:$0xf] %v368
  %433 = vst [vmem:[%s3 + $0x6c] sm:$0xf] %v369
  %434 = vst [vmem:[%s3 + $0x70] sm:$0xf] %v370
  %435 = vst [vmem:[%s3 + $0x74] sm:$0xf] %v371
  %436 = vst [vmem:[%s3 + $0x78] sm:$0xf] %v372
  %437 = vst [vmem:[%s3 + $0x7c] sm:$0xf] %v373
  %438 = vst [vmem:[%s3 + $0x80] sm:$0xf] %v374
  %439 = vst [vmem:[%s3 + $0x84] sm:$0xf] %v375
  %440 = vst [vmem:[%s3 + $0x88] sm:$0xf] %v376
  %441 = vst [vmem:[%s3 + $0x8c] sm:$0xf] %v377
  %442 = vst [vmem:[%s3 + $0x90] sm:$0xf] %v378
  %443 = vst [vmem:[%s3 + $0x94] sm:$0xf] %v379
  %444 = vst [vmem:[%s3 + $0x98] sm:$0xf] %v380
  %445 = vst [vmem:[%s3 + $0x9c] sm:$0xf] %v381
  %446 = vst [vmem:[%s3 + $0xa0] sm:$0xf] %v382
  %447 = vst [vmem:[%s3 + $0xa4] sm:$0xf] %v383
  %448 = vst [vmem:[%s3 + $0xa8] sm:$0xf] %v384
  %449 = vst [vmem:[%s3 + $0xac] sm:$0xf] %v385
  %450 = vst [vmem:[%s3 + $0xb0] sm:$0xf] %v386
  %451 = vst [vmem:[%s3 + $0xb4] sm:$0xf] %v387
  %452 = vst [vmem:[%s3 + $0xb8] sm:$0xf] %v388
  %453 = vst [vmem:[%s3 + $0xbc] sm:$0xf] %v389
  %454 = vst [vmem:[%s3 + $0xc0] sm:$0xf] %v390
  %455 = vst [vmem:[%s3 + $0xc4] sm:$0xf] %v391
  %456 = vst [vmem:[%s3 + $0xc8] sm:$0xf] %v392
  %457 = vst [vmem:[%s3 + $0xcc] sm:$0xf] %v393
  %458 = vst [vmem:[%s3 + $0xd0] sm:$0xf] %v394
  %459 = vst [vmem:[%s3 + $0xd4] sm:$0xf] %v395
  %460 = vst [vmem:[%s3 + $0xd8] sm:$0xf] %v396
  %461 = vst [vmem:[%s3 + $0xdc] sm:$0xf] %v397
  %462 = vst [vmem:[%s3 + $0xe0] sm:$0xf] %v398
  %463 = vst [vmem:[%s3 + $0xe4] sm:$0xf] %v399
  %464 = vst [vmem:[%s3 + $0xe8] sm:$0xf] %v400
  %465 = vst [vmem:[%s3 + $0xec] sm:$0xf] %v401
  %466 = vst [vmem:[%s3 + $0xf0] sm:$0xf] %v402
  %467 = vst [vmem:[%s3 + $0xf4] sm:$0xf] %v403
  %468 = vst [vmem:[%s3 + $0xf8] sm:$0xf] %v404
  %469 = vst [vmem:[%s3 + $0xfc] sm:$0xf] %v405
  // Predicated region
  $region14: #{res_bottleneck_block.6} parent=0 // pred_check
    _
  $region15: #{res_bottleneck_block.6} parent=0 // pred_check_branch
    %471 = sbr.rel (0) target = $region17
  $region16: #{res_bottleneck_block.6} parent=0 // pred_region
    _
  $region17: #{res_bottleneck_block.6} parent=0 // pred_fallthru
    _
  // Predicated region
  $region18: #{res_bottleneck_block.6} parent=0 // pred_check
    _
  $region19: #{res_bottleneck_block.6} parent=0 // pred_check_branch
    %473 = sbr.rel (0) target = $region21
  $region20: #{res_bottleneck_block.6} parent=0 // pred_region
    _
  $region21: #{res_bottleneck_block.6} parent=0 // pred_fallthru
    _

// kernel: res_bottleneck_block.5
$region0: #{res_bottleneck_block.5}
  #allocation0 [shape = 'u32[]', space=smem, size = 0x4, offset = 0x4, fixed_abs, tag = 'smem constant byte address 0x4 - core index']
  #allocation1 [shape = 'u32[72,128]{1,0:T(1,128)}', space=vmem, size = 0x9000, scoped, tag = 'internal scratch']
  %s0 = inlined_call_operand.vmem [shape: bf16[512,128], index: 0, kind: input, shape index: {}]
  %s1 = inlined_call_operand.vmem [shape: bf16[128,128], index: 1, kind: input, shape index: {}]
  %s2 = inlined_call_operand.vmem [shape: bf16[512,128], index: 2, kind: output, shape index: {0}]
  %s3 = inlined_call_operand.vmem [shape: f32[1,2,128], index: 3, kind: output, shape index: {1}]
  %4 = xla_tuple %s2, %s3
  %s5 = sld [smem:[#allocation0]]
  $region26: #{res_bottleneck_block.5} parent=0
    _
  %s7 = ssub.s32 1, %s5
  %s8 = scalar_select 0, %s7, %s5
  // Predicated region
  $region2: #{res_bottleneck_block.5} parent=0 // pred_check
    _
  $region3: #{res_bottleneck_block.5} parent=0 // pred_check_branch
    %10 = sbr.rel (0) target = $region5
  $region4: #{res_bottleneck_block.5} parent=0 // pred_region
    _
  $region5: #{res_bottleneck_block.5} parent=0 // pred_fallthru
    _
  // Predicated region
  $region6: #{res_bottleneck_block.5} parent=0 // pred_check
    _
  $region7: #{res_bottleneck_block.5} parent=0 // pred_check_branch
    %12 = sbr.rel (0) target = $region9
  $region8: #{res_bottleneck_block.5} parent=0 // pred_region
    _
  $region9: #{res_bottleneck_block.5} parent=0 // pred_fallthru
    _
  %v13 = vld [vmem:[%s0] sm:$0xf]
  %v14 = vld [vmem:[%s0 + $0x4] sm:$0xf]
  %v15 = vld [vmem:[%s0 + $0x8] sm:$0xf]
  %v16 = vld [vmem:[%s0 + $0xc] sm:$0xf]
  %v17 = vld [vmem:[%s0 + $0x10] sm:$0xf]
  %v18 = vld [vmem:[%s0 + $0x14] sm:$0xf]
  %v19 = vld [vmem:[%s0 + $0x18] sm:$0xf]
  %v20 = vld [vmem:[%s0 + $0x1c] sm:$0xf]
  %v21 = vld [vmem:[%s0 + $0x20] sm:$0xf]
  %v22 = vld [vmem:[%s0 + $0x24] sm:$0xf]
  %v23 = vld [vmem:[%s0 + $0x28] sm:$0xf]
  %v24 = vld [vmem:[%s0 + $0x2c] sm:$0xf]
  %v25 = vld [vmem:[%s0 + $0x30] sm:$0xf]
  %v26 = vld [vmem:[%s0 + $0x34] sm:$0xf]
  %v27 = vld [vmem:[%s0 + $0x38] sm:$0xf]
  %v28 = vld [vmem:[%s0 + $0x3c] sm:$0xf]
  %v29 = vld [vmem:[%s0 + $0x40] sm:$0xf]
  %v30 = vld [vmem:[%s0 + $0x44] sm:$0xf]
  %v31 = vld [vmem:[%s0 + $0x48] sm:$0xf]
  %v32 = vld [vmem:[%s0 + $0x4c] sm:$0xf]
  %v33 = vld [vmem:[%s0 + $0x50] sm:$0xf]
  %v34 = vld [vmem:[%s0 + $0x54] sm:$0xf]
  %v35 = vld [vmem:[%s0 + $0x58] sm:$0xf]
  %v36 = vld [vmem:[%s0 + $0x5c] sm:$0xf]
  %v37 = vld [vmem:[%s0 + $0x60] sm:$0xf]
  %v38 = vld [vmem:[%s0 + $0x64] sm:$0xf]
  %v39 = vld [vmem:[%s0 + $0x68] sm:$0xf]
  %v40 = vld [vmem:[%s0 + $0x6c] sm:$0xf]
  %v41 = vld [vmem:[%s0 + $0x70] sm:$0xf]
  %v42 = vld [vmem:[%s0 + $0x74] sm:$0xf]
  %v43 = vld [vmem:[%s0 + $0x78] sm:$0xf]
  %v44 = vld [vmem:[%s0 + $0x7c] sm:$0xf]
  %v45 = vld [vmem:[%s0 + $0x80] sm:$0xf]
  %v46 = vld [vmem:[%s0 + $0x84] sm:$0xf]
  %v47 = vld [vmem:[%s0 + $0x88] sm:$0xf]
  %v48 = vld [vmem:[%s0 + $0x8c] sm:$0xf]
  %v49 = vld [vmem:[%s0 + $0x90] sm:$0xf]
  %v50 = vld [vmem:[%s0 + $0x94] sm:$0xf]
  %v51 = vld [vmem:[%s0 + $0x98] sm:$0xf]
  %v52 = vld [vmem:[%s0 + $0x9c] sm:$0xf]
  %v53 = vld [vmem:[%s0 + $0xa0] sm:$0xf]
  %v54 = vld [vmem:[%s0 + $0xa4] sm:$0xf]
  %v55 = vld [vmem:[%s0 + $0xa8] sm:$0xf]
  %v56 = vld [vmem:[%s0 + $0xac] sm:$0xf]
  %v57 = vld [vmem:[%s0 + $0xb0] sm:$0xf]
  %v58 = vld [vmem:[%s0 + $0xb4] sm:$0xf]
  %v59 = vld [vmem:[%s0 + $0xb8] sm:$0xf]
  %v60 = vld [vmem:[%s0 + $0xbc] sm:$0xf]
  %v61 = vld [vmem:[%s0 + $0xc0] sm:$0xf]
  %v62 = vld [vmem:[%s0 + $0xc4] sm:$0xf]
  %v63 = vld [vmem:[%s0 + $0xc8] sm:$0xf]
  %v64 = vld [vmem:[%s0 + $0xcc] sm:$0xf]
  %v65 = vld [vmem:[%s0 + $0xd0] sm:$0xf]
  %v66 = vld [vmem:[%s0 + $0xd4] sm:$0xf]
  %v67 = vld [vmem:[%s0 + $0xd8] sm:$0xf]
  %v68 = vld [vmem:[%s0 + $0xdc] sm:$0xf]
  %v69 = vld [vmem:[%s0 + $0xe0] sm:$0xf]
  %v70 = vld [vmem:[%s0 + $0xe4] sm:$0xf]
  %v71 = vld [vmem:[%s0 + $0xe8] sm:$0xf]
  %v72 = vld [vmem:[%s0 + $0xec] sm:$0xf]
  %v73 = vld [vmem:[%s0 + $0xf0] sm:$0xf]
  %v74 = vld [vmem:[%s0 + $0xf4] sm:$0xf]
  %v75 = vld [vmem:[%s0 + $0xf8] sm:$0xf]
  %v76 = vld [vmem:[%s0 + $0xfc] sm:$0xf]
  %v77 = vld [vmem:[%s1] sm:$0xf]
  %v78 = vld [vmem:[%s1 + $0x4] sm:$0xf]
  %v79 = vld [vmem:[%s1 + $0x8] sm:$0xf]
  %v80 = vld [vmem:[%s1 + $0xc] sm:$0xf]
  %v81 = vld [vmem:[%s1 + $0x10] sm:$0xf]
  %v82 = vld [vmem:[%s1 + $0x14] sm:$0xf]
  %v83 = vld [vmem:[%s1 + $0x18] sm:$0xf]
  %v84 = vld [vmem:[%s1 + $0x1c] sm:$0xf]
  %v85 = vld [vmem:[%s1 + $0x20] sm:$0xf]
  %v86 = vld [vmem:[%s1 + $0x24] sm:$0xf]
  %v87 = vld [vmem:[%s1 + $0x28] sm:$0xf]
  %v88 = vld [vmem:[%s1 + $0x2c] sm:$0xf]
  %v89 = vld [vmem:[%s1 + $0x30] sm:$0xf]
  %v90 = vld [vmem:[%s1 + $0x34] sm:$0xf]
  %v91 = vld [vmem:[%s1 + $0x38] sm:$0xf]
  %v92 = vld [vmem:[%s1 + $0x3c] sm:$0xf]
  %v157 = vunpack.c.l.b16 %v13
  %v158 = vunpack.c.l.b16 %v14
  %v159 = vunpack.c.l.b16 %v15
  %v160 = vunpack.c.l.b16 %v16
  %v161 = vunpack.c.l.b16 %v17
  %v162 = vunpack.c.l.b16 %v18
  %v163 = vunpack.c.l.b16 %v19
  %v164 = vunpack.c.l.b16 %v20
  %v165 = vunpack.c.l.b16 %v21
  %v166 = vunpack.c.l.b16 %v22
  %v167 = vunpack.c.l.b16 %v23
  %v168 = vunpack.c.l.b16 %v24
  %v169 = vunpack.c.l.b16 %v25
  %v170 = vunpack.c.l.b16 %v26
  %v171 = vunpack.c.l.b16 %v27
  %v172 = vunpack.c.l.b16 %v28
  %v173 = vunpack.c.l.b16 %v29
  %v174 = vunpack.c.l.b16 %v30
  %v175 = vunpack.c.l.b16 %v31
  %v176 = vunpack.c.l.b16 %v32
  %v177 = vunpack.c.l.b16 %v33
  %v178 = vunpack.c.l.b16 %v34
  %v179 = vunpack.c.l.b16 %v35
  %v180 = vunpack.c.l.b16 %v36
  %v181 = vunpack.c.l.b16 %v37
  %v182 = vunpack.c.l.b16 %v38
  %v183 = vunpack.c.l.b16 %v39
  %v184 = vunpack.c.l.b16 %v40
  %v185 = vunpack.c.l.b16 %v41
  %v186 = vunpack.c.l.b16 %v42
  %v187 = vunpack.c.l.b16 %v43
  %v188 = vunpack.c.l.b16 %v44
  %v189 = vunpack.c.l.b16 %v45
  %v190 = vunpack.c.l.b16 %v46
  %v191 = vunpack.c.l.b16 %v47
  %v192 = vunpack.c.l.b16 %v48
  %v193 = vunpack.c.l.b16 %v49
  %v194 = vunpack.c.l.b16 %v50
  %v195 = vunpack.c.l.b16 %v51
  %v196 = vunpack.c.l.b16 %v52
  %v197 = vunpack.c.l.b16 %v53
  %v198 = vunpack.c.l.b16 %v54
  %v199 = vunpack.c.l.b16 %v55
  %v200 = vunpack.c.l.b16 %v56
  %v201 = vunpack.c.l.b16 %v57
  %v202 = vunpack.c.l.b16 %v58
  %v203 = vunpack.c.l.b16 %v59
  %v204 = vunpack.c.l.b16 %v60
  %v205 = vunpack.c.l.b16 %v61
  %v206 = vunpack.c.l.b16 %v62
  %v207 = vunpack.c.l.b16 %v63
  %v208 = vunpack.c.l.b16 %v64
  %v209 = vunpack.c.l.b16 %v65
  %v210 = vunpack.c.l.b16 %v66
  %v211 = vunpack.c.l.b16 %v67
  %v212 = vunpack.c.l.b16 %v68
  %v213 = vunpack.c.l.b16 %v69
  %v214 = vunpack.c.l.b16 %v70
  %v215 = vunpack.c.l.b16 %v71
  %v216 = vunpack.c.l.b16 %v72
  %v217 = vunpack.c.l.b16 %v73
  %v218 = vunpack.c.l.b16 %v74
  %v219 = vunpack.c.l.b16 %v75
  %v220 = vunpack.c.l.b16 %v76
  %v221 = vpack.c.b16 %v158, %v157
  %v222 = vpack.c.b16 %v160, %v159
  %v223 = vpack.c.b16 %v162, %v161
  %v224 = vpack.c.b16 %v164, %v163
  %v225 = vpack.c.b16 %v166, %v165
  %v226 = vpack.c.b16 %v168, %v167
  %v227 = vpack.c.b16 %v170, %v169
  %v228 = vpack.c.b16 %v172, %v171
  %v229 = vpack.c.b16 %v174, %v173
  %v230 = vpack.c.b16 %v176, %v175
  %v231 = vpack.c.b16 %v178, %v177
  %v232 = vpack.c.b16 %v180, %v179
  %v233 = vpack.c.b16 %v182, %v181
  %v234 = vpack.c.b16 %v184, %v183
  %v235 = vpack.c.b16 %v186, %v185
  %v236 = vpack.c.b16 %v188, %v187
  %v237 = vpack.c.b16 %v190, %v189
  %v238 = vpack.c.b16 %v192, %v191
  %v239 = vpack.c.b16 %v194, %v193
  %v240 = vpack.c.b16 %v196, %v195
  %v241 = vpack.c.b16 %v198, %v197
  %v242 = vpack.c.b16 %v200, %v199
  %v243 = vpack.c.b16 %v202, %v201
  %v244 = vpack.c.b16 %v204, %v203
  %v245 = vpack.c.b16 %v206, %v205
  %v246 = vpack.c.b16 %v208, %v207
  %v247 = vpack.c.b16 %v210, %v209
  %v248 = vpack.c.b16 %v212, %v211
  %v249 = vpack.c.b16 %v214, %v213
  %v250 = vpack.c.b16 %v216, %v215
  %v251 = vpack.c.b16 %v218, %v217
  %v252 = vpack.c.b16 %v220, %v219
  %v301 = vunpack.c.l.b16 %v77
  %v302 = vunpack.c.l.b16 %v78
  %v303 = vunpack.c.l.b16 %v79
  %v304 = vunpack.c.l.b16 %v80
  %v305 = vunpack.c.l.b16 %v81
  %v306 = vunpack.c.l.b16 %v82
  %v307 = vunpack.c.l.b16 %v83
  %v308 = vunpack.c.l.b16 %v84
  %v309 = vunpack.c.l.b16 %v85
  %v310 = vunpack.c.l.b16 %v86
  %v311 = vunpack.c.l.b16 %v87
  %v312 = vunpack.c.l.b16 %v88
  %v313 = vunpack.c.l.b16 %v89
  %v314 = vunpack.c.l.b16 %v90
  %v315 = vunpack.c.l.b16 %v91
  %v316 = vunpack.c.l.b16 %v92
  %v317 = vpack.c.b16 %v302, %v301
  %v318 = vpack.c.b16 %v304, %v303
  %v319 = vpack.c.b16 %v306, %v305
  %v320 = vpack.c.b16 %v308, %v307
  %v321 = vpack.c.b16 %v310, %v309
  %v322 = vpack.c.b16 %v312, %v311
  %v323 = vpack.c.b16 %v314, %v313
  %v324 = vpack.c.b16 %v316, %v315
  %333 = vmatpush.bf16.msra.mxu0 %v324
  %334 = vmatpush.bf16.msra.mxu0 %v323
  %335 = vmatpush.bf16.msra.mxu0 %v322
  %336 = vmatpush.bf16.msra.mxu0 %v321
  %337 = vmatpush.bf16.msra.mxu0 %v320
  %338 = vmatpush.bf16.msra.mxu0 %v319
  %339 = vmatpush.bf16.msra.mxu0 %v318
  %340 = vmatpush.bf16.msra.mxu0 %v317
  %341 = vmatmul.bf16.gmra.mxu0 %v221
  %v342 = vpop.f32.mrf.mxu0
  %v343 = vadd.f32 0.0, %v342
  %v344 = vpop.f32.mrf.mxu0
  %v345 = vadd.f32 0.0, %v344
  %346 = vmatmul.bf16.gmra.mxu0 %v222
  %v347 = vpop.f32.mrf.mxu0
  %v348 = vadd.f32 0.0, %v347
  %v349 = vpop.f32.mrf.mxu0
  %v350 = vadd.f32 0.0, %v349
  %351 = vmatmul.bf16.gmra.mxu0 %v223
  %v352 = vpop.f32.mrf.mxu0
  %v353 = vadd.f32 0.0, %v352
  %v354 = vpop.f32.mrf.mxu0
  %v355 = vadd.f32 0.0, %v354
  %356 = vmatmul.bf16.gmra.mxu0 %v224
  %v357 = vpop.f32.mrf.mxu0
  %v358 = vadd.f32 0.0, %v357
  %v359 = vpop.f32.mrf.mxu0
  %v360 = vadd.f32 0.0, %v359
  %361 = vmatmul.bf16.gmra.mxu0 %v225
  %v362 = vpop.f32.mrf.mxu0
  %v363 = vadd.f32 0.0, %v362
  %v364 = vpop.f32.mrf.mxu0
  %v365 = vadd.f32 0.0, %v364
  %366 = vmatmul.bf16.gmra.mxu0 %v226
  %v367 = vpop.f32.mrf.mxu0
  %v368 = vadd.f32 0.0, %v367
  %v369 = vpop.f32.mrf.mxu0
  %v370 = vadd.f32 0.0, %v369
  %371 = vmatmul.bf16.gmra.mxu0 %v227
  %v372 = vpop.f32.mrf.mxu0
  %v373 = vadd.f32 0.0, %v372
  %v374 = vpop.f32.mrf.mxu0
  %v375 = vadd.f32 0.0, %v374
  %376 = vmatmul.bf16.gmra.mxu0 %v228
  %v377 = vpop.f32.mrf.mxu0
  %v378 = vadd.f32 0.0, %v377
  %v379 = vpop.f32.mrf.mxu0
  %v380 = vadd.f32 0.0, %v379
  %381 = vmatmul.bf16.gmra.mxu0 %v229
  %v382 = vpop.f32.mrf.mxu0
  %v383 = vadd.f32 0.0, %v382
  %v384 = vpop.f32.mrf.mxu0
  %v385 = vadd.f32 0.0, %v384
  %386 = vmatmul.bf16.gmra.mxu0 %v230
  %v387 = vpop.f32.mrf.mxu0
  %v388 = vadd.f32 0.0, %v387
  %v389 = vpop.f32.mrf.mxu0
  %v390 = vadd.f32 0.0, %v389
  %391 = vmatmul.bf16.gmra.mxu0 %v231
  %v392 = vpop.f32.mrf.mxu0
  %v393 = vadd.f32 0.0, %v392
  %v394 = vpop.f32.mrf.mxu0
  %v395 = vadd.f32 0.0, %v394
  %396 = vmatmul.bf16.gmra.mxu0 %v232
  %v397 = vpop.f32.mrf.mxu0
  %v398 = vadd.f32 0.0, %v397
  %v399 = vpop.f32.mrf.mxu0
  %v400 = vadd.f32 0.0, %v399
  %401 = vmatmul.bf16.gmra.mxu0 %v233
  %v402 = vpop.f32.mrf.mxu0
  %v403 = vadd.f32 0.0, %v402
  %v404 = vpop.f32.mrf.mxu0
  %v405 = vadd.f32 0.0, %v404
  %406 = vmatmul.bf16.gmra.mxu0 %v234
  %v407 = vpop.f32.mrf.mxu0
  %v408 = vadd.f32 0.0, %v407
  %v409 = vpop.f32.mrf.mxu0
  %v410 = vadd.f32 0.0, %v409
  %411 = vmatmul.bf16.gmra.mxu0 %v235
  %v412 = vpop.f32.mrf.mxu0
  %v413 = vadd.f32 0.0, %v412
  %v414 = vpop.f32.mrf.mxu0
  %v415 = vadd.f32 0.0, %v414
  %416 = vmatmul.bf16.gmra.mxu0 %v236
  %v417 = vpop.f32.mrf.mxu0
  %v418 = vadd.f32 0.0, %v417
  %v419 = vpop.f32.mrf.mxu0
  %v420 = vadd.f32 0.0, %v419
  %421 = vmatmul.bf16.gmra.mxu0 %v237
  %v422 = vpop.f32.mrf.mxu0
  %v423 = vadd.f32 0.0, %v422
  %v424 = vpop.f32.mrf.mxu0
  %v425 = vadd.f32 0.0, %v424
  %426 = vmatmul.bf16.gmra.mxu0 %v238
  %v427 = vpop.f32.mrf.mxu0
  %v428 = vadd.f32 0.0, %v427
  %v429 = vpop.f32.mrf.mxu0
  %v430 = vadd.f32 0.0, %v429
  %431 = vmatmul.bf16.gmra.mxu0 %v239
  %v432 = vpop.f32.mrf.mxu0
  %v433 = vadd.f32 0.0, %v432
  %v434 = vpop.f32.mrf.mxu0
  %v435 = vadd.f32 0.0, %v434
  %436 = vmatmul.bf16.gmra.mxu0 %v240
  %v437 = vpop.f32.mrf.mxu0
  %v438 = vadd.f32 0.0, %v437
  %v439 = vpop.f32.mrf.mxu0
  %v440 = vadd.f32 0.0, %v439
  %441 = vmatmul.bf16.gmra.mxu0 %v241
  %v442 = vpop.f32.mrf.mxu0
  %v443 = vadd.f32 0.0, %v442
  %v444 = vpop.f32.mrf.mxu0
  %v445 = vadd.f32 0.0, %v444
  %446 = vmatmul.bf16.gmra.mxu0 %v242
  %v447 = vpop.f32.mrf.mxu0
  %v448 = vadd.f32 0.0, %v447
  %v449 = vpop.f32.mrf.mxu0
  %v450 = vadd.f32 0.0, %v449
  %451 = vmatmul.bf16.gmra.mxu0 %v243
  %v452 = vpop.f32.mrf.mxu0
  %v453 = vadd.f32 0.0, %v452
  %v454 = vpop.f32.mrf.mxu0
  %v455 = vadd.f32 0.0, %v454
  %456 = vmatmul.bf16.gmra.mxu0 %v244
  %v457 = vpop.f32.mrf.mxu0
  %v458 = vadd.f32 0.0, %v457
  %v459 = vpop.f32.mrf.mxu0
  %v460 = vadd.f32 0.0, %v459
  %461 = vmatmul.bf16.gmra.mxu0 %v245
  %v462 = vpop.f32.mrf.mxu0
  %v463 = vadd.f32 0.0, %v462
  %v464 = vpop.f32.mrf.mxu0
  %v465 = vadd.f32 0.0, %v464
  %466 = vmatmul.bf16.gmra.mxu0 %v246
  %v467 = vpop.f32.mrf.mxu0
  %v468 = vadd.f32 0.0, %v467
  %v469 = vpop.f32.mrf.mxu0
  %v470 = vadd.f32 0.0, %v469
  %471 = vmatmul.bf16.gmra.mxu0 %v247
  %v472 = vpop.f32.mrf.mxu0
  %v473 = vadd.f32 0.0, %v472
  %v474 = vpop.f32.mrf.mxu0
  %v475 = vadd.f32 0.0, %v474
  %476 = vmatmul.bf16.gmra.mxu0 %v248
  %v477 = vpop.f32.mrf.mxu0
  %v478 = vadd.f32 0.0, %v477
  %v479 = vpop.f32.mrf.mxu0
  %v480 = vadd.f32 0.0, %v479
  %481 = vmatmul.bf16.gmra.mxu0 %v249
  %v482 = vpop.f32.mrf.mxu0
  %v483 = vadd.f32 0.0, %v482
  %v484 = vpop.f32.mrf.mxu0
  %v485 = vadd.f32 0.0, %v484
  %486 = vmatmul.bf16.gmra.mxu0 %v250
  %v487 = vpop.f32.mrf.mxu0
  %v488 = vadd.f32 0.0, %v487
  %v489 = vpop.f32.mrf.mxu0
  %v490 = vadd.f32 0.0, %v489
  %491 = vmatmul.bf16.gmra.mxu0 %v251
  %v492 = vpop.f32.mrf.mxu0
  %v493 = vadd.f32 0.0, %v492
  %v494 = vpop.f32.mrf.mxu0
  %v495 = vadd.f32 0.0, %v494
  %496 = vmatmul.bf16.gmra.mxu0 %v252
  %v497 = vpop.f32.mrf.mxu0
  %v498 = vadd.f32 0.0, %v497
  %v499 = vpop.f32.mrf.mxu0
  %v500 = vadd.f32 0.0, %v499
  %501 = vdwg.mxu0
  %v502 = vpack.c.bf16 %v343, %v343
  %v503 = vpack.c.bf16 %v345, %v345
  %v504 = vpack.c.bf16 %v348, %v348
  %v505 = vpack.c.bf16 %v350, %v350
  %v506 = vpack.c.bf16 %v353, %v353
  %v507 = vpack.c.bf16 %v355, %v355
  %v508 = vpack.c.bf16 %v358, %v358
  %v509 = vpack.c.bf16 %v360, %v360
  %v510 = vpack.c.bf16 %v363, %v363
  %v511 = vpack.c.bf16 %v365, %v365
  %v512 = vpack.c.bf16 %v368, %v368
  %v513 = vpack.c.bf16 %v370, %v370
  %v514 = vpack.c.bf16 %v373, %v373
  %v515 = vpack.c.bf16 %v375, %v375
  %v516 = vpack.c.bf16 %v378, %v378
  %v517 = vpack.c.bf16 %v380, %v380
  %v518 = vpack.c.bf16 %v383, %v383
  %v519 = vpack.c.bf16 %v385, %v385
  %v520 = vpack.c.bf16 %v388, %v388
  %v521 = vpack.c.bf16 %v390, %v390
  %v522 = vpack.c.bf16 %v393, %v393
  %v523 = vpack.c.bf16 %v395, %v395
  %v524 = vpack.c.bf16 %v398, %v398
  %v525 = vpack.c.bf16 %v400, %v400
  %v526 = vpack.c.bf16 %v403, %v403
  %v527 = vpack.c.bf16 %v405, %v405
  %v528 = vpack.c.bf16 %v408, %v408
  %v529 = vpack.c.bf16 %v410, %v410
  %v530 = vpack.c.bf16 %v413, %v413
  %v531 = vpack.c.bf16 %v415, %v415
  %v532 = vpack.c.bf16 %v418, %v418
  %v533 = vpack.c.bf16 %v420, %v420
  %v534 = vpack.c.bf16 %v423, %v423
  %v535 = vpack.c.bf16 %v425, %v425
  %v536 = vpack.c.bf16 %v428, %v428
  %v537 = vpack.c.bf16 %v430, %v430
  %v538 = vpack.c.bf16 %v433, %v433
  %v539 = vpack.c.bf16 %v435, %v435
  %v540 = vpack.c.bf16 %v438, %v438
  %v541 = vpack.c.bf16 %v440, %v440
  %v542 = vpack.c.bf16 %v443, %v443
  %v543 = vpack.c.bf16 %v445, %v445
  %v544 = vpack.c.bf16 %v448, %v448
  %v545 = vpack.c.bf16 %v450, %v450
  %v546 = vpack.c.bf16 %v453, %v453
  %v547 = vpack.c.bf16 %v455, %v455
  %v548 = vpack.c.bf16 %v458, %v458
  %v549 = vpack.c.bf16 %v460, %v460
  %v550 = vpack.c.bf16 %v463, %v463
  %v551 = vpack.c.bf16 %v465, %v465
  %v552 = vpack.c.bf16 %v468, %v468
  %v553 = vpack.c.bf16 %v470, %v470
  %v554 = vpack.c.bf16 %v473, %v473
  %v555 = vpack.c.bf16 %v475, %v475
  %v556 = vpack.c.bf16 %v478, %v478
  %v557 = vpack.c.bf16 %v480, %v480
  %v558 = vpack.c.bf16 %v483, %v483
  %v559 = vpack.c.bf16 %v485, %v485
  %v560 = vpack.c.bf16 %v488, %v488
  %v561 = vpack.c.bf16 %v490, %v490
  %v562 = vpack.c.bf16 %v493, %v493
  %v563 = vpack.c.bf16 %v495, %v495
  %v564 = vpack.c.bf16 %v498, %v498
  %v565 = vpack.c.bf16 %v500, %v500
  %v566 = vunpack.c.l.bf16 %v502
  %v567 = vunpack.c.l.bf16 %v503
  %v568 = vunpack.c.l.bf16 %v504
  %v569 = vunpack.c.l.bf16 %v505
  %v570 = vunpack.c.l.bf16 %v506
  %v571 = vunpack.c.l.bf16 %v507
  %v572 = vunpack.c.l.bf16 %v508
  %v573 = vunpack.c.l.bf16 %v509
  %v574 = vunpack.c.l.bf16 %v510
  %v575 = vunpack.c.l.bf16 %v511
  %v576 = vunpack.c.l.bf16 %v512
  %v577 = vunpack.c.l.bf16 %v513
  %v578 = vunpack.c.l.bf16 %v514
  %v579 = vunpack.c.l.bf16 %v515
  %v580 = vunpack.c.l.bf16 %v516
  %v581 = vunpack.c.l.bf16 %v517
  %v582 = vunpack.c.l.bf16 %v518
  %v583 = vunpack.c.l.bf16 %v519
  %v584 = vunpack.c.l.bf16 %v520
  %v585 = vunpack.c.l.bf16 %v521
  %v586 = vunpack.c.l.bf16 %v522
  %v587 = vunpack.c.l.bf16 %v523
  %v588 = vunpack.c.l.bf16 %v524
  %v589 = vunpack.c.l.bf16 %v525
  %v590 = vunpack.c.l.bf16 %v526
  %v591 = vunpack.c.l.bf16 %v527
  %v592 = vunpack.c.l.bf16 %v528
  %v593 = vunpack.c.l.bf16 %v529
  %v594 = vunpack.c.l.bf16 %v530
  %v595 = vunpack.c.l.bf16 %v531
  %v596 = vunpack.c.l.bf16 %v532
  %v597 = vunpack.c.l.bf16 %v533
  %v598 = vunpack.c.l.bf16 %v534
  %v599 = vunpack.c.l.bf16 %v535
  %v600 = vunpack.c.l.bf16 %v536
  %v601 = vunpack.c.l.bf16 %v537
  %v602 = vunpack.c.l.bf16 %v538
  %v603 = vunpack.c.l.bf16 %v539
  %v604 = vunpack.c.l.bf16 %v540
  %v605 = vunpack.c.l.bf16 %v541
  %v606 = vunpack.c.l.bf16 %v542
  %v607 = vunpack.c.l.bf16 %v543
  %v608 = vunpack.c.l.bf16 %v544
  %v609 = vunpack.c.l.bf16 %v545
  %v610 = vunpack.c.l.bf16 %v546
  %v611 = vunpack.c.l.bf16 %v547
  %v612 = vunpack.c.l.bf16 %v548
  %v613 = vunpack.c.l.bf16 %v549
  %v614 = vunpack.c.l.bf16 %v550
  %v615 = vunpack.c.l.bf16 %v551
  %v616 = vunpack.c.l.bf16 %v552
  %v617 = vunpack.c.l.bf16 %v553
  %v618 = vunpack.c.l.bf16 %v554
  %v619 = vunpack.c.l.bf16 %v555
  %v620 = vunpack.c.l.bf16 %v556
  %v621 = vunpack.c.l.bf16 %v557
  %v622 = vunpack.c.l.bf16 %v558
  %v623 = vunpack.c.l.bf16 %v559
  %v624 = vunpack.c.l.bf16 %v560
  %v625 = vunpack.c.l.bf16 %v561
  %v626 = vunpack.c.l.bf16 %v562
  %v627 = vunpack.c.l.bf16 %v563
  %v628 = vunpack.c.l.bf16 %v564
  %v629 = vunpack.c.l.bf16 %v565
  %630 = vst [vmem:[%s2] sm:$0xf] %v502
  %631 = vst [vmem:[%s2 + $0x4] sm:$0xf] %v503
  %632 = vst [vmem:[%s2 + $0x8] sm:$0xf] %v504
  %633 = vst [vmem:[%s2 + $0xc] sm:$0xf] %v505
  %634 = vst [vmem:[%s2 + $0x10] sm:$0xf] %v506
  %635 = vst [vmem:[%s2 + $0x14] sm:$0xf] %v507
  %636 = vst [vmem:[%s2 + $0x18] sm:$0xf] %v508
  %637 = vst [vmem:[%s2 + $0x1c] sm:$0xf] %v509
  %638 = vst [vmem:[%s2 + $0x20] sm:$0xf] %v510
  %639 = vst [vmem:[%s2 + $0x24] sm:$0xf] %v511
  %640 = vst [vmem:[%s2 + $0x28] sm:$0xf] %v512
  %641 = vst [vmem:[%s2 + $0x2c] sm:$0xf] %v513
  %642 = vst [vmem:[%s2 + $0x30] sm:$0xf] %v514
  %643 = vst [vmem:[%s2 + $0x34] sm:$0xf] %v515
  %644 = vst [vmem:[%s2 + $0x38] sm:$0xf] %v516
  %645 = vst [vmem:[%s2 + $0x3c] sm:$0xf] %v517
  %646 = vst [vmem:[%s2 + $0x40] sm:$0xf] %v518
  %647 = vst [vmem:[%s2 + $0x44] sm:$0xf] %v519
  %648 = vst [vmem:[%s2 + $0x48] sm:$0xf] %v520
  %649 = vst [vmem:[%s2 + $0x4c] sm:$0xf] %v521
  %650 = vst [vmem:[%s2 + $0x50] sm:$0xf] %v522
  %651 = vst [vmem:[%s2 + $0x54] sm:$0xf] %v523
  %652 = vst [vmem:[%s2 + $0x58] sm:$0xf] %v524
  %653 = vst [vmem:[%s2 + $0x5c] sm:$0xf] %v525
  %654 = vst [vmem:[%s2 + $0x60] sm:$0xf] %v526
  %655 = vst [vmem:[%s2 + $0x64] sm:$0xf] %v527
  %656 = vst [vmem:[%s2 + $0x68] sm:$0xf] %v528
  %657 = vst [vmem:[%s2 + $0x6c] sm:$0xf] %v529
  %658 = vst [vmem:[%s2 + $0x70] sm:$0xf] %v530
  %659 = vst [vmem:[%s2 + $0x74] sm:$0xf] %v531
  %660 = vst [vmem:[%s2 + $0x78] sm:$0xf] %v532
  %661 = vst [vmem:[%s2 + $0x7c] sm:$0xf] %v533
  %662 = vst [vmem:[%s2 + $0x80] sm:$0xf] %v534
  %663 = vst [vmem:[%s2 + $0x84] sm:$0xf] %v535
  %664 = vst [vmem:[%s2 + $0x88] sm:$0xf] %v536
  %665 = vst [vmem:[%s2 + $0x8c] sm:$0xf] %v537
  %666 = vst [vmem:[%s2 + $0x90] sm:$0xf] %v538
  %667 = vst [vmem:[%s2 + $0x94] sm:$0xf] %v539
  %668 = vst [vmem:[%s2 + $0x98] sm:$0xf] %v540
  %669 = vst [vmem:[%s2 + $0x9c] sm:$0xf] %v541
  %670 = vst [vmem:[%s2 + $0xa0] sm:$0xf] %v542
  %671 = vst [vmem:[%s2 + $0xa4] sm:$0xf] %v543
  %672 = vst [vmem:[%s2 + $0xa8] sm:$0xf] %v544
  %673 = vst [vmem:[%s2 + $0xac] sm:$0xf] %v545
  %674 = vst [vmem:[%s2 + $0xb0] sm:$0xf] %v546
  %675 = vst [vmem:[%s2 + $0xb4] sm:$0xf] %v547
  %676 = vst [vmem:[%s2 + $0xb8] sm:$0xf] %v548
  %677 = vst [vmem:[%s2 + $0xbc] sm:$0xf] %v549
  %678 = vst [vmem:[%s2 + $0xc0] sm:$0xf] %v550
  %679 = vst [vmem:[%s2 + $0xc4] sm:$0xf] %v551
  %680 = vst [vmem:[%s2 + $0xc8] sm:$0xf] %v552
  %681 = vst [vmem:[%s2 + $0xcc] sm:$0xf] %v553
  %682 = vst [vmem:[%s2 + $0xd0] sm:$0xf] %v554
  %683 = vst [vmem:[%s2 + $0xd4] sm:$0xf] %v555
  %684 = vst [vmem:[%s2 + $0xd8] sm:$0xf] %v556
  %685 = vst [vmem:[%s2 + $0xdc] sm:$0xf] %v557
  %686 = vst [vmem:[%s2 + $0xe0] sm:$0xf] %v558
  %687 = vst [vmem:[%s2 + $0xe4] sm:$0xf] %v559
  %688 = vst [vmem:[%s2 + $0xe8] sm:$0xf] %v560
  %689 = vst [vmem:[%s2 + $0xec] sm:$0xf] %v561
  %690 = vst [vmem:[%s2 + $0xf0] sm:$0xf] %v562
  %691 = vst [vmem:[%s2 + $0xf4] sm:$0xf] %v563
  %692 = vst [vmem:[%s2 + $0xf8] sm:$0xf] %v564
  %693 = vst [vmem:[%s2 + $0xfc] sm:$0xf] %v565
  %v694 = vadd.f32 %v566, %v567
  %v695 = vadd.f32 %v694, %v568
  %v696 = vadd.f32 %v695, %v569
  %v697 = vadd.f32 %v696, %v570
  %v698 = vadd.f32 %v697, %v571
  %v699 = vadd.f32 %v698, %v572
  %v700 = vadd.f32 %v699, %v573
  %v701 = vadd.f32 %v700, %v574
  %v702 = vadd.f32 %v701, %v575
  %v703 = vadd.f32 %v702, %v576
  %v704 = vadd.f32 %v703, %v577
  %v705 = vadd.f32 %v704, %v578
  %v706 = vadd.f32 %v705, %v579
  %v707 = vadd.f32 %v706, %v580
  %v708 = vadd.f32 %v707, %v581
  %v709 = vadd.f32 %v708, %v582
  %v710 = vadd.f32 %v709, %v583
  %v711 = vadd.f32 %v710, %v584
  %v712 = vadd.f32 %v711, %v585
  %v713 = vadd.f32 %v712, %v586
  %v714 = vadd.f32 %v713, %v587
  %v715 = vadd.f32 %v714, %v588
  %v716 = vadd.f32 %v715, %v589
  %v717 = vadd.f32 %v716, %v590
  %v718 = vadd.f32 %v717, %v591
  %v719 = vadd.f32 %v718, %v592
  %v720 = vadd.f32 %v719, %v593
  %v721 = vadd.f32 %v720, %v594
  %v722 = vadd.f32 %v721, %v595
  %v723 = vadd.f32 %v722, %v596
  %v724 = vadd.f32 %v723, %v597
  %v725 = vadd.f32 %v724, %v598
  %v726 = vadd.f32 %v725, %v599
  %v727 = vadd.f32 %v726, %v600
  %v728 = vadd.f32 %v727, %v601
  %v729 = vadd.f32 %v728, %v602
  %v730 = vadd.f32 %v729, %v603
  %v731 = vadd.f32 %v730, %v604
  %v732 = vadd.f32 %v731, %v605
  %v733 = vadd.f32 %v732, %v606
  %v734 = vadd.f32 %v733, %v607
  %v735 = vadd.f32 %v734, %v608
  %v736 = vadd.f32 %v735, %v609
  %v737 = vadd.f32 %v736, %v610
  %v738 = vadd.f32 %v737, %v611
  %v739 = vadd.f32 %v738, %v612
  %v740 = vadd.f32 %v739, %v613
  %v741 = vadd.f32 %v740, %v614
  %v742 = vadd.f32 %v741, %v615
  %v743 = vadd.f32 %v742, %v616
  %v744 = vadd.f32 %v743, %v617
  %v745 = vadd.f32 %v744, %v618
  %v746 = vadd.f32 %v745, %v619
  %v747 = vadd.f32 %v746, %v620
  %v748 = vadd.f32 %v747, %v621
  %v749 = vadd.f32 %v748, %v622
  %v750 = vadd.f32 %v749, %v623
  %v751 = vadd.f32 %v750, %v624
  %v752 = vadd.f32 %v751, %v625
  %v753 = vadd.f32 %v752, %v626
  %v754 = vadd.f32 %v753, %v627
  %v755 = vadd.f32 %v754, %v628
  %v756 = vadd.f32 %v755, %v629
  %v757 = vrot.slane %v756, 4
  %v758 = vadd.f32 %v756, %v757
  %v759 = vrot.slane %v758, 2
  %v760 = vadd.f32 %v758, %v759
  %v761 = vrot.slane %v760, 1
  %v762 = vadd.f32 %v760, %v761
  %v763 = vmul.f32 %v566, %v566
  %v764 = vmul.f32 %v567, %v567
  %v765 = vmul.f32 %v568, %v568
  %v766 = vmul.f32 %v569, %v569
  %v767 = vmul.f32 %v570, %v570
  %v768 = vmul.f32 %v571, %v571
  %v769 = vmul.f32 %v572, %v572
  %v770 = vmul.f32 %v573, %v573
  %v771 = vmul.f32 %v574, %v574
  %v772 = vmul.f32 %v575, %v575
  %v773 = vmul.f32 %v576, %v576
  %v774 = vmul.f32 %v577, %v577
  %v775 = vmul.f32 %v578, %v578
  %v776 = vmul.f32 %v579, %v579
  %v777 = vmul.f32 %v580, %v580
  %v778 = vmul.f32 %v581, %v581
  %v779 = vmul.f32 %v582, %v582
  %v780 = vmul.f32 %v583, %v583
  %v781 = vmul.f32 %v584, %v584
  %v782 = vmul.f32 %v585, %v585
  %v783 = vmul.f32 %v586, %v586
  %v784 = vmul.f32 %v587, %v587
  %v785 = vmul.f32 %v588, %v588
  %v786 = vmul.f32 %v589, %v589
  %v787 = vmul.f32 %v590, %v590
  %v788 = vmul.f32 %v591, %v591
  %v789 = vmul.f32 %v592, %v592
  %v790 = vmul.f32 %v593, %v593
  %v791 = vmul.f32 %v594, %v594
  %v792 = vmul.f32 %v595, %v595
  %v793 = vmul.f32 %v596, %v596
  %v794 = vmul.f32 %v597, %v597
  %v795 = vmul.f32 %v598, %v598
  %v796 = vmul.f32 %v599, %v599
  %v797 = vmul.f32 %v600, %v600
  %v798 = vmul.f32 %v601, %v601
  %v799 = vmul.f32 %v602, %v602
  %v800 = vmul.f32 %v603, %v603
  %v801 = vmul.f32 %v604, %v604
  %v802 = vmul.f32 %v605, %v605
  %v803 = vmul.f32 %v606, %v606
  %v804 = vmul.f32 %v607, %v607
  %v805 = vmul.f32 %v608, %v608
  %v806 = vmul.f32 %v609, %v609
  %v807 = vmul.f32 %v610, %v610
  %v808 = vmul.f32 %v611, %v611
  %v809 = vmul.f32 %v612, %v612
  %v810 = vmul.f32 %v613, %v613
  %v811 = vmul.f32 %v614, %v614
  %v812 = vmul.f32 %v615, %v615
  %v813 = vmul.f32 %v616, %v616
  %v814 = vmul.f32 %v617, %v617
  %v815 = vmul.f32 %v618, %v618
  %v816 = vmul.f32 %v619, %v619
  %v817 = vmul.f32 %v620, %v620
  %v818 = vmul.f32 %v621, %v621
  %v819 = vmul.f32 %v622, %v622
  %v820 = vmul.f32 %v623, %v623
  %v821 = vmul.f32 %v624, %v624
  %v822 = vmul.f32 %v625, %v625
  %v823 = vmul.f32 %v626, %v626
  %v824 = vmul.f32 %v627, %v627
  %v825 = vmul.f32 %v628, %v628
  %v826 = vmul.f32 %v629, %v629
  %v827 = vadd.f32 %v763, %v764
  %v828 = vadd.f32 %v827, %v765
  %v829 = vadd.f32 %v828, %v766
  %v830 = vadd.f32 %v829, %v767
  %v831 = vadd.f32 %v830, %v768
  %v832 = vadd.f32 %v831, %v769
  %v833 = vadd.f32 %v832, %v770
  %v834 = vadd.f32 %v833, %v771
  %v835 = vadd.f32 %v834, %v772
  %v836 = vadd.f32 %v835, %v773
  %v837 = vadd.f32 %v836, %v774
  %v838 = vadd.f32 %v837, %v775
  %v839 = vadd.f32 %v838, %v776
  %v840 = vadd.f32 %v839, %v777
  %v841 = vadd.f32 %v840, %v778
  %v842 = vadd.f32 %v841, %v779
  %v843 = vadd.f32 %v842, %v780
  %v844 = vadd.f32 %v843, %v781
  %v845 = vadd.f32 %v844, %v782
  %v846 = vadd.f32 %v845, %v783
  %v847 = vadd.f32 %v846, %v784
  %v848 = vadd.f32 %v847, %v785
  %v849 = vadd.f32 %v848, %v786
  %v850 = vadd.f32 %v849, %v787
  %v851 = vadd.f32 %v850, %v788
  %v852 = vadd.f32 %v851, %v789
  %v853 = vadd.f32 %v852, %v790
  %v854 = vadd.f32 %v853, %v791
  %v855 = vadd.f32 %v854, %v792
  %v856 = vadd.f32 %v855, %v793
  %v857 = vadd.f32 %v856, %v794
  %v858 = vadd.f32 %v857, %v795
  %v859 = vadd.f32 %v858, %v796
  %v860 = vadd.f32 %v859, %v797
  %v861 = vadd.f32 %v860, %v798
  %v862 = vadd.f32 %v861, %v799
  %v863 = vadd.f32 %v862, %v800
  %v864 = vadd.f32 %v863, %v801
  %v865 = vadd.f32 %v864, %v802
  %v866 = vadd.f32 %v865, %v803
  %v867 = vadd.f32 %v866, %v804
  %v868 = vadd.f32 %v867, %v805
  %v869 = vadd.f32 %v868, %v806
  %v870 = vadd.f32 %v869, %v807
  %v871 = vadd.f32 %v870, %v808
  %v872 = vadd.f32 %v871, %v809
  %v873 = vadd.f32 %v872, %v810
  %v874 = vadd.f32 %v873, %v811
  %v875 = vadd.f32 %v874, %v812
  %v876 = vadd.f32 %v875, %v813
  %v877 = vadd.f32 %v876, %v814
  %v878 = vadd.f32 %v877, %v815
  %v879 = vadd.f32 %v878, %v816
  %v880 = vadd.f32 %v879, %v817
  %v881 = vadd.f32 %v880, %v818
  %v882 = vadd.f32 %v881, %v819
  %v883 = vadd.f32 %v882, %v820
  %v884 = vadd.f32 %v883, %v821
  %v885 = vadd.f32 %v884, %v822
  %v886 = vadd.f32 %v885, %v823
  %v887 = vadd.f32 %v886, %v824
  %v888 = vadd.f32 %v887, %v825
  %v889 = vadd.f32 %v888, %v826
  %v890 = vrot.slane %v889, 4
  %v891 = vadd.f32 %v889, %v890
  %v892 = vrot.slane %v891, 2
  %v893 = vadd.f32 %v891, %v892
  %v894 = vrot.slane %v893, 1
  %v895 = vadd.f32 %v893, %v894
  %vm896 = vcmask 1040384
  %v897 = vsel %vm896, %v762, %v895
  %898 = vst [vmem:[%s3] sm:$0x3] %v897
  // Predicated region
  $region10: #{res_bottleneck_block.5} parent=0 // pred_check
    _
  $region11: #{res_bottleneck_block.5} parent=0 // pred_check_branch
    %900 = sbr.rel (0) target = $region13
  $region12: #{res_bottleneck_block.5} parent=0 // pred_region
    _
  $region13: #{res_bottleneck_block.5} parent=0 // pred_fallthru
    _
  // Predicated region
  $region14: #{res_bottleneck_block.5} parent=0 // pred_check
    _
  $region15: #{res_bottleneck_block.5} parent=0 // pred_check_branch
    %902 = sbr.rel (0) target = $region17
  $region16: #{res_bottleneck_block.5} parent=0 // pred_region
    _
  $region17: #{res_bottleneck_block.5} parent=0 // pred_fallthru
    _
  // Predicated region
  $region18: #{res_bottleneck_block.5} parent=0 // pred_check
    _
  $region19: #{res_bottleneck_block.5} parent=0 // pred_check_branch
    %904 = sbr.rel (0) target = $region21
  $region20: #{res_bottleneck_block.5} parent=0 // pred_region
    _
  $region21: #{res_bottleneck_block.5} parent=0 // pred_fallthru
    _
  // Predicated region
  $region22: #{res_bottleneck_block.5} parent=0 // pred_check
    _
  $region23: #{res_bottleneck_block.5} parent=0 // pred_check_branch
    %906 = sbr.rel (0) target = $region25
  $region24: #{res_bottleneck_block.5} parent=0 // pred_region
    _
  $region25: #{res_bottleneck_block.5} parent=0 // pred_fallthru
    _

// kernel: res_bottleneck_block.8
$region0: #{res_bottleneck_block.8}
  #allocation0 [shape = 'u32[]', space=smem, size = 0x4, offset = 0x4, fixed_abs, tag = 'smem constant byte address 0x4 - core index']
  #allocation1 [shape = 'u32[72,128]{1,0:T(1,128)}', space=vmem, size = 0x9000, scoped, tag = 'internal scratch']
  %s0 = inlined_call_operand.vmem [shape: bf16[128,128], index: 0, kind: input, shape index: {}]
  %s1 = inlined_call_operand.vmem [shape: f32[1,128], index: 1, kind: input, shape index: {}]
  %s2 = inlined_call_operand.vmem [shape: f32[1,128], index: 2, kind: input, shape index: {}]
  %s3 = inlined_call_operand.vmem [shape: bf16[128,128], index: 3, kind: input, shape index: {}]
  %s4 = inlined_call_operand.vmem [shape: bf16[128,128], index: 4, kind: output, shape index: {0}]
  %s5 = inlined_call_operand.vmem [shape: f32[1,2,128], index: 5, kind: output, shape index: {1}]
  %6 = xla_tuple %s4, %s5
  %s7 = sld [smem:[#allocation0]]
  $region34: #{res_bottleneck_block.8} parent=0
    _
  %s9 = ssub.s32 1, %s7
  %s10 = scalar_select 0, %s9, %s7
  // Predicated region
  $region2: #{res_bottleneck_block.8} parent=0 // pred_check
    _
  $region3: #{res_bottleneck_block.8} parent=0 // pred_check_branch
    %12 = sbr.rel (0) target = $region5
  $region4: #{res_bottleneck_block.8} parent=0 // pred_region
    _
  $region5: #{res_bottleneck_block.8} parent=0 // pred_fallthru
    _
  // Predicated region
  $region6: #{res_bottleneck_block.8} parent=0 // pred_check
    _
  $region7: #{res_bottleneck_block.8} parent=0 // pred_check_branch
    %14 = sbr.rel (0) target = $region9
  $region8: #{res_bottleneck_block.8} parent=0 // pred_region
    _
  $region9: #{res_bottleneck_block.8} parent=0 // pred_fallthru
    _
  // Predicated region
  $region10: #{res_bottleneck_block.8} parent=0 // pred_check
    _
  $region11: #{res_bottleneck_block.8} parent=0 // pred_check_branch
    %16 = sbr.rel (0) target = $region13
  $region12: #{res_bottleneck_block.8} parent=0 // pred_region
    _
  $region13: #{res_bottleneck_block.8} parent=0 // pred_fallthru
    _
  // Predicated region
  $region14: #{res_bottleneck_block.8} parent=0 // pred_check
    _
  $region15: #{res_bottleneck_block.8} parent=0 // pred_check_branch
    %18 = sbr.rel (0) target = $region17
  $region16: #{res_bottleneck_block.8} parent=0 // pred_region
    _
  $region17: #{res_bottleneck_block.8} parent=0 // pred_fallthru
    _
  %v19 = vld [vmem:[%s0] sm:$0xf]
  %v20 = vld [vmem:[%s0 + $0x4] sm:$0xf]
  %v21 = vld [vmem:[%s0 + $0x8] sm:$0xf]
  %v22 = vld [vmem:[%s0 + $0xc] sm:$0xf]
  %v23 = vld [vmem:[%s0 + $0x10] sm:$0xf]
  %v24 = vld [vmem:[%s0 + $0x14] sm:$0xf]
  %v25 = vld [vmem:[%s0 + $0x18] sm:$0xf]
  %v26 = vld [vmem:[%s0 + $0x1c] sm:$0xf]
  %v27 = vld [vmem:[%s0 + $0x20] sm:$0xf]
  %v28 = vld [vmem:[%s0 + $0x24] sm:$0xf]
  %v29 = vld [vmem:[%s0 + $0x28] sm:$0xf]
  %v30 = vld [vmem:[%s0 + $0x2c] sm:$0xf]
  %v31 = vld [vmem:[%s0 + $0x30] sm:$0xf]
  %v32 = vld [vmem:[%s0 + $0x34] sm:$0xf]
  %v33 = vld [vmem:[%s0 + $0x38] sm:$0xf]
  %v34 = vld [vmem:[%s0 + $0x3c] sm:$0xf]
  %v35 = vunpack.c.l.bf16 %v19
  %v36 = vunpack.c.l.bf16 %v20
  %v37 = vunpack.c.l.bf16 %v21
  %v38 = vunpack.c.l.bf16 %v22
  %v39 = vunpack.c.l.bf16 %v23
  %v40 = vunpack.c.l.bf16 %v24
  %v41 = vunpack.c.l.bf16 %v25
  %v42 = vunpack.c.l.bf16 %v26
  %v43 = vunpack.c.l.bf16 %v27
  %v44 = vunpack.c.l.bf16 %v28
  %v45 = vunpack.c.l.bf16 %v29
  %v46 = vunpack.c.l.bf16 %v30
  %v47 = vunpack.c.l.bf16 %v31
  %v48 = vunpack.c.l.bf16 %v32
  %v49 = vunpack.c.l.bf16 %v33
  %v50 = vunpack.c.l.bf16 %v34
  %v51 = vld [vmem:[%s1] sm:$0x1]
  %v53 = vperm.slane %v51, 0
  %v55 = vmul.f32 %v35, %v53
  %v56 = vmul.f32 %v36, %v53
  %v57 = vmul.f32 %v37, %v53
  %v58 = vmul.f32 %v38, %v53
  %v59 = vmul.f32 %v39, %v53
  %v60 = vmul.f32 %v40, %v53
  %v61 = vmul.f32 %v41, %v53
  %v62 = vmul.f32 %v42, %v53
  %v63 = vmul.f32 %v43, %v53
  %v64 = vmul.f32 %v44, %v53
  %v65 = vmul.f32 %v45, %v53
  %v66 = vmul.f32 %v46, %v53
  %v67 = vmul.f32 %v47, %v53
  %v68 = vmul.f32 %v48, %v53
  %v69 = vmul.f32 %v49, %v53
  %v70 = vmul.f32 %v50, %v53
  %v71 = vld [vmem:[%s2] sm:$0x1]
  %v73 = vperm.slane %v71, 0
  %v75 = vadd.f32 %v55, %v73
  %v76 = vadd.f32 %v56, %v73
  %v77 = vadd.f32 %v57, %v73
  %v78 = vadd.f32 %v58, %v73
  %v79 = vadd.f32 %v59, %v73
  %v80 = vadd.f32 %v60, %v73
  %v81 = vadd.f32 %v61, %v73
  %v82 = vadd.f32 %v62, %v73
  %v83 = vadd.f32 %v63, %v73
  %v84 = vadd.f32 %v64, %v73
  %v85 = vadd.f32 %v65, %v73
  %v86 = vadd.f32 %v66, %v73
  %v87 = vadd.f32 %v67, %v73
  %v88 = vadd.f32 %v68, %v73
  %v89 = vadd.f32 %v69, %v73
  %v90 = vadd.f32 %v70, %v73
  %v91 = vmax.f32 %v75, 0.0
  %v92 = vmax.f32 %v76, 0.0
  %v93 = vmax.f32 %v77, 0.0
  %v94 = vmax.f32 %v78, 0.0
  %v95 = vmax.f32 %v79, 0.0
  %v96 = vmax.f32 %v80, 0.0
  %v97 = vmax.f32 %v81, 0.0
  %v98 = vmax.f32 %v82, 0.0
  %v99 = vmax.f32 %v83, 0.0
  %v100 = vmax.f32 %v84, 0.0
  %v101 = vmax.f32 %v85, 0.0
  %v102 = vmax.f32 %v86, 0.0
  %v103 = vmax.f32 %v87, 0.0
  %v104 = vmax.f32 %v88, 0.0
  %v105 = vmax.f32 %v89, 0.0
  %v106 = vmax.f32 %v90, 0.0
  %v107 = vpack.c.bf16 %v92, %v91
  %v108 = vpack.c.bf16 %v94, %v93
  %v109 = vpack.c.bf16 %v96, %v95
  %v110 = vpack.c.bf16 %v98, %v97
  %v111 = vpack.c.bf16 %v100, %v99
  %v112 = vpack.c.bf16 %v102, %v101
  %v113 = vpack.c.bf16 %v104, %v103
  %v114 = vpack.c.bf16 %v106, %v105
  %v115 = vld [vmem:[%s3] sm:$0xf]
  %v116 = vld [vmem:[%s3 + $0x4] sm:$0xf]
  %v117 = vld [vmem:[%s3 + $0x8] sm:$0xf]
  %v118 = vld [vmem:[%s3 + $0xc] sm:$0xf]
  %v119 = vld [vmem:[%s3 + $0x10] sm:$0xf]
  %v120 = vld [vmem:[%s3 + $0x14] sm:$0xf]
  %v121 = vld [vmem:[%s3 + $0x18] sm:$0xf]
  %v122 = vld [vmem:[%s3 + $0x1c] sm:$0xf]
  %v123 = vld [vmem:[%s3 + $0x20] sm:$0xf]
  %v124 = vld [vmem:[%s3 + $0x24] sm:$0xf]
  %v125 = vld [vmem:[%s3 + $0x28] sm:$0xf]
  %v126 = vld [vmem:[%s3 + $0x2c] sm:$0xf]
  %v127 = vld [vmem:[%s3 + $0x30] sm:$0xf]
  %v128 = vld [vmem:[%s3 + $0x34] sm:$0xf]
  %v129 = vld [vmem:[%s3 + $0x38] sm:$0xf]
  %v130 = vld [vmem:[%s3 + $0x3c] sm:$0xf]
  %v147 = vunpack.c.l.b16 %v115
  %v148 = vunpack.c.l.b16 %v116
  %v149 = vunpack.c.l.b16 %v117
  %v150 = vunpack.c.l.b16 %v118
  %v151 = vunpack.c.l.b16 %v119
  %v152 = vunpack.c.l.b16 %v120
  %v153 = vunpack.c.l.b16 %v121
  %v154 = vunpack.c.l.b16 %v122
  %v155 = vunpack.c.l.b16 %v123
  %v156 = vunpack.c.l.b16 %v124
  %v157 = vunpack.c.l.b16 %v125
  %v158 = vunpack.c.l.b16 %v126
  %v159 = vunpack.c.l.b16 %v127
  %v160 = vunpack.c.l.b16 %v128
  %v161 = vunpack.c.l.b16 %v129
  %v162 = vunpack.c.l.b16 %v130
  %v163 = vpack.c.b16 %v148, %v147
  %v164 = vpack.c.b16 %v150, %v149
  %v165 = vpack.c.b16 %v152, %v151
  %v166 = vpack.c.b16 %v154, %v153
  %v167 = vpack.c.b16 %v156, %v155
  %v168 = vpack.c.b16 %v158, %v157
  %v169 = vpack.c.b16 %v160, %v159
  %v170 = vpack.c.b16 %v162, %v161
  %179 = vmatpush.bf16.msra.mxu0 %v170
  %180 = vmatpush.bf16.msra.mxu0 %v169
  %181 = vmatpush.bf16.msra.mxu0 %v168
  %182 = vmatpush.bf16.msra.mxu0 %v167
  %183 = vmatpush.bf16.msra.mxu0 %v166
  %184 = vmatpush.bf16.msra.mxu0 %v165
  %185 = vmatpush.bf16.msra.mxu0 %v164
  %186 = vmatpush.bf16.msra.mxu0 %v163
  %187 = vmatmul.bf16.gmra.mxu0 %v107
  %v188 = vpop.f32.mrf.mxu0
  %v189 = vadd.f32 0.0, %v188
  %v190 = vpop.f32.mrf.mxu0
  %v191 = vadd.f32 0.0, %v190
  %192 = vmatmul.bf16.gmra.mxu0 %v108
  %v193 = vpop.f32.mrf.mxu0
  %v194 = vadd.f32 0.0, %v193
  %v195 = vpop.f32.mrf.mxu0
  %v196 = vadd.f32 0.0, %v195
  %197 = vmatmul.bf16.gmra.mxu0 %v109
  %v198 = vpop.f32.mrf.mxu0
  %v199 = vadd.f32 0.0, %v198
  %v200 = vpop.f32.mrf.mxu0
  %v201 = vadd.f32 0.0, %v200
  %202 = vmatmul.bf16.gmra.mxu0 %v110
  %v203 = vpop.f32.mrf.mxu0
  %v204 = vadd.f32 0.0, %v203
  %v205 = vpop.f32.mrf.mxu0
  %v206 = vadd.f32 0.0, %v205
  %207 = vmatmul.bf16.gmra.mxu0 %v111
  %v208 = vpop.f32.mrf.mxu0
  %v209 = vadd.f32 0.0, %v208
  %v210 = vpop.f32.mrf.mxu0
  %v211 = vadd.f32 0.0, %v210
  %212 = vmatmul.bf16.gmra.mxu0 %v112
  %v213 = vpop.f32.mrf.mxu0
  %v214 = vadd.f32 0.0, %v213
  %v215 = vpop.f32.mrf.mxu0
  %v216 = vadd.f32 0.0, %v215
  %217 = vmatmul.bf16.gmra.mxu0 %v113
  %v218 = vpop.f32.mrf.mxu0
  %v219 = vadd.f32 0.0, %v218
  %v220 = vpop.f32.mrf.mxu0
  %v221 = vadd.f32 0.0, %v220
  %222 = vmatmul.bf16.gmra.mxu0 %v114
  %v223 = vpop.f32.mrf.mxu0
  %v224 = vadd.f32 0.0, %v223
  %v225 = vpop.f32.mrf.mxu0
  %v226 = vadd.f32 0.0, %v225
  %227 = vdwg.mxu0
  %v228 = vpack.c.bf16 %v189, %v189
  %v229 = vpack.c.bf16 %v191, %v191
  %v230 = vpack.c.bf16 %v194, %v194
  %v231 = vpack.c.bf16 %v196, %v196
  %v232 = vpack.c.bf16 %v199, %v199
  %v233 = vpack.c.bf16 %v201, %v201
  %v234 = vpack.c.bf16 %v204, %v204
  %v235 = vpack.c.bf16 %v206, %v206
  %v236 = vpack.c.bf16 %v209, %v209
  %v237 = vpack.c.bf16 %v211, %v211
  %v238 = vpack.c.bf16 %v214, %v214
  %v239 = vpack.c.bf16 %v216, %v216
  %v240 = vpack.c.bf16 %v219, %v219
  %v241 = vpack.c.bf16 %v221, %v221
  %v242 = vpack.c.bf16 %v224, %v224
  %v243 = vpack.c.bf16 %v226, %v226
  %v244 = vunpack.c.l.bf16 %v228
  %v245 = vunpack.c.l.bf16 %v229
  %v246 = vunpack.c.l.bf16 %v230
  %v247 = vunpack.c.l.bf16 %v231
  %v248 = vunpack.c.l.bf16 %v232
  %v249 = vunpack.c.l.bf16 %v233
  %v250 = vunpack.c.l.bf16 %v234
  %v251 = vunpack.c.l.bf16 %v235
  %v252 = vunpack.c.l.bf16 %v236
  %v253 = vunpack.c.l.bf16 %v237
  %v254 = vunpack.c.l.bf16 %v238
  %v255 = vunpack.c.l.bf16 %v239
  %v256 = vunpack.c.l.bf16 %v240
  %v257 = vunpack.c.l.bf16 %v241
  %v258 = vunpack.c.l.bf16 %v242
  %v259 = vunpack.c.l.bf16 %v243
  %260 = vst [vmem:[%s4] sm:$0xf] %v228
  %261 = vst [vmem:[%s4 + $0x4] sm:$0xf] %v229
  %262 = vst [vmem:[%s4 + $0x8] sm:$0xf] %v230
  %263 = vst [vmem:[%s4 + $0xc] sm:$0xf] %v231
  %264 = vst [vmem:[%s4 + $0x10] sm:$0xf] %v232
  %265 = vst [vmem:[%s4 + $0x14] sm:$0xf] %v233
  %266 = vst [vmem:[%s4 + $0x18] sm:$0xf] %v234
  %267 = vst [vmem:[%s4 + $0x1c] sm:$0xf] %v235
  %268 = vst [vmem:[%s4 + $0x20] sm:$0xf] %v236
  %269 = vst [vmem:[%s4 + $0x24] sm:$0xf] %v237
  %270 = vst [vmem:[%s4 + $0x28] sm:$0xf] %v238
  %271 = vst [vmem:[%s4 + $0x2c] sm:$0xf] %v239
  %272 = vst [vmem:[%s4 + $0x30] sm:$0xf] %v240
  %273 = vst [vmem:[%s4 + $0x34] sm:$0xf] %v241
  %274 = vst [vmem:[%s4 + $0x38] sm:$0xf] %v242
  %275 = vst [vmem:[%s4 + $0x3c] sm:$0xf] %v243
  %v276 = vadd.f32 %v244, %v245
  %v277 = vadd.f32 %v276, %v246
  %v278 = vadd.f32 %v277, %v247
  %v279 = vadd.f32 %v278, %v248
  %v280 = vadd.f32 %v279, %v249
  %v281 = vadd.f32 %v280, %v250
  %v282 = vadd.f32 %v281, %v251
  %v283 = vadd.f32 %v282, %v252
  %v284 = vadd.f32 %v283, %v253
  %v285 = vadd.f32 %v284, %v254
  %v286 = vadd.f32 %v285, %v255
  %v287 = vadd.f32 %v286, %v256
  %v288 = vadd.f32 %v287, %v257
  %v289 = vadd.f32 %v288, %v258
  %v290 = vadd.f32 %v289, %v259
  %v291 = vrot.slane %v290, 4
  %v292 = vadd.f32 %v290, %v291
  %v293 = vrot.slane %v292, 2
  %v294 = vadd.f32 %v292, %v293
  %v295 = vrot.slane %v294, 1
  %v296 = vadd.f32 %v294, %v295
  %v297 = vmul.f32 %v244, %v244
  %v298 = vmul.f32 %v245, %v245
  %v299 = vmul.f32 %v246, %v246
  %v300 = vmul.f32 %v247, %v247
  %v301 = vmul.f32 %v248, %v248
  %v302 = vmul.f32 %v249, %v249
  %v303 = vmul.f32 %v250, %v250
  %v304 = vmul.f32 %v251, %v251
  %v305 = vmul.f32 %v252, %v252
  %v306 = vmul.f32 %v253, %v253
  %v307 = vmul.f32 %v254, %v254
  %v308 = vmul.f32 %v255, %v255
  %v309 = vmul.f32 %v256, %v256
  %v310 = vmul.f32 %v257, %v257
  %v311 = vmul.f32 %v258, %v258
  %v312 = vmul.f32 %v259, %v259
  %v313 = vadd.f32 %v297, %v298
  %v314 = vadd.f32 %v313, %v299
  %v315 = vadd.f32 %v314, %v300
  %v316 = vadd.f32 %v315, %v301
  %v317 = vadd.f32 %v316, %v302
  %v318 = vadd.f32 %v317, %v303
  %v319 = vadd.f32 %v318, %v304
  %v320 = vadd.f32 %v319, %v305
  %v321 = vadd.f32 %v320, %v306
  %v322 = vadd.f32 %v321, %v307
  %v323 = vadd.f32 %v322, %v308
  %v324 = vadd.f32 %v323, %v309
  %v325 = vadd.f32 %v324, %v310
  %v326 = vadd.f32 %v325, %v311
  %v327 = vadd.f32 %v326, %v312
  %v328 = vrot.slane %v327, 4
  %v329 = vadd.f32 %v327, %v328
  %v330 = vrot.slane %v329, 2
  %v331 = vadd.f32 %v329, %v330
  %v332 = vrot.slane %v331, 1
  %v333 = vadd.f32 %v331, %v332
  %vm334 = vcmask 1040384
  %v335 = vsel %vm334, %v296, %v333
  %336 = vst [vmem:[%s5] sm:$0x3] %v335
  // Predicated region
  $region18: #{res_bottleneck_block.8} parent=0 // pred_check
    _
  $region19: #{res_bottleneck_block.8} parent=0 // pred_check_branch
    %338 = sbr.rel (0) target = $region21
  $region20: #{res_bottleneck_block.8} parent=0 // pred_region
    _
  $region21: #{res_bottleneck_block.8} parent=0 // pred_fallthru
    _
  // Predicated region
  $region22: #{res_bottleneck_block.8} parent=0 // pred_check
    _
  $region23: #{res_bottleneck_block.8} parent=0 // pred_check_branch
    %340 = sbr.rel (0) target = $region25
  $region24: #{res_bottleneck_block.8} parent=0 // pred_region
    _
  $region25: #{res_bottleneck_block.8} parent=0 // pred_fallthru
    _
  // Predicated region
  $region26: #{res_bottleneck_block.8} parent=0 // pred_check
    _
  $region27: #{res_bottleneck_block.8} parent=0 // pred_check_branch
    %342 = sbr.rel (0) target = $region29
  $region28: #{res_bottleneck_block.8} parent=0 // pred_region
    _
  $region29: #{res_bottleneck_block.8} parent=0 // pred_fallthru
    _
  // Predicated region
  $region30: #{res_bottleneck_block.8} parent=0 // pred_check
    _
  $region31: #{res_bottleneck_block.8} parent=0 // pred_check_branch
    %344 = sbr.rel (0) target = $region33
  $region32: #{res_bottleneck_block.8} parent=0 // pred_region
    _
  $region33: #{res_bottleneck_block.8} parent=0 // pred_fallthru
    _

// kernel: res_bottleneck_block.7
$region0: #{res_bottleneck_block.7}
  #allocation0 [shape = 'u32[]', space=smem, size = 0x4, offset = 0x4, fixed_abs, tag = 'smem constant byte address 0x4 - core index']
  #allocation1 [shape = 'u32[72,128]{1,0:T(1,128)}', space=vmem, size = 0x9000, scoped, tag = 'internal scratch']
  %s0 = inlined_call_operand.vmem [shape: bf16[2,18,18,128], index: 0, kind: input, shape index: {}]
  %s1 = inlined_call_operand.vmem [shape: bf16[9,128,128], index: 1, kind: input, shape index: {}]
  %s2 = inlined_call_operand.vmem [shape: bf16[2,64,128], index: 2, kind: output, shape index: {0}]
  %s3 = inlined_call_operand.vmem [shape: f32[2,2,128], index: 3, kind: output, shape index: {1}]
  %4 = xla_tuple %s2, %s3
  %s5 = sld [smem:[#allocation0]]
  $region49: #{res_bottleneck_block.7} parent=0
    _
  %s7 = ssub.s32 1, %s5
  %s8 = scalar_select 0, %s7, %s5
  loop: start=0, step=1, limit=4
  $region2: #{res_bottleneck_block.7} parent=0 // loop_pre_header
    _
  $region3: #{res_bottleneck_block.7} parent=0 // loop_header
    %s10 = sphi 0, %s14
    %p11 = scmp.ge.s32.totalorder %s10, 4
    %s20 = sphi 0, %s22
    %s23 = sphi 0, %s20
    %s24 = sphi 0, %s23
    %s40 = sphi 0, %s24
    %s44 = sphi 0, %s44
    %s46 = sphi 0, %s44
    %s47 = sphi 0, %s46
    %s61 = sphi 0, %s47
    %s67 = sphi 0, %s69
    %s70 = sphi 0, %s67
    %s71 = sphi 0, %s70
    %s87 = sphi 0, %s71
    %s93 = sphi 0, %s95
    %s96 = sphi 0, %s93
    %s97 = sphi 0, %s96
    %s113 = sphi 0, %s97
  $region4: #{res_bottleneck_block.7} parent=0 // loop_header_branch
    %13 = sbr.rel (%p11) target = $region8
  $region5: #{res_bottleneck_block.7} parent=0 // loop_body
    %s15 = ssub.s32 %s10, 1
    %s16 = ssub.s32 %s10, 2
    %s17 = sadd.s32 %s10, 1
    %s18 = ssub.s32 %s10, %s17
    %p19 = scmp.eq.s32.totalorder %s18, 0
    %s21 = sadd.s32 %s20, 1
    %s22 = scalar_select %p19, %s20, %s21
    %p25 = pneg %p19
    %p26 = scmp.eq.s32.totalorder %s10, 1
    %p27 = por %p25, %p26
    %p28 = scmp.ne.s32.totalorder %s20, %s23
    %p29 = scmp.eq.s32.totalorder %s10, 0
    %p30 = por %p28, %p29
    %p31 = scmp.ne.s32.totalorder %s20, %s23
    %p32 = scmp.eq.s32.totalorder %s15, 1
    %p33 = por %p31, %p32
    %p34 = scmp.ne.s32.totalorder %s23, %s24
    %p35 = scmp.eq.s32.totalorder %s15, 0
    %p36 = por %p34, %p35
    %p37 = scmp.ne.s32.totalorder %s23, %s24
    %p38 = scmp.eq.s32.totalorder %s16, 1
    %p39 = por %p37, %p38
    %p41 = scmp.ne.s32.totalorder %s24, %s40
    %p42 = scmp.eq.s32.totalorder %s16, 0
    %p43 = por %p41, %p42
    %s45 = sadd.s32 %s44, 1
    %p48 = scmp.eq.s32.totalorder %s10, 1
    %p49 = scmp.ne.s32.totalorder %s44, %s46
    %p50 = scmp.eq.s32.totalorder %s10, 0
    %p51 = por %p49, %p50
    %p52 = scmp.ne.s32.totalorder %s44, %s46
    %p53 = scmp.eq.s32.totalorder %s15, 1
    %p54 = por %p52, %p53
    %p55 = scmp.ne.s32.totalorder %s46, %s47
    %p56 = scmp.eq.s32.totalorder %s15, 0
    %p57 = por %p55, %p56
    %p58 = scmp.ne.s32.totalorder %s46, %s47
    %p59 = scmp.eq.s32.totalorder %s16, 1
    %p60 = por %p58, %p59
    %p62 = scmp.ne.s32.totalorder %s47, %s61
    %p63 = scmp.eq.s32.totalorder %s16, 0
    %p64 = por %p62, %p63
    %s65 = ssub.s32 %s10, %s17
    %p66 = scmp.eq.s32.totalorder %s65, 0
    %s68 = sadd.s32 %s67, 1
    %s69 = scalar_select %p66, %s67, %s68
    %p72 = pneg %p66
    %p73 = scmp.eq.s32.totalorder %s10, 1
    %p74 = por %p72, %p73
    %p75 = scmp.ne.s32.totalorder %s67, %s70
    %p76 = scmp.eq.s32.totalorder %s10, 0
    %p77 = por %p75, %p76
    %p78 = scmp.ne.s32.totalorder %s67, %s70
    %p79 = scmp.eq.s32.totalorder %s15, 1
    %p80 = por %p78, %p79
    %p81 = scmp.ne.s32.totalorder %s70, %s71
    %p82 = scmp.eq.s32.totalorder %s15, 0
    %p83 = por %p81, %p82
    %p84 = scmp.ne.s32.totalorder %s70, %s71
    %p85 = scmp.eq.s32.totalorder %s16, 1
    %p86 = por %p84, %p85
    %p88 = scmp.ne.s32.totalorder %s71, %s87
    %p89 = scmp.eq.s32.totalorder %s16, 0
    %p90 = por %p88, %p89
    %s91 = ssub.s32 %s10, %s17
    %p92 = scmp.eq.s32.totalorder %s91, 0
    %s94 = sadd.s32 %s93, 1
    %s95 = scalar_select %p92, %s93, %s94
    %p98 = pneg %p92
    %p99 = scmp.eq.s32.totalorder %s10, 1
    %p100 = por %p98, %p99
    %p101 = scmp.ne.s32.totalorder %s93, %s96
    %p102 = scmp.eq.s32.totalorder %s10, 0
    %p103 = por %p101, %p102
    %p104 = scmp.ne.s32.totalorder %s93, %s96
    %p105 = scmp.eq.s32.totalorder %s15, 1
    %p106 = por %p104, %p105
    %p107 = scmp.ne.s32.totalorder %s96, %s97
    %p108 = scmp.eq.s32.totalorder %s15, 0
    %p109 = por %p107, %p108
    %p110 = scmp.ne.s32.totalorder %s96, %s97
    %p111 = scmp.eq.s32.totalorder %s16, 1
    %p112 = por %p110, %p111
    %p114 = scmp.ne.s32.totalorder %s97, %s113
    %p115 = scmp.eq.s32.totalorder %s16, 0
    %p116 = por %p114, %p115
    %p117 = scmp.le.s32.totalorder 1, %s10
    %p118 = scmp.lt.s32.totalorder %s10, 3
    %p119 = pnand %p117, %p118
    %p120 = pneg %p119
    // Predicated region
    $region9: #{res_bottleneck_block.7} parent=5 // pred_check
      _
    $region10: #{res_bottleneck_block.7} parent=5 // pred_check_branch
      %122 = sbr.rel (%p119) target = $region12
    $region11: #{res_bottleneck_block.7} parent=5 // pred_region
      %s123 = ssub.s32 %s10, 1
      // Predicated region
      $region13: #{res_bottleneck_block.7} parent=11 // pred_check
        %p124 = pneg %p57
      $region14: #{res_bottleneck_block.7} parent=11 // pred_check_branch
        %126 = sbr.rel (%p124) target = $region16
      $region15: #{res_bottleneck_block.7} parent=11 // pred_region
        _
      $region16: #{res_bottleneck_block.7} parent=11 // pred_fallthru
        _
    $region12: #{res_bottleneck_block.7} parent=5 // pred_fallthru
      _
    %p127 = scmp.lt.s32.totalorder %s10, 2
    // Predicated region
    $region17: #{res_bottleneck_block.7} parent=5 // pred_check
      %p128 = pneg %p127
    $region18: #{res_bottleneck_block.7} parent=5 // pred_check_branch
      %130 = sbr.rel (%p128) target = $region20
    $region19: #{res_bottleneck_block.7} parent=5 // pred_region
      // Predicated region
      $region21: #{res_bottleneck_block.7} parent=19 // pred_check
        %p131 = pneg %p30
      $region22: #{res_bottleneck_block.7} parent=19 // pred_check_branch
        %133 = sbr.rel (%p131) target = $region24
      $region23: #{res_bottleneck_block.7} parent=19 // pred_region
        %p134 = scmp.lt.s32.totalorder %s10, 1
        %s135 = scalar_select %p134, %s10, 1
        %s136 = smul.addr %s135, 54
        %s137 = smul.addr %s136, 4
        %s138 = scalar_lea.vmem %s0, %s137
      $region24: #{res_bottleneck_block.7} parent=19 // pred_fallthru
        _
    $region20: #{res_bottleneck_block.7} parent=5 // pred_fallthru
      _
    %p139 = scmp.le.s32.totalorder 1, %s10
    %p140 = scmp.lt.s32.totalorder %s10, 3
    %p141 = pnand %p139, %p140
    %p142 = pneg %p141
    // Predicated region
    $region25: #{res_bottleneck_block.7} parent=5 // pred_check
      _
    $region26: #{res_bottleneck_block.7} parent=5 // pred_check_branch
      %144 = sbr.rel (%p141) target = $region28
    $region27: #{res_bottleneck_block.7} parent=5 // pred_region
      %s145 = ssub.s32 %s10, 1
      %p146 = scmp.lt.s32.totalorder %s15, 1
      %s147 = scalar_select %p146, %s15, 1
      %s148 = smul.addr %s147, 54
      %s149 = smul.addr %s148, 4
      %s150 = scalar_lea.vmem %s0, %s149
      %p151 = pneg %p36
      %p152 = pneg %p33
      %p153 = pneg %p57
      %p154 = pneg %p54
      %p155 = pneg %p83
      %p156 = pneg %p80
      %p157 = scmp.lt.s32.totalorder %s15, 1
      %s158 = scalar_select %p157, %s15, 1
      %s159 = smul.addr %s158, 8
      %s160 = smul.addr %s159, 4
      %s161 = scalar_lea.vmem %s2, %s160
      %p162 = pneg %p109
      %p163 = pneg %p106
      %p164 = scmp.lt.s32.totalorder %s15, 1
      %s165 = scalar_select %p164, %s15, 1
      %s166 = smul.addr %s165, 2
      %s167 = scalar_lea.vmem %s3, %s166
      %p168 = scmp.lt.s32.totalorder %s15, 1
      %s169 = scalar_select %p168, %s15, 1
      %s170 = smul.addr %s169, 54
      %s171 = smul.addr %s170, 4
      %s172 = scalar_lea.vmem %s0, %s171
      %p173 = scmp.lt.s32.totalorder %s15, 1
      %s174 = scalar_select %p173, %s15, 1
      %s175 = smul.addr %s174, 8
      %s176 = smul.addr %s175, 4
      %s177 = scalar_lea.vmem %s2, %s176
      %p178 = scmp.lt.s32.totalorder %s15, 1
      %s179 = scalar_select %p178, %s15, 1
      %s180 = smul.addr %s179, 2
      %s181 = scalar_lea.vmem %s3, %s180
      %v182 = vld [vmem:[%s172] sm:$0xf]
      %v183 = vld [vmem:[%s172 + $0xc] sm:$0xf]
      %v184 = vld [vmem:[%s172 + $0x18] sm:$0xf]
      %v185 = vld [vmem:[%s172 + $0x24] sm:$0xf]
      %v186 = vld [vmem:[%s172 + $0x30] sm:$0xf]
      %v187 = vld [vmem:[%s172 + $0x3c] sm:$0xf]
      %v188 = vld [vmem:[%s172 + $0x48] sm:$0xf]
      %v189 = vld [vmem:[%s172 + $0x54] sm:$0xf]
      %v190 = vld [vmem:[%s1] sm:$0xf]
      %v191 = vld [vmem:[%s1 + $0x4] sm:$0xf]
      %v192 = vld [vmem:[%s1 + $0x8] sm:$0xf]
      %v193 = vld [vmem:[%s1 + $0xc] sm:$0xf]
      %v194 = vld [vmem:[%s1 + $0x10] sm:$0xf]
      %v195 = vld [vmem:[%s1 + $0x14] sm:$0xf]
      %v196 = vld [vmem:[%s1 + $0x18] sm:$0xf]
      %v197 = vld [vmem:[%s1 + $0x1c] sm:$0xf]
      %v198 = vld [vmem:[%s1 + $0x20] sm:$0xf]
      %v199 = vld [vmem:[%s1 + $0x24] sm:$0xf]
      %v200 = vld [vmem:[%s1 + $0x28] sm:$0xf]
      %v201 = vld [vmem:[%s1 + $0x2c] sm:$0xf]
      %v202 = vld [vmem:[%s1 + $0x30] sm:$0xf]
      %v203 = vld [vmem:[%s1 + $0x34] sm:$0xf]
      %v204 = vld [vmem:[%s1 + $0x38] sm:$0xf]
      %v205 = vld [vmem:[%s1 + $0x3c] sm:$0xf]
      %v206 = vld [vmem:[%s172 + $0x4] sm:$0xf]
      %v207 = vld [vmem:[%s172 + $0x8] sm:$0x1]
      %v208 = vld [vmem:[%s172 + $0x10] sm:$0xf]
      %v209 = vld [vmem:[%s172 + $0x14] sm:$0x1]
      %v210 = vld [vmem:[%s172 + $0x1c] sm:$0xf]
      %v211 = vld [vmem:[%s172 + $0x20] sm:$0x1]
      %v212 = vld [vmem:[%s172 + $0x28] sm:$0xf]
      %v213 = vld [vmem:[%s172 + $0x2c] sm:$0x1]
      %v214 = vld [vmem:[%s172 + $0x34] sm:$0xf]
      %v215 = vld [vmem:[%s172 + $0x38] sm:$0x1]
      %v216 = vld [vmem:[%s172 + $0x40] sm:$0xf]
      %v217 = vld [vmem:[%s172 + $0x44] sm:$0x1]
      %v218 = vld [vmem:[%s172 + $0x4c] sm:$0xf]
      %v219 = vld [vmem:[%s172 + $0x50] sm:$0x1]
      %v220 = vld [vmem:[%s172 + $0x58] sm:$0xf]
      %v221 = vld [vmem:[%s172 + $0x5c] sm:$0x1]
      %vm222 = vsmask.f32 3328
      %vm223 = vsmask.f32 7440
      %vm224 = vmor %vm222, %vm223
      %v226 = vshrl.u32 %v206, 16
      %v228 = vrot.slane %v226, 4
      %v229 = vshll.u32 %v206, 16
      %v231 = vrot.slane %v229, 5
      %v232 = vor.u32 %v228, %v231
      %v233 = vrot.slane %v232, 4
      %v235 = vshll.u32 %v207, 16
      %v237 = vrot.slane %v235, 5
      %v238 = vsel %vm224, %v233, %v237
      %v240 = vshrl.u32 %v208, 16
      %v242 = vrot.slane %v240, 4
      %v243 = vshll.u32 %v208, 16
      %v245 = vrot.slane %v243, 5
      %v246 = vor.u32 %v242, %v245
      %v247 = vrot.slane %v246, 4
      %v249 = vshll.u32 %v209, 16
      %v251 = vrot.slane %v249, 5
      %v252 = vsel %vm224, %v247, %v251
      %v254 = vshrl.u32 %v210, 16
      %v256 = vrot.slane %v254, 4
      %v257 = vshll.u32 %v210, 16
      %v259 = vrot.slane %v257, 5
      %v260 = vor.u32 %v256, %v259
      %v261 = vrot.slane %v260, 4
      %v263 = vshll.u32 %v211, 16
      %v265 = vrot.slane %v263, 5
      %v266 = vsel %vm224, %v261, %v265
      %v268 = vshrl.u32 %v212, 16
      %v270 = vrot.slane %v268, 4
      %v271 = vshll.u32 %v212, 16
      %v273 = vrot.slane %v271, 5
      %v274 = vor.u32 %v270, %v273
      %v275 = vrot.slane %v274, 4
      %v277 = vshll.u32 %v213, 16
      %v279 = vrot.slane %v277, 5
      %v280 = vsel %vm224, %v275, %v279
      %v282 = vshrl.u32 %v214, 16
      %v284 = vrot.slane %v282, 4
      %v285 = vshll.u32 %v214, 16
      %v287 = vrot.slane %v285, 5
      %v288 = vor.u32 %v284, %v287
      %v289 = vrot.slane %v288, 4
      %v291 = vshll.u32 %v215, 16
      %v293 = vrot.slane %v291, 5
      %v294 = vsel %vm224, %v289, %v293
      %v296 = vshrl.u32 %v216, 16
      %v298 = vrot.slane %v296, 4
      %v299 = vshll.u32 %v216, 16
      %v301 = vrot.slane %v299, 5
      %v302 = vor.u32 %v298, %v301
      %v303 = vrot.slane %v302, 4
      %v305 = vshll.u32 %v217, 16
      %v307 = vrot.slane %v305, 5
      %v308 = vsel %vm224, %v303, %v307
      %v310 = vshrl.u32 %v218, 16
      %v312 = vrot.slane %v310, 4
      %v313 = vshll.u32 %v218, 16
      %v315 = vrot.slane %v313, 5
      %v316 = vor.u32 %v312, %v315
      %v317 = vrot.slane %v316, 4
      %v319 = vshll.u32 %v219, 16
      %v321 = vrot.slane %v319, 5
      %v322 = vsel %vm224, %v317, %v321
      %v324 = vshrl.u32 %v220, 16
      %v326 = vrot.slane %v324, 4
      %v327 = vshll.u32 %v220, 16
      %v329 = vrot.slane %v327, 5
      %v330 = vor.u32 %v326, %v329
      %v331 = vrot.slane %v330, 4
      %v333 = vshll.u32 %v221, 16
      %v335 = vrot.slane %v333, 5
      %v336 = vsel %vm224, %v331, %v335
      %s337 = scalar_lea.vmem %s1, 64
      %v338 = vld [vmem:[%s337] sm:$0xf]
      %v339 = vld [vmem:[%s337 + $0x4] sm:$0xf]
      %v340 = vld [vmem:[%s337 + $0x8] sm:$0xf]
      %v341 = vld [vmem:[%s337 + $0xc] sm:$0xf]
      %v342 = vld [vmem:[%s337 + $0x10] sm:$0xf]
      %v343 = vld [vmem:[%s337 + $0x14] sm:$0xf]
      %v344 = vld [vmem:[%s337 + $0x18] sm:$0xf]
      %v345 = vld [vmem:[%s337 + $0x1c] sm:$0xf]
      %v346 = vld [vmem:[%s337 + $0x20] sm:$0xf]
      %v347 = vld [vmem:[%s337 + $0x24] sm:$0xf]
      %v348 = vld [vmem:[%s337 + $0x28] sm:$0xf]
      %v349 = vld [vmem:[%s337 + $0x2c] sm:$0xf]
      %v350 = vld [vmem:[%s337 + $0x30] sm:$0xf]
      %v351 = vld [vmem:[%s337 + $0x34] sm:$0xf]
      %v352 = vld [vmem:[%s337 + $0x38] sm:$0xf]
      %v353 = vld [vmem:[%s337 + $0x3c] sm:$0xf]
      %v354 = vunpack.c.l.b16 %v238
      %v355 = vunpack.c.l.b16 %v252
      %v356 = vunpack.c.l.b16 %v266
      %v357 = vunpack.c.l.b16 %v280
      %v358 = vunpack.c.l.b16 %v294
      %v359 = vunpack.c.l.b16 %v308
      %v360 = vunpack.c.l.b16 %v322
      %v361 = vunpack.c.l.b16 %v336
      %v362 = vpack.c.b16 %v355, %v354
      %v363 = vpack.c.b16 %v357, %v356
      %v364 = vpack.c.b16 %v359, %v358
      %v365 = vpack.c.b16 %v361, %v360
      %v386 = vunpack.c.l.b16 %v338
      %v387 = vunpack.c.l.b16 %v339
      %v388 = vunpack.c.l.b16 %v340
      %v389 = vunpack.c.l.b16 %v341
      %v390 = vunpack.c.l.b16 %v342
      %v391 = vunpack.c.l.b16 %v343
      %v392 = vunpack.c.l.b16 %v344
      %v393 = vunpack.c.l.b16 %v345
      %v394 = vunpack.c.l.b16 %v346
      %v395 = vunpack.c.l.b16 %v347
      %v396 = vunpack.c.l.b16 %v348
      %v397 = vunpack.c.l.b16 %v349
      %v398 = vunpack.c.l.b16 %v350
      %v399 = vunpack.c.l.b16 %v351
      %v400 = vunpack.c.l.b16 %v352
      %v401 = vunpack.c.l.b16 %v353
      %v402 = vpack.c.b16 %v387, %v386
      %v403 = vpack.c.b16 %v389, %v388
      %v404 = vpack.c.b16 %v391, %v390
      %v405 = vpack.c.b16 %v393, %v392
      %v406 = vpack.c.b16 %v395, %v394
      %v407 = vpack.c.b16 %v397, %v396
      %v408 = vpack.c.b16 %v399, %v398
      %v409 = vpack.c.b16 %v401, %v400
      %418 = vmatpush.bf16.msra.mxu0 %v409
      %419 = vmatpush.bf16.msra.mxu0 %v408
      %420 = vmatpush.bf16.msra.mxu0 %v407
      %421 = vmatpush.bf16.msra.mxu0 %v406
      %422 = vmatpush.bf16.msra.mxu0 %v405
      %423 = vmatpush.bf16.msra.mxu0 %v404
      %424 = vmatpush.bf16.msra.mxu0 %v403
      %425 = vmatpush.bf16.msra.mxu0 %v402
      %426 = vmatmul.bf16.gmra.mxu0 %v362
      %v427 = vpop.f32.mrf.mxu0
      %v428 = vadd.f32 0.0, %v427
      %v429 = vpop.f32.mrf.mxu0
      %v430 = vadd.f32 0.0, %v429
      %431 = vmatmul.bf16.gmra.mxu0 %v363
      %v432 = vpop.f32.mrf.mxu0
      %v433 = vadd.f32 0.0, %v432
      %v434 = vpop.f32.mrf.mxu0
      %v435 = vadd.f32 0.0, %v434
      %436 = vmatmul.bf16.gmra.mxu0 %v364
      %v437 = vpop.f32.mrf.mxu0
      %v438 = vadd.f32 0.0, %v437
      %v439 = vpop.f32.mrf.mxu0
      %v440 = vadd.f32 0.0, %v439
      %441 = vmatmul.bf16.gmra.mxu0 %v365
      %v442 = vpop.f32.mrf.mxu0
      %v443 = vadd.f32 0.0, %v442
      %v444 = vpop.f32.mrf.mxu0
      %v445 = vadd.f32 0.0, %v444
      %446 = vdwg.mxu0
      %v455 = vunpack.c.l.b16 %v182
      %v456 = vunpack.c.l.b16 %v183
      %v457 = vunpack.c.l.b16 %v184
      %v458 = vunpack.c.l.b16 %v185
      %v459 = vunpack.c.l.b16 %v186
      %v460 = vunpack.c.l.b16 %v187
      %v461 = vunpack.c.l.b16 %v188
      %v462 = vunpack.c.l.b16 %v189
      %v463 = vpack.c.b16 %v456, %v455
      %v464 = vpack.c.b16 %v458, %v457
      %v465 = vpack.c.b16 %v460, %v459
      %v466 = vpack.c.b16 %v462, %v461
      %v487 = vunpack.c.l.b16 %v190
      %v488 = vunpack.c.l.b16 %v191
      %v489 = vunpack.c.l.b16 %v192
      %v490 = vunpack.c.l.b16 %v193
      %v491 = vunpack.c.l.b16 %v194
      %v492 = vunpack.c.l.b16 %v195
      %v493 = vunpack.c.l.b16 %v196
      %v494 = vunpack.c.l.b16 %v197
      %v495 = vunpack.c.l.b16 %v198
      %v496 = vunpack.c.l.b16 %v199
      %v497 = vunpack.c.l.b16 %v200
      %v498 = vunpack.c.l.b16 %v201
      %v499 = vunpack.c.l.b16 %v202
      %v500 = vunpack.c.l.b16 %v203
      %v501 = vunpack.c.l.b16 %v204
      %v502 = vunpack.c.l.b16 %v205
      %v503 = vpack.c.b16 %v488, %v487
      %v504 = vpack.c.b16 %v490, %v489
      %v505 = vpack.c.b16 %v492, %v491
      %v506 = vpack.c.b16 %v494, %v493
      %v507 = vpack.c.b16 %v496, %v495
      %v508 = vpack.c.b16 %v498, %v497
      %v509 = vpack.c.b16 %v500, %v499
      %v510 = vpack.c.b16 %v502, %v501
      %519 = vmatpush.bf16.msra.mxu0 %v510
      %520 = vmatpush.bf16.msra.mxu0 %v509
      %521 = vmatpush.bf16.msra.mxu0 %v508
      %522 = vmatpush.bf16.msra.mxu0 %v507
      %523 = vmatpush.bf16.msra.mxu0 %v506
      %524 = vmatpush.bf16.msra.mxu0 %v505
      %525 = vmatpush.bf16.msra.mxu0 %v504
      %526 = vmatpush.bf16.msra.mxu0 %v503
      %527 = vmatmul.bf16.gmra.mxu0 %v463
      %v528 = vpop.f32.mrf.mxu0
      %v529 = vadd.f32 %v428, %v528
      %v530 = vpop.f32.mrf.mxu0
      %v531 = vadd.f32 %v430, %v530
      %532 = vmatmul.bf16.gmra.mxu0 %v464
      %v533 = vpop.f32.mrf.mxu0
      %v534 = vadd.f32 %v433, %v533
      %v535 = vpop.f32.mrf.mxu0
      %v536 = vadd.f32 %v435, %v535
      %537 = vmatmul.bf16.gmra.mxu0 %v465
      %v538 = vpop.f32.mrf.mxu0
      %v539 = vadd.f32 %v438, %v538
      %v540 = vpop.f32.mrf.mxu0
      %v541 = vadd.f32 %v440, %v540
      %542 = vmatmul.bf16.gmra.mxu0 %v466
      %v543 = vpop.f32.mrf.mxu0
      %v544 = vadd.f32 %v443, %v543
      %v545 = vpop.f32.mrf.mxu0
      %v546 = vadd.f32 %v445, %v545
      %547 = vdwg.mxu0
      %v548 = vld [vmem:[%s172] sm:$0xf]
      %v549 = vld [vmem:[%s172 + $0x4] sm:$0x1]
      %v550 = vld [vmem:[%s172 + $0xc] sm:$0xf]
      %v551 = vld [vmem:[%s172 + $0x10] sm:$0x1]
      %v552 = vld [vmem:[%s172 + $0x18] sm:$0xf]
      %v553 = vld [vmem:[%s172 + $0x1c] sm:$0x1]
      %v554 = vld [vmem:[%s172 + $0x24] sm:$0xf]
      %v555 = vld [vmem:[%s172 + $0x28] sm:$0x1]
      %v556 = vld [vmem:[%s172 + $0x30] sm:$0xf]
      %v557 = vld [vmem:[%s172 + $0x34] sm:$0x1]
      %v558 = vld [vmem:[%s172 + $0x3c] sm:$0xf]
      %v559 = vld [vmem:[%s172 + $0x40] sm:$0x1]
      %v560 = vld [vmem:[%s172 + $0x48] sm:$0xf]
      %v561 = vld [vmem:[%s172 + $0x4c] sm:$0x1]
      %v562 = vld [vmem:[%s172 + $0x54] sm:$0xf]
      %v563 = vld [vmem:[%s172 + $0x58] sm:$0x1]
      %v565 = vshrl.u32 %v548, 16
      %v567 = vrot.slane %v565, 4
      %v568 = vshll.u32 %v548, 16
      %v570 = vrot.slane %v568, 5
      %v571 = vor.u32 %v567, %v570
      %v572 = vrot.slane %v571, 4
      %v574 = vshll.u32 %v549, 16
      %v576 = vrot.slane %v574, 5
      %v577 = vsel %vm224, %v572, %v576
      %v579 = vshrl.u32 %v550, 16
      %v581 = vrot.slane %v579, 4
      %v582 = vshll.u32 %v550, 16
      %v584 = vrot.slane %v582, 5
      %v585 = vor.u32 %v581, %v584
      %v586 = vrot.slane %v585, 4
      %v588 = vshll.u32 %v551, 16
      %v590 = vrot.slane %v588, 5
      %v591 = vsel %vm224, %v586, %v590
      %v593 = vshrl.u32 %v552, 16
      %v595 = vrot.slane %v593, 4
      %v596 = vshll.u32 %v552, 16
      %v598 = vrot.slane %v596, 5
      %v599 = vor.u32 %v595, %v598
      %v600 = vrot.slane %v599, 4
      %v602 = vshll.u32 %v553, 16
      %v604 = vrot.slane %v602, 5
      %v605 = vsel %vm224, %v600, %v604
      %v607 = vshrl.u32 %v554, 16
      %v609 = vrot.slane %v607, 4
      %v610 = vshll.u32 %v554, 16
      %v612 = vrot.slane %v610, 5
      %v613 = vor.u32 %v609, %v612
      %v614 = vrot.slane %v613, 4
      %v616 = vshll.u32 %v555, 16
      %v618 = vrot.slane %v616, 5
      %v619 = vsel %vm224, %v614, %v618
      %v621 = vshrl.u32 %v556, 16
      %v623 = vrot.slane %v621, 4
      %v624 = vshll.u32 %v556, 16
      %v626 = vrot.slane %v624, 5
      %v627 = vor.u32 %v623, %v626
      %v628 = vrot.slane %v627, 4
      %v630 = vshll.u32 %v557, 16
      %v632 = vrot.slane %v630, 5
      %v633 = vsel %vm224, %v628, %v632
      %v635 = vshrl.u32 %v558, 16
      %v637 = vrot.slane %v635, 4
      %v638 = vshll.u32 %v558, 16
      %v640 = vrot.slane %v638, 5
      %v641 = vor.u32 %v637, %v640
      %v642 = vrot.slane %v641, 4
      %v644 = vshll.u32 %v559, 16
      %v646 = vrot.slane %v644, 5
      %v647 = vsel %vm224, %v642, %v646
      %v649 = vshrl.u32 %v560, 16
      %v651 = vrot.slane %v649, 4
      %v652 = vshll.u32 %v560, 16
      %v654 = vrot.slane %v652, 5
      %v655 = vor.u32 %v651, %v654
      %v656 = vrot.slane %v655, 4
      %v658 = vshll.u32 %v561, 16
      %v660 = vrot.slane %v658, 5
      %v661 = vsel %vm224, %v656, %v660
      %v663 = vshrl.u32 %v562, 16
      %v665 = vrot.slane %v663, 4
      %v666 = vshll.u32 %v562, 16
      %v668 = vrot.slane %v666, 5
      %v669 = vor.u32 %v665, %v668
      %v670 = vrot.slane %v669, 4
      %v672 = vshll.u32 %v563, 16
      %v674 = vrot.slane %v672, 5
      %v675 = vsel %vm224, %v670, %v674
      %s676 = scalar_lea.vmem %s1, 128
      %v677 = vld [vmem:[%s676] sm:$0xf]
      %v678 = vld [vmem:[%s676 + $0x4] sm:$0xf]
      %v679 = vld [vmem:[%s676 + $0x8] sm:$0xf]
      %v680 = vld [vmem:[%s676 + $0xc] sm:$0xf]
      %v681 = vld [vmem:[%s676 + $0x10] sm:$0xf]
      %v682 = vld [vmem:[%s676 + $0x14] sm:$0xf]
      %v683 = vld [vmem:[%s676 + $0x18] sm:$0xf]
      %v684 = vld [vmem:[%s676 + $0x1c] sm:$0xf]
      %v685 = vld [vmem:[%s676 + $0x20] sm:$0xf]
      %v686 = vld [vmem:[%s676 + $0x24] sm:$0xf]
      %v687 = vld [vmem:[%s676 + $0x28] sm:$0xf]
      %v688 = vld [vmem:[%s676 + $0x2c] sm:$0xf]
      %v689 = vld [vmem:[%s676 + $0x30] sm:$0xf]
      %v690 = vld [vmem:[%s676 + $0x34] sm:$0xf]
      %v691 = vld [vmem:[%s676 + $0x38] sm:$0xf]
      %v692 = vld [vmem:[%s676 + $0x3c] sm:$0xf]
      %v693 = vunpack.c.l.b16 %v577
      %v694 = vunpack.c.l.b16 %v591
      %v695 = vunpack.c.l.b16 %v605
      %v696 = vunpack.c.l.b16 %v619
      %v697 = vunpack.c.l.b16 %v633
      %v698 = vunpack.c.l.b16 %v647
      %v699 = vunpack.c.l.b16 %v661
      %v700 = vunpack.c.l.b16 %v675
      %v701 = vpack.c.b16 %v694, %v693
      %v702 = vpack.c.b16 %v696, %v695
      %v703 = vpack.c.b16 %v698, %v697
      %v704 = vpack.c.b16 %v700, %v699
      %v725 = vunpack.c.l.b16 %v677
      %v726 = vunpack.c.l.b16 %v678
      %v727 = vunpack.c.l.b16 %v679
      %v728 = vunpack.c.l.b16 %v680
      %v729 = vunpack.c.l.b16 %v681
      %v730 = vunpack.c.l.b16 %v682
      %v731 = vunpack.c.l.b16 %v683
      %v732 = vunpack.c.l.b16 %v684
      %v733 = vunpack.c.l.b16 %v685
      %v734 = vunpack.c.l.b16 %v686
      %v735 = vunpack.c.l.b16 %v687
      %v736 = vunpack.c.l.b16 %v688
      %v737 = vunpack.c.l.b16 %v689
      %v738 = vunpack.c.l.b16 %v690
      %v739 = vunpack.c.l.b16 %v691
      %v740 = vunpack.c.l.b16 %v692
      %v741 = vpack.c.b16 %v726, %v725
      %v742 = vpack.c.b16 %v728, %v727
      %v743 = vpack.c.b16 %v730, %v729
      %v744 = vpack.c.b16 %v732, %v731
      %v745 = vpack.c.b16 %v734, %v733
      %v746 = vpack.c.b16 %v736, %v735
      %v747 = vpack.c.b16 %v738, %v737
      %v748 = vpack.c.b16 %v740, %v739
      %757 = vmatpush.bf16.msra.mxu0 %v748
      %758 = vmatpush.bf16.msra.mxu0 %v747
      %759 = vmatpush.bf16.msra.mxu0 %v746
      %760 = vmatpush.bf16.msra.mxu0 %v745
      %761 = vmatpush.bf16.msra.mxu0 %v744
      %762 = vmatpush.bf16.msra.mxu0 %v743
      %763 = vmatpush.bf16.msra.mxu0 %v742
      %764 = vmatpush.bf16.msra.mxu0 %v741
      %765 = vmatmul.bf16.gmra.mxu0 %v701
      %v766 = vpop.f32.mrf.mxu0
      %v767 = vadd.f32 0.0, %v766
      %v768 = vpop.f32.mrf.mxu0
      %v769 = vadd.f32 0.0, %v768
      %770 = vmatmul.bf16.gmra.mxu0 %v702
      %v771 = vpop.f32.mrf.mxu0
      %v772 = vadd.f32 0.0, %v771
      %v773 = vpop.f32.mrf.mxu0
      %v774 = vadd.f32 0.0, %v773
      %775 = vmatmul.bf16.gmra.mxu0 %v703
      %v776 = vpop.f32.mrf.mxu0
      %v777 = vadd.f32 0.0, %v776
      %v778 = vpop.f32.mrf.mxu0
      %v779 = vadd.f32 0.0, %v778
      %780 = vmatmul.bf16.gmra.mxu0 %v704
      %v781 = vpop.f32.mrf.mxu0
      %v782 = vadd.f32 0.0, %v781
      %v783 = vpop.f32.mrf.mxu0
      %v784 = vadd.f32 0.0, %v783
      %785 = vdwg.mxu0
      %v786 = vadd.f32 %v529, %v767
      %v787 = vadd.f32 %v531, %v769
      %v788 = vadd.f32 %v534, %v772
      %v789 = vadd.f32 %v536, %v774
      %v790 = vadd.f32 %v539, %v777
      %v791 = vadd.f32 %v541, %v779
      %v792 = vadd.f32 %v544, %v782
      %v793 = vadd.f32 %v546, %v784
      %s794 = scalar_lea.vmem %s172, 108
      %v795 = vld [vmem:[%s794] sm:$0xf]
      %v796 = vld [vmem:[%s794 + $0xc] sm:$0xf]
      %v797 = vld [vmem:[%s794 + $0x18] sm:$0xf]
      %v798 = vld [vmem:[%s794 + $0x24] sm:$0xf]
      %v799 = vld [vmem:[%s794 + $0x30] sm:$0xf]
      %v800 = vld [vmem:[%s794 + $0x3c] sm:$0xf]
      %v801 = vld [vmem:[%s794 + $0x48] sm:$0xf]
      %v802 = vld [vmem:[%s794 + $0x54] sm:$0xf]
      %s803 = scalar_lea.vmem %s1, 192
      %v804 = vld [vmem:[%s803] sm:$0xf]
      %v805 = vld [vmem:[%s803 + $0x4] sm:$0xf]
      %v806 = vld [vmem:[%s803 + $0x8] sm:$0xf]
      %v807 = vld [vmem:[%s803 + $0xc] sm:$0xf]
      %v808 = vld [vmem:[%s803 + $0x10] sm:$0xf]
      %v809 = vld [vmem:[%s803 + $0x14] sm:$0xf]
      %v810 = vld [vmem:[%s803 + $0x18] sm:$0xf]
      %v811 = vld [vmem:[%s803 + $0x1c] sm:$0xf]
      %v812 = vld [vmem:[%s803 + $0x20] sm:$0xf]
      %v813 = vld [vmem:[%s803 + $0x24] sm:$0xf]
      %v814 = vld [vmem:[%s803 + $0x28] sm:$0xf]
      %v815 = vld [vmem:[%s803 + $0x2c] sm:$0xf]
      %v816 = vld [vmem:[%s803 + $0x30] sm:$0xf]
      %v817 = vld [vmem:[%s803 + $0x34] sm:$0xf]
      %v818 = vld [vmem:[%s803 + $0x38] sm:$0xf]
      %v819 = vld [vmem:[%s803 + $0x3c] sm:$0xf]
      %v828 = vunpack.c.l.b16 %v795
      %v829 = vunpack.c.l.b16 %v796
      %v830 = vunpack.c.l.b16 %v797
      %v831 = vunpack.c.l.b16 %v798
      %v832 = vunpack.c.l.b16 %v799
      %v833 = vunpack.c.l.b16 %v800
      %v834 = vunpack.c.l.b16 %v801
      %v835 = vunpack.c.l.b16 %v802
      %v836 = vpack.c.b16 %v829, %v828
      %v837 = vpack.c.b16 %v831, %v830
      %v838 = vpack.c.b16 %v833, %v832
      %v839 = vpack.c.b16 %v835, %v834
      %v860 = vunpack.c.l.b16 %v804
      %v861 = vunpack.c.l.b16 %v805
      %v862 = vunpack.c.l.b16 %v806
      %v863 = vunpack.c.l.b16 %v807
      %v864 = vunpack.c.l.b16 %v808
      %v865 = vunpack.c.l.b16 %v809
      %v866 = vunpack.c.l.b16 %v810
      %v867 = vunpack.c.l.b16 %v811
      %v868 = vunpack.c.l.b16 %v812
      %v869 = vunpack.c.l.b16 %v813
      %v870 = vunpack.c.l.b16 %v814
      %v871 = vunpack.c.l.b16 %v815
      %v872 = vunpack.c.l.b16 %v816
      %v873 = vunpack.c.l.b16 %v817
      %v874 = vunpack.c.l.b16 %v818
      %v875 = vunpack.c.l.b16 %v819
      %v876 = vpack.c.b16 %v861, %v860
      %v877 = vpack.c.b16 %v863, %v862
      %v878 = vpack.c.b16 %v865, %v864
      %v879 = vpack.c.b16 %v867, %v866
      %v880 = vpack.c.b16 %v869, %v868
      %v881 = vpack.c.b16 %v871, %v870
      %v882 = vpack.c.b16 %v873, %v872
      %v883 = vpack.c.b16 %v875, %v874
      %892 = vmatpush.bf16.msra.mxu0 %v883
      %893 = vmatpush.bf16.msra.mxu0 %v882
      %894 = vmatpush.bf16.msra.mxu0 %v881
      %895 = vmatpush.bf16.msra.mxu0 %v880
      %896 = vmatpush.bf16.msra.mxu0 %v879
      %897 = vmatpush.bf16.msra.mxu0 %v878
      %898 = vmatpush.bf16.msra.mxu0 %v877
      %899 = vmatpush.bf16.msra.mxu0 %v876
      %900 = vmatmul.bf16.gmra.mxu0 %v836
      %v901 = vpop.f32.mrf.mxu0
      %v902 = vadd.f32 0.0, %v901
      %v903 = vpop.f32.mrf.mxu0
      %v904 = vadd.f32 0.0, %v903
      %905 = vmatmul.bf16.gmra.mxu0 %v837
      %v906 = vpop.f32.mrf.mxu0
      %v907 = vadd.f32 0.0, %v906
      %v908 = vpop.f32.mrf.mxu0
      %v909 = vadd.f32 0.0, %v908
      %910 = vmatmul.bf16.gmra.mxu0 %v838
      %v911 = vpop.f32.mrf.mxu0
      %v912 = vadd.f32 0.0, %v911
      %v913 = vpop.f32.mrf.mxu0
      %v914 = vadd.f32 0.0, %v913
      %915 = vmatmul.bf16.gmra.mxu0 %v839
      %v916 = vpop.f32.mrf.mxu0
      %v917 = vadd.f32 0.0, %v916
      %v918 = vpop.f32.mrf.mxu0
      %v919 = vadd.f32 0.0, %v918
      %920 = vdwg.mxu0
      %v921 = vadd.f32 %v786, %v902
      %v922 = vadd.f32 %v787, %v904
      %v923 = vadd.f32 %v788, %v907
      %v924 = vadd.f32 %v789, %v909
      %v925 = vadd.f32 %v790, %v912
      %v926 = vadd.f32 %v791, %v914
      %v927 = vadd.f32 %v792, %v917
      %v928 = vadd.f32 %v793, %v919
      %v929 = vld [vmem:[%s794 + $0x4] sm:$0xf]
      %v930 = vld [vmem:[%s794 + $0x8] sm:$0x1]
      %v931 = vld [vmem:[%s794 + $0x10] sm:$0xf]
      %v932 = vld [vmem:[%s794 + $0x14] sm:$0x1]
      %v933 = vld [vmem:[%s794 + $0x1c] sm:$0xf]
      %v934 = vld [vmem:[%s794 + $0x20] sm:$0x1]
      %v935 = vld [vmem:[%s794 + $0x28] sm:$0xf]
      %v936 = vld [vmem:[%s794 + $0x2c] sm:$0x1]
      %v937 = vld [vmem:[%s794 + $0x34] sm:$0xf]
      %v938 = vld [vmem:[%s794 + $0x38] sm:$0x1]
      %v939 = vld [vmem:[%s794 + $0x40] sm:$0xf]
      %v940 = vld [vmem:[%s794 + $0x44] sm:$0x1]
      %v941 = vld [vmem:[%s794 + $0x4c] sm:$0xf]
      %v942 = vld [vmem:[%s794 + $0x50] sm:$0x1]
      %v943 = vld [vmem:[%s794 + $0x58] sm:$0xf]
      %v944 = vld [vmem:[%s794 + $0x5c] sm:$0x1]
      %v946 = vshrl.u32 %v929, 16
      %v948 = vrot.slane %v946, 4
      %v949 = vshll.u32 %v929, 16
      %v951 = vrot.slane %v949, 5
      %v952 = vor.u32 %v948, %v951
      %v953 = vrot.slane %v952, 4
      %v955 = vshll.u32 %v930, 16
      %v957 = vrot.slane %v955, 5
      %v958 = vsel %vm224, %v953, %v957
      %v960 = vshrl.u32 %v931, 16
      %v962 = vrot.slane %v960, 4
      %v963 = vshll.u32 %v931, 16
      %v965 = vrot.slane %v963, 5
      %v966 = vor.u32 %v962, %v965
      %v967 = vrot.slane %v966, 4
      %v969 = vshll.u32 %v932, 16
      %v971 = vrot.slane %v969, 5
      %v972 = vsel %vm224, %v967, %v971
      %v974 = vshrl.u32 %v933, 16
      %v976 = vrot.slane %v974, 4
      %v977 = vshll.u32 %v933, 16
      %v979 = vrot.slane %v977, 5
      %v980 = vor.u32 %v976, %v979
      %v981 = vrot.slane %v980, 4
      %v983 = vshll.u32 %v934, 16
      %v985 = vrot.slane %v983, 5
      %v986 = vsel %vm224, %v981, %v985
      %v988 = vshrl.u32 %v935, 16
      %v990 = vrot.slane %v988, 4
      %v991 = vshll.u32 %v935, 16
      %v993 = vrot.slane %v991, 5
      %v994 = vor.u32 %v990, %v993
      %v995 = vrot.slane %v994, 4
      %v997 = vshll.u32 %v936, 16
      %v999 = vrot.slane %v997, 5
      %v1000 = vsel %vm224, %v995, %v999
      %v1002 = vshrl.u32 %v937, 16
      %v1004 = vrot.slane %v1002, 4
      %v1005 = vshll.u32 %v937, 16
      %v1007 = vrot.slane %v1005, 5
      %v1008 = vor.u32 %v1004, %v1007
      %v1009 = vrot.slane %v1008, 4
      %v1011 = vshll.u32 %v938, 16
      %v1013 = vrot.slane %v1011, 5
      %v1014 = vsel %vm224, %v1009, %v1013
      %v1016 = vshrl.u32 %v939, 16
      %v1018 = vrot.slane %v1016, 4
      %v1019 = vshll.u32 %v939, 16
      %v1021 = vrot.slane %v1019, 5
      %v1022 = vor.u32 %v1018, %v1021
      %v1023 = vrot.slane %v1022, 4
      %v1025 = vshll.u32 %v940, 16
      %v1027 = vrot.slane %v1025, 5
      %v1028 = vsel %vm224, %v1023, %v1027
      %v1030 = vshrl.u32 %v941, 16
      %v1032 = vrot.slane %v1030, 4
      %v1033 = vshll.u32 %v941, 16
      %v1035 = vrot.slane %v1033, 5
      %v1036 = vor.u32 %v1032, %v1035
      %v1037 = vrot.slane %v1036, 4
      %v1039 = vshll.u32 %v942, 16
      %v1041 = vrot.slane %v1039, 5
      %v1042 = vsel %vm224, %v1037, %v1041
      %v1044 = vshrl.u32 %v943, 16
      %v1046 = vrot.slane %v1044, 4
      %v1047 = vshll.u32 %v943, 16
      %v1049 = vrot.slane %v1047, 5
      %v1050 = vor.u32 %v1046, %v1049
      %v1051 = vrot.slane %v1050, 4
      %v1053 = vshll.u32 %v944, 16
      %v1055 = vrot.slane %v1053, 5
      %v1056 = vsel %vm224, %v1051, %v1055
      %s1057 = scalar_lea.vmem %s1, 256
      %v1058 = vld [vmem:[%s1057] sm:$0xf]
      %v1059 = vld [vmem:[%s1057 + $0x4] sm:$0xf]
      %v1060 = vld [vmem:[%s1057 + $0x8] sm:$0xf]
      %v1061 = vld [vmem:[%s1057 + $0xc] sm:$0xf]
      %v1062 = vld [vmem:[%s1057 + $0x10] sm:$0xf]
      %v1063 = vld [vmem:[%s1057 + $0x14] sm:$0xf]
      %v1064 = vld [vmem:[%s1057 + $0x18] sm:$0xf]
      %v1065 = vld [vmem:[%s1057 + $0x1c] sm:$0xf]
      %v1066 = vld [vmem:[%s1057 + $0x20] sm:$0xf]
      %v1067 = vld [vmem:[%s1057 + $0x24] sm:$0xf]
      %v1068 = vld [vmem:[%s1057 + $0x28] sm:$0xf]
      %v1069 = vld [vmem:[%s1057 + $0x2c] sm:$0xf]
      %v1070 = vld [vmem:[%s1057 + $0x30] sm:$0xf]
      %v1071 = vld [vmem:[%s1057 + $0x34] sm:$0xf]
      %v1072 = vld [vmem:[%s1057 + $0x38] sm:$0xf]
      %v1073 = vld [vmem:[%s1057 + $0x3c] sm:$0xf]
      %v1074 = vunpack.c.l.b16 %v958
      %v1075 = vunpack.c.l.b16 %v972
      %v1076 = vunpack.c.l.b16 %v986
      %v1077 = vunpack.c.l.b16 %v1000
      %v1078 = vunpack.c.l.b16 %v1014
      %v1079 = vunpack.c.l.b16 %v1028
      %v1080 = vunpack.c.l.b16 %v1042
      %v1081 = vunpack.c.l.b16 %v1056
      %v1082 = vpack.c.b16 %v1075, %v1074
      %v1083 = vpack.c.b16 %v1077, %v1076
      %v1084 = vpack.c.b16 %v1079, %v1078
      %v1085 = vpack.c.b16 %v1081, %v1080
      %v1106 = vunpack.c.l.b16 %v1058
      %v1107 = vunpack.c.l.b16 %v1059
      %v1108 = vunpack.c.l.b16 %v1060
      %v1109 = vunpack.c.l.b16 %v1061
      %v1110 = vunpack.c.l.b16 %v1062
      %v1111 = vunpack.c.l.b16 %v1063
      %v1112 = vunpack.c.l.b16 %v1064
      %v1113 = vunpack.c.l.b16 %v1065
      %v1114 = vunpack.c.l.b16 %v1066
      %v1115 = vunpack.c.l.b16 %v1067
      %v1116 = vunpack.c.l.b16 %v1068
      %v1117 = vunpack.c.l.b16 %v1069
      %v1118 = vunpack.c.l.b16 %v1070
      %v1119 = vunpack.c.l.b16 %v1071
      %v1120 = vunpack.c.l.b16 %v1072
      %v1121 = vunpack.c.l.b16 %v1073
      %v1122 = vpack.c.b16 %v1107, %v1106
      %v1123 = vpack.c.b16 %v1109, %v1108
      %v1124 = vpack.c.b16 %v1111, %v1110
      %v1125 = vpack.c.b16 %v1113, %v1112
      %v1126 = vpack.c.b16 %v1115, %v1114
      %v1127 = vpack.c.b16 %v1117, %v1116
      %v1128 = vpack.c.b16 %v1119, %v1118
      %v1129 = vpack.c.b16 %v1121, %v1120
      %1138 = vmatpush.bf16.msra.mxu0 %v1129
      %1139 = vmatpush.bf16.msra.mxu0 %v1128
      %1140 = vmatpush.bf16.msra.mxu0 %v1127
      %1141 = vmatpush.bf16.msra.mxu0 %v1126
      %1142 = vmatpush.bf16.msra.mxu0 %v1125
      %1143 = vmatpush.bf16.msra.mxu0 %v1124
      %1144 = vmatpush.bf16.msra.mxu0 %v1123
      %1145 = vmatpush.bf16.msra.mxu0 %v1122
      %1146 = vmatmul.bf16.gmra.mxu0 %v1082
      %v1147 = vpop.f32.mrf.mxu0
      %v1148 = vadd.f32 0.0, %v1147
      %v1149 = vpop.f32.mrf.mxu0
      %v1150 = vadd.f32 0.0, %v1149
      %1151 = vmatmul.bf16.gmra.mxu0 %v1083
      %v1152 = vpop.f32.mrf.mxu0
      %v1153 = vadd.f32 0.0, %v1152
      %v1154 = vpop.f32.mrf.mxu0
      %v1155 = vadd.f32 0.0, %v1154
      %1156 = vmatmul.bf16.gmra.mxu0 %v1084
      %v1157 = vpop.f32.mrf.mxu0
      %v1158 = vadd.f32 0.0, %v1157
      %v1159 = vpop.f32.mrf.mxu0
      %v1160 = vadd.f32 0.0, %v1159
      %1161 = vmatmul.bf16.gmra.mxu0 %v1085
      %v1162 = vpop.f32.mrf.mxu0
      %v1163 = vadd.f32 0.0, %v1162
      %v1164 = vpop.f32.mrf.mxu0
      %v1165 = vadd.f32 0.0, %v1164
      %1166 = vdwg.mxu0
      %v1167 = vadd.f32 %v921, %v1148
      %v1168 = vadd.f32 %v922, %v1150
      %v1169 = vadd.f32 %v923, %v1153
      %v1170 = vadd.f32 %v924, %v1155
      %v1171 = vadd.f32 %v925, %v1158
      %v1172 = vadd.f32 %v926, %v1160
      %v1173 = vadd.f32 %v927, %v1163
      %v1174 = vadd.f32 %v928, %v1165
      %v1175 = vld [vmem:[%s794] sm:$0xf]
      %v1176 = vld [vmem:[%s794 + $0x4] sm:$0x1]
      %v1177 = vld [vmem:[%s794 + $0xc] sm:$0xf]
      %v1178 = vld [vmem:[%s794 + $0x10] sm:$0x1]
      %v1179 = vld [vmem:[%s794 + $0x18] sm:$0xf]
      %v1180 = vld [vmem:[%s794 + $0x1c] sm:$0x1]
      %v1181 = vld [vmem:[%s794 + $0x24] sm:$0xf]
      %v1182 = vld [vmem:[%s794 + $0x28] sm:$0x1]
      %v1183 = vld [vmem:[%s794 + $0x30] sm:$0xf]
      %v1184 = vld [vmem:[%s794 + $0x34] sm:$0x1]
      %v1185 = vld [vmem:[%s794 + $0x3c] sm:$0xf]
      %v1186 = vld [vmem:[%s794 + $0x40] sm:$0x1]
      %v1187 = vld [vmem:[%s794 + $0x48] sm:$0xf]
      %v1188 = vld [vmem:[%s794 + $0x4c] sm:$0x1]
      %v1189 = vld [vmem:[%s794 + $0x54] sm:$0xf]
      %v1190 = vld [vmem:[%s794 + $0x58] sm:$0x1]
      %v1192 = vshrl.u32 %v1175, 16
      %v1194 = vrot.slane %v1192, 4
      %v1195 = vshll.u32 %v1175, 16
      %v1197 = vrot.slane %v1195, 5
      %v1198 = vor.u32 %v1194, %v1197
      %v1199 = vrot.slane %v1198, 4
      %v1201 = vshll.u32 %v1176, 16
      %v1203 = vrot.slane %v1201, 5
      %v1204 = vsel %vm224, %v1199, %v1203
      %v1206 = vshrl.u32 %v1177, 16
      %v1208 = vrot.slane %v1206, 4
      %v1209 = vshll.u32 %v1177, 16
      %v1211 = vrot.slane %v1209, 5
      %v1212 = vor.u32 %v1208, %v1211
      %v1213 = vrot.slane %v1212, 4
      %v1215 = vshll.u32 %v1178, 16
      %v1217 = vrot.slane %v1215, 5
      %v1218 = vsel %vm224, %v1213, %v1217
      %v1220 = vshrl.u32 %v1179, 16
      %v1222 = vrot.slane %v1220, 4
      %v1223 = vshll.u32 %v1179, 16
      %v1225 = vrot.slane %v1223, 5
      %v1226 = vor.u32 %v1222, %v1225
      %v1227 = vrot.slane %v1226, 4
      %v1229 = vshll.u32 %v1180, 16
      %v1231 = vrot.slane %v1229, 5
      %v1232 = vsel %vm224, %v1227, %v1231
      %v1234 = vshrl.u32 %v1181, 16
      %v1236 = vrot.slane %v1234, 4
      %v1237 = vshll.u32 %v1181, 16
      %v1239 = vrot.slane %v1237, 5
      %v1240 = vor.u32 %v1236, %v1239
      %v1241 = vrot.slane %v1240, 4
      %v1243 = vshll.u32 %v1182, 16
      %v1245 = vrot.slane %v1243, 5
      %v1246 = vsel %vm224, %v1241, %v1245
      %v1248 = vshrl.u32 %v1183, 16
      %v1250 = vrot.slane %v1248, 4
      %v1251 = vshll.u32 %v1183, 16
      %v1253 = vrot.slane %v1251, 5
      %v1254 = vor.u32 %v1250, %v1253
      %v1255 = vrot.slane %v1254, 4
      %v1257 = vshll.u32 %v1184, 16
      %v1259 = vrot.slane %v1257, 5
      %v1260 = vsel %vm224, %v1255, %v1259
      %v1262 = vshrl.u32 %v1185, 16
      %v1264 = vrot.slane %v1262, 4
      %v1265 = vshll.u32 %v1185, 16
      %v1267 = vrot.slane %v1265, 5
      %v1268 = vor.u32 %v1264, %v1267
      %v1269 = vrot.slane %v1268, 4
      %v1271 = vshll.u32 %v1186, 16
      %v1273 = vrot.slane %v1271, 5
      %v1274 = vsel %vm224, %v1269, %v1273
      %v1276 = vshrl.u32 %v1187, 16
      %v1278 = vrot.slane %v1276, 4
      %v1279 = vshll.u32 %v1187, 16
      %v1281 = vrot.slane %v1279, 5
      %v1282 = vor.u32 %v1278, %v1281
      %v1283 = vrot.slane %v1282, 4
      %v1285 = vshll.u32 %v1188, 16
      %v1287 = vrot.slane %v1285, 5
      %v1288 = vsel %vm224, %v1283, %v1287
      %v1290 = vshrl.u32 %v1189, 16
      %v1292 = vrot.slane %v1290, 4
      %v1293 = vshll.u32 %v1189, 16
      %v1295 = vrot.slane %v1293, 5
      %v1296 = vor.u32 %v1292, %v1295
      %v1297 = vrot.slane %v1296, 4
      %v1299 = vshll.u32 %v1190, 16
      %v1301 = vrot.slane %v1299, 5
      %v1302 = vsel %vm224, %v1297, %v1301
      %s1303 = scalar_lea.vmem %s1, 320
      %v1304 = vld [vmem:[%s1303] sm:$0xf]
      %v1305 = vld [vmem:[%s1303 + $0x4] sm:$0xf]
      %v1306 = vld [vmem:[%s1303 + $0x8] sm:$0xf]
      %v1307 = vld [vmem:[%s1303 + $0xc] sm:$0xf]
      %v1308 = vld [vmem:[%s1303 + $0x10] sm:$0xf]
      %v1309 = vld [vmem:[%s1303 + $0x14] sm:$0xf]
      %v1310 = vld [vmem:[%s1303 + $0x18] sm:$0xf]
      %v1311 = vld [vmem:[%s1303 + $0x1c] sm:$0xf]
      %v1312 = vld [vmem:[%s1303 + $0x20] sm:$0xf]
      %v1313 = vld [vmem:[%s1303 + $0x24] sm:$0xf]
      %v1314 = vld [vmem:[%s1303 + $0x28] sm:$0xf]
      %v1315 = vld [vmem:[%s1303 + $0x2c] sm:$0xf]
      %v1316 = vld [vmem:[%s1303 + $0x30] sm:$0xf]
      %v1317 = vld [vmem:[%s1303 + $0x34] sm:$0xf]
      %v1318 = vld [vmem:[%s1303 + $0x38] sm:$0xf]
      %v1319 = vld [vmem:[%s1303 + $0x3c] sm:$0xf]
      %v1320 = vunpack.c.l.b16 %v1204
      %v1321 = vunpack.c.l.b16 %v1218
      %v1322 = vunpack.c.l.b16 %v1232
      %v1323 = vunpack.c.l.b16 %v1246
      %v1324 = vunpack.c.l.b16 %v1260
      %v1325 = vunpack.c.l.b16 %v1274
      %v1326 = vunpack.c.l.b16 %v1288
      %v1327 = vunpack.c.l.b16 %v1302
      %v1328 = vpack.c.b16 %v1321, %v1320
      %v1329 = vpack.c.b16 %v1323, %v1322
      %v1330 = vpack.c.b16 %v1325, %v1324
      %v1331 = vpack.c.b16 %v1327, %v1326
      %v1352 = vunpack.c.l.b16 %v1304
      %v1353 = vunpack.c.l.b16 %v1305
      %v1354 = vunpack.c.l.b16 %v1306
      %v1355 = vunpack.c.l.b16 %v1307
      %v1356 = vunpack.c.l.b16 %v1308
      %v1357 = vunpack.c.l.b16 %v1309
      %v1358 = vunpack.c.l.b16 %v1310
      %v1359 = vunpack.c.l.b16 %v1311
      %v1360 = vunpack.c.l.b16 %v1312
      %v1361 = vunpack.c.l.b16 %v1313
      %v1362 = vunpack.c.l.b16 %v1314
      %v1363 = vunpack.c.l.b16 %v1315
      %v1364 = vunpack.c.l.b16 %v1316
      %v1365 = vunpack.c.l.b16 %v1317
      %v1366 = vunpack.c.l.b16 %v1318
      %v1367 = vunpack.c.l.b16 %v1319
      %v1368 = vpack.c.b16 %v1353, %v1352
      %v1369 = vpack.c.b16 %v1355, %v1354
      %v1370 = vpack.c.b16 %v1357, %v1356
      %v1371 = vpack.c.b16 %v1359, %v1358
      %v1372 = vpack.c.b16 %v1361, %v1360
      %v1373 = vpack.c.b16 %v1363, %v1362
      %v1374 = vpack.c.b16 %v1365, %v1364
      %v1375 = vpack.c.b16 %v1367, %v1366
      %1384 = vmatpush.bf16.msra.mxu0 %v1375
      %1385 = vmatpush.bf16.msra.mxu0 %v1374
      %1386 = vmatpush.bf16.msra.mxu0 %v1373
      %1387 = vmatpush.bf16.msra.mxu0 %v1372
      %1388 = vmatpush.bf16.msra.mxu0 %v1371
      %1389 = vmatpush.bf16.msra.mxu0 %v1370
      %1390 = vmatpush.bf16.msra.mxu0 %v1369
      %1391 = vmatpush.bf16.msra.mxu0 %v1368
      %1392 = vmatmul.bf16.gmra.mxu0 %v1328
      %v1393 = vpop.f32.mrf.mxu0
      %v1394 = vadd.f32 0.0, %v1393
      %v1395 = vpop.f32.mrf.mxu0
      %v1396 = vadd.f32 0.0, %v1395
      %1397 = vmatmul.bf16.gmra.mxu0 %v1329
      %v1398 = vpop.f32.mrf.mxu0
      %v1399 = vadd.f32 0.0, %v1398
      %v1400 = vpop.f32.mrf.mxu0
      %v1401 = vadd.f32 0.0, %v1400
      %1402 = vmatmul.bf16.gmra.mxu0 %v1330
      %v1403 = vpop.f32.mrf.mxu0
      %v1404 = vadd.f32 0.0, %v1403
      %v1405 = vpop.f32.mrf.mxu0
      %v1406 = vadd.f32 0.0, %v1405
      %1407 = vmatmul.bf16.gmra.mxu0 %v1331
      %v1408 = vpop.f32.mrf.mxu0
      %v1409 = vadd.f32 0.0, %v1408
      %v1410 = vpop.f32.mrf.mxu0
      %v1411 = vadd.f32 0.0, %v1410
      %1412 = vdwg.mxu0
      %v1413 = vadd.f32 %v1167, %v1394
      %v1414 = vadd.f32 %v1168, %v1396
      %v1415 = vadd.f32 %v1169, %v1399
      %v1416 = vadd.f32 %v1170, %v1401
      %v1417 = vadd.f32 %v1171, %v1404
      %v1418 = vadd.f32 %v1172, %v1406
      %v1419 = vadd.f32 %v1173, %v1409
      %v1420 = vadd.f32 %v1174, %v1411
      %s1421 = scalar_lea.vmem %s172, 12
      %v1422 = vld [vmem:[%s1421] sm:$0xf]
      %v1423 = vld [vmem:[%s1421 + $0xc] sm:$0xf]
      %v1424 = vld [vmem:[%s1421 + $0x18] sm:$0xf]
      %v1425 = vld [vmem:[%s1421 + $0x24] sm:$0xf]
      %v1426 = vld [vmem:[%s1421 + $0x30] sm:$0xf]
      %v1427 = vld [vmem:[%s1421 + $0x3c] sm:$0xf]
      %v1428 = vld [vmem:[%s1421 + $0x48] sm:$0xf]
      %v1429 = vld [vmem:[%s1421 + $0x54] sm:$0xf]
      %s1430 = scalar_lea.vmem %s1, 384
      %v1431 = vld [vmem:[%s1430] sm:$0xf]
      %v1432 = vld [vmem:[%s1430 + $0x4] sm:$0xf]
      %v1433 = vld [vmem:[%s1430 + $0x8] sm:$0xf]
      %v1434 = vld [vmem:[%s1430 + $0xc] sm:$0xf]
      %v1435 = vld [vmem:[%s1430 + $0x10] sm:$0xf]
      %v1436 = vld [vmem:[%s1430 + $0x14] sm:$0xf]
      %v1437 = vld [vmem:[%s1430 + $0x18] sm:$0xf]
      %v1438 = vld [vmem:[%s1430 + $0x1c] sm:$0xf]
      %v1439 = vld [vmem:[%s1430 + $0x20] sm:$0xf]
      %v1440 = vld [vmem:[%s1430 + $0x24] sm:$0xf]
      %v1441 = vld [vmem:[%s1430 + $0x28] sm:$0xf]
      %v1442 = vld [vmem:[%s1430 + $0x2c] sm:$0xf]
      %v1443 = vld [vmem:[%s1430 + $0x30] sm:$0xf]
      %v1444 = vld [vmem:[%s1430 + $0x34] sm:$0xf]
      %v1445 = vld [vmem:[%s1430 + $0x38] sm:$0xf]
      %v1446 = vld [vmem:[%s1430 + $0x3c] sm:$0xf]
      %v1455 = vunpack.c.l.b16 %v1422
      %v1456 = vunpack.c.l.b16 %v1423
      %v1457 = vunpack.c.l.b16 %v1424
      %v1458 = vunpack.c.l.b16 %v1425
      %v1459 = vunpack.c.l.b16 %v1426
      %v1460 = vunpack.c.l.b16 %v1427
      %v1461 = vunpack.c.l.b16 %v1428
      %v1462 = vunpack.c.l.b16 %v1429
      %v1463 = vpack.c.b16 %v1456, %v1455
      %v1464 = vpack.c.b16 %v1458, %v1457
      %v1465 = vpack.c.b16 %v1460, %v1459
      %v1466 = vpack.c.b16 %v1462, %v1461
      %v1487 = vunpack.c.l.b16 %v1431
      %v1488 = vunpack.c.l.b16 %v1432
      %v1489 = vunpack.c.l.b16 %v1433
      %v1490 = vunpack.c.l.b16 %v1434
      %v1491 = vunpack.c.l.b16 %v1435
      %v1492 = vunpack.c.l.b16 %v1436
      %v1493 = vunpack.c.l.b16 %v1437
      %v1494 = vunpack.c.l.b16 %v1438
      %v1495 = vunpack.c.l.b16 %v1439
      %v1496 = vunpack.c.l.b16 %v1440
      %v1497 = vunpack.c.l.b16 %v1441
      %v1498 = vunpack.c.l.b16 %v1442
      %v1499 = vunpack.c.l.b16 %v1443
      %v1500 = vunpack.c.l.b16 %v1444
      %v1501 = vunpack.c.l.b16 %v1445
      %v1502 = vunpack.c.l.b16 %v1446
      %v1503 = vpack.c.b16 %v1488, %v1487
      %v1504 = vpack.c.b16 %v1490, %v1489
      %v1505 = vpack.c.b16 %v1492, %v1491
      %v1506 = vpack.c.b16 %v1494, %v1493
      %v1507 = vpack.c.b16 %v1496, %v1495
      %v1508 = vpack.c.b16 %v1498, %v1497
      %v1509 = vpack.c.b16 %v1500, %v1499
      %v1510 = vpack.c.b16 %v1502, %v1501
      %1519 = vmatpush.bf16.msra.mxu0 %v1510
      %1520 = vmatpush.bf16.msra.mxu0 %v1509
      %1521 = vmatpush.bf16.msra.mxu0 %v1508
      %1522 = vmatpush.bf16.msra.mxu0 %v1507
      %1523 = vmatpush.bf16.msra.mxu0 %v1506
      %1524 = vmatpush.bf16.msra.mxu0 %v1505
      %1525 = vmatpush.bf16.msra.mxu0 %v1504
      %1526 = vmatpush.bf16.msra.mxu0 %v1503
      %1527 = vmatmul.bf16.gmra.mxu0 %v1463
      %v1528 = vpop.f32.mrf.mxu0
      %v1529 = vadd.f32 0.0, %v1528
      %v1530 = vpop.f32.mrf.mxu0
      %v1531 = vadd.f32 0.0, %v1530
      %1532 = vmatmul.bf16.gmra.mxu0 %v1464
      %v1533 = vpop.f32.mrf.mxu0
      %v1534 = vadd.f32 0.0, %v1533
      %v1535 = vpop.f32.mrf.mxu0
      %v1536 = vadd.f32 0.0, %v1535
      %1537 = vmatmul.bf16.gmra.mxu0 %v1465
      %v1538 = vpop.f32.mrf.mxu0
      %v1539 = vadd.f32 0.0, %v1538
      %v1540 = vpop.f32.mrf.mxu0
      %v1541 = vadd.f32 0.0, %v1540
      %1542 = vmatmul.bf16.gmra.mxu0 %v1466
      %v1543 = vpop.f32.mrf.mxu0
      %v1544 = vadd.f32 0.0, %v1543
      %v1545 = vpop.f32.mrf.mxu0
      %v1546 = vadd.f32 0.0, %v1545
      %1547 = vdwg.mxu0
      %v1548 = vadd.f32 %v1413, %v1529
      %v1549 = vadd.f32 %v1414, %v1531
      %v1550 = vadd.f32 %v1415, %v1534
      %v1551 = vadd.f32 %v1416, %v1536
      %v1552 = vadd.f32 %v1417, %v1539
      %v1553 = vadd.f32 %v1418, %v1541
      %v1554 = vadd.f32 %v1419, %v1544
      %v1555 = vadd.f32 %v1420, %v1546
      %v1556 = vld [vmem:[%s1421 + $0x4] sm:$0xf]
      %v1557 = vld [vmem:[%s1421 + $0x8] sm:$0x1]
      %v1558 = vld [vmem:[%s1421 + $0x10] sm:$0xf]
      %v1559 = vld [vmem:[%s1421 + $0x14] sm:$0x1]
      %v1560 = vld [vmem:[%s1421 + $0x1c] sm:$0xf]
      %v1561 = vld [vmem:[%s1421 + $0x20] sm:$0x1]
      %v1562 = vld [vmem:[%s1421 + $0x28] sm:$0xf]
      %v1563 = vld [vmem:[%s1421 + $0x2c] sm:$0x1]
      %v1564 = vld [vmem:[%s1421 + $0x34] sm:$0xf]
      %v1565 = vld [vmem:[%s1421 + $0x38] sm:$0x1]
      %v1566 = vld [vmem:[%s1421 + $0x40] sm:$0xf]
      %v1567 = vld [vmem:[%s1421 + $0x44] sm:$0x1]
      %v1568 = vld [vmem:[%s1421 + $0x4c] sm:$0xf]
      %v1569 = vld [vmem:[%s1421 + $0x50] sm:$0x1]
      %v1570 = vld [vmem:[%s1421 + $0x58] sm:$0xf]
      %v1571 = vld [vmem:[%s1421 + $0x5c] sm:$0x1]
      %v1573 = vshrl.u32 %v1556, 16
      %v1575 = vrot.slane %v1573, 4
      %v1576 = vshll.u32 %v1556, 16
      %v1578 = vrot.slane %v1576, 5
      %v1579 = vor.u32 %v1575, %v1578
      %v1580 = vrot.slane %v1579, 4
      %v1582 = vshll.u32 %v1557, 16
      %v1584 = vrot.slane %v1582, 5
      %v1585 = vsel %vm224, %v1580, %v1584
      %v1587 = vshrl.u32 %v1558, 16
      %v1589 = vrot.slane %v1587, 4
      %v1590 = vshll.u32 %v1558, 16
      %v1592 = vrot.slane %v1590, 5
      %v1593 = vor.u32 %v1589, %v1592
      %v1594 = vrot.slane %v1593, 4
      %v1596 = vshll.u32 %v1559, 16
      %v1598 = vrot.slane %v1596, 5
      %v1599 = vsel %vm224, %v1594, %v1598
      %v1601 = vshrl.u32 %v1560, 16
      %v1603 = vrot.slane %v1601, 4
      %v1604 = vshll.u32 %v1560, 16
      %v1606 = vrot.slane %v1604, 5
      %v1607 = vor.u32 %v1603, %v1606
      %v1608 = vrot.slane %v1607, 4
      %v1610 = vshll.u32 %v1561, 16
      %v1612 = vrot.slane %v1610, 5
      %v1613 = vsel %vm224, %v1608, %v1612
      %v1615 = vshrl.u32 %v1562, 16
      %v1617 = vrot.slane %v1615, 4
      %v1618 = vshll.u32 %v1562, 16
      %v1620 = vrot.slane %v1618, 5
      %v1621 = vor.u32 %v1617, %v1620
      %v1622 = vrot.slane %v1621, 4
      %v1624 = vshll.u32 %v1563, 16
      %v1626 = vrot.slane %v1624, 5
      %v1627 = vsel %vm224, %v1622, %v1626
      %v1629 = vshrl.u32 %v1564, 16
      %v1631 = vrot.slane %v1629, 4
      %v1632 = vshll.u32 %v1564, 16
      %v1634 = vrot.slane %v1632, 5
      %v1635 = vor.u32 %v1631, %v1634
      %v1636 = vrot.slane %v1635, 4
      %v1638 = vshll.u32 %v1565, 16
      %v1640 = vrot.slane %v1638, 5
      %v1641 = vsel %vm224, %v1636, %v1640
      %v1643 = vshrl.u32 %v1566, 16
      %v1645 = vrot.slane %v1643, 4
      %v1646 = vshll.u32 %v1566, 16
      %v1648 = vrot.slane %v1646, 5
      %v1649 = vor.u32 %v1645, %v1648
      %v1650 = vrot.slane %v1649, 4
      %v1652 = vshll.u32 %v1567, 16
      %v1654 = vrot.slane %v1652, 5
      %v1655 = vsel %vm224, %v1650, %v1654
      %v1657 = vshrl.u32 %v1568, 16
      %v1659 = vrot.slane %v1657, 4
      %v1660 = vshll.u32 %v1568, 16
      %v1662 = vrot.slane %v1660, 5
      %v1663 = vor.u32 %v1659, %v1662
      %v1664 = vrot.slane %v1663, 4
      %v1666 = vshll.u32 %v1569, 16
      %v1668 = vrot.slane %v1666, 5
      %v1669 = vsel %vm224, %v1664, %v1668
      %v1671 = vshrl.u32 %v1570, 16
      %v1673 = vrot.slane %v1671, 4
      %v1674 = vshll.u32 %v1570, 16
      %v1676 = vrot.slane %v1674, 5
      %v1677 = vor.u32 %v1673, %v1676
      %v1678 = vrot.slane %v1677, 4
      %v1680 = vshll.u32 %v1571, 16
      %v1682 = vrot.slane %v1680, 5
      %v1683 = vsel %vm224, %v1678, %v1682
      %s1684 = scalar_lea.vmem %s1, 448
      %v1685 = vld [vmem:[%s1684] sm:$0xf]
      %v1686 = vld [vmem:[%s1684 + $0x4] sm:$0xf]
      %v1687 = vld [vmem:[%s1684 + $0x8] sm:$0xf]
      %v1688 = vld [vmem:[%s1684 + $0xc] sm:$0xf]
      %v1689 = vld [vmem:[%s1684 + $0x10] sm:$0xf]
      %v1690 = vld [vmem:[%s1684 + $0x14] sm:$0xf]
      %v1691 = vld [vmem:[%s1684 + $0x18] sm:$0xf]
      %v1692 = vld [vmem:[%s1684 + $0x1c] sm:$0xf]
      %v1693 = vld [vmem:[%s1684 + $0x20] sm:$0xf]
      %v1694 = vld [vmem:[%s1684 + $0x24] sm:$0xf]
      %v1695 = vld [vmem:[%s1684 + $0x28] sm:$0xf]
      %v1696 = vld [vmem:[%s1684 + $0x2c] sm:$0xf]
      %v1697 = vld [vmem:[%s1684 + $0x30] sm:$0xf]
      %v1698 = vld [vmem:[%s1684 + $0x34] sm:$0xf]
      %v1699 = vld [vmem:[%s1684 + $0x38] sm:$0xf]
      %v1700 = vld [vmem:[%s1684 + $0x3c] sm:$0xf]
      %v1701 = vunpack.c.l.b16 %v1585
      %v1702 = vunpack.c.l.b16 %v1599
      %v1703 = vunpack.c.l.b16 %v1613
      %v1704 = vunpack.c.l.b16 %v1627
      %v1705 = vunpack.c.l.b16 %v1641
      %v1706 = vunpack.c.l.b16 %v1655
      %v1707 = vunpack.c.l.b16 %v1669
      %v1708 = vunpack.c.l.b16 %v1683
      %v1709 = vpack.c.b16 %v1702, %v1701
      %v1710 = vpack.c.b16 %v1704, %v1703
      %v1711 = vpack.c.b16 %v1706, %v1705
      %v1712 = vpack.c.b16 %v1708, %v1707
      %v1733 = vunpack.c.l.b16 %v1685
      %v1734 = vunpack.c.l.b16 %v1686
      %v1735 = vunpack.c.l.b16 %v1687
      %v1736 = vunpack.c.l.b16 %v1688
      %v1737 = vunpack.c.l.b16 %v1689
      %v1738 = vunpack.c.l.b16 %v1690
      %v1739 = vunpack.c.l.b16 %v1691
      %v1740 = vunpack.c.l.b16 %v1692
      %v1741 = vunpack.c.l.b16 %v1693
      %v1742 = vunpack.c.l.b16 %v1694
      %v1743 = vunpack.c.l.b16 %v1695
      %v1744 = vunpack.c.l.b16 %v1696
      %v1745 = vunpack.c.l.b16 %v1697
      %v1746 = vunpack.c.l.b16 %v1698
      %v1747 = vunpack.c.l.b16 %v1699
      %v1748 = vunpack.c.l.b16 %v1700
      %v1749 = vpack.c.b16 %v1734, %v1733
      %v1750 = vpack.c.b16 %v1736, %v1735
      %v1751 = vpack.c.b16 %v1738, %v1737
      %v1752 = vpack.c.b16 %v1740, %v1739
      %v1753 = vpack.c.b16 %v1742, %v1741
      %v1754 = vpack.c.b16 %v1744, %v1743
      %v1755 = vpack.c.b16 %v1746, %v1745
      %v1756 = vpack.c.b16 %v1748, %v1747
      %1765 = vmatpush.bf16.msra.mxu0 %v1756
      %1766 = vmatpush.bf16.msra.mxu0 %v1755
      %1767 = vmatpush.bf16.msra.mxu0 %v1754
      %1768 = vmatpush.bf16.msra.mxu0 %v1753
      %1769 = vmatpush.bf16.msra.mxu0 %v1752
      %1770 = vmatpush.bf16.msra.mxu0 %v1751
      %1771 = vmatpush.bf16.msra.mxu0 %v1750
      %1772 = vmatpush.bf16.msra.mxu0 %v1749
      %1773 = vmatmul.bf16.gmra.mxu0 %v1709
      %v1774 = vpop.f32.mrf.mxu0
      %v1775 = vadd.f32 0.0, %v1774
      %v1776 = vpop.f32.mrf.mxu0
      %v1777 = vadd.f32 0.0, %v1776
      %1778 = vmatmul.bf16.gmra.mxu0 %v1710
      %v1779 = vpop.f32.mrf.mxu0
      %v1780 = vadd.f32 0.0, %v1779
      %v1781 = vpop.f32.mrf.mxu0
      %v1782 = vadd.f32 0.0, %v1781
      %1783 = vmatmul.bf16.gmra.mxu0 %v1711
      %v1784 = vpop.f32.mrf.mxu0
      %v1785 = vadd.f32 0.0, %v1784
      %v1786 = vpop.f32.mrf.mxu0
      %v1787 = vadd.f32 0.0, %v1786
      %1788 = vmatmul.bf16.gmra.mxu0 %v1712
      %v1789 = vpop.f32.mrf.mxu0
      %v1790 = vadd.f32 0.0, %v1789
      %v1791 = vpop.f32.mrf.mxu0
      %v1792 = vadd.f32 0.0, %v1791
      %1793 = vdwg.mxu0
      %v1794 = vadd.f32 %v1548, %v1775
      %v1795 = vadd.f32 %v1549, %v1777
      %v1796 = vadd.f32 %v1550, %v1780
      %v1797 = vadd.f32 %v1551, %v1782
      %v1798 = vadd.f32 %v1552, %v1785
      %v1799 = vadd.f32 %v1553, %v1787
      %v1800 = vadd.f32 %v1554, %v1790
      %v1801 = vadd.f32 %v1555, %v1792
      %v1802 = vld [vmem:[%s1421] sm:$0xf]
      %v1803 = vld [vmem:[%s1421 + $0x4] sm:$0x1]
      %v1804 = vld [vmem:[%s1421 + $0xc] sm:$0xf]
      %v1805 = vld [vmem:[%s1421 + $0x10] sm:$0x1]
      %v1806 = vld [vmem:[%s1421 + $0x18] sm:$0xf]
      %v1807 = vld [vmem:[%s1421 + $0x1c] sm:$0x1]
      %v1808 = vld [vmem:[%s1421 + $0x24] sm:$0xf]
      %v1809 = vld [vmem:[%s1421 + $0x28] sm:$0x1]
      %v1810 = vld [vmem:[%s1421 + $0x30] sm:$0xf]
      %v1811 = vld [vmem:[%s1421 + $0x34] sm:$0x1]
      %v1812 = vld [vmem:[%s1421 + $0x3c] sm:$0xf]
      %v1813 = vld [vmem:[%s1421 + $0x40] sm:$0x1]
      %v1814 = vld [vmem:[%s1421 + $0x48] sm:$0xf]
      %v1815 = vld [vmem:[%s1421 + $0x4c] sm:$0x1]
      %v1816 = vld [vmem:[%s1421 + $0x54] sm:$0xf]
      %v1817 = vld [vmem:[%s1421 + $0x58] sm:$0x1]
      %v1819 = vshrl.u32 %v1802, 16
      %v1821 = vrot.slane %v1819, 4
      %v1822 = vshll.u32 %v1802, 16
      %v1824 = vrot.slane %v1822, 5
      %v1825 = vor.u32 %v1821, %v1824
      %v1826 = vrot.slane %v1825, 4
      %v1828 = vshll.u32 %v1803, 16
      %v1830 = vrot.slane %v1828, 5
      %v1831 = vsel %vm224, %v1826, %v1830
      %v1833 = vshrl.u32 %v1804, 16
      %v1835 = vrot.slane %v1833, 4
      %v1836 = vshll.u32 %v1804, 16
      %v1838 = vrot.slane %v1836, 5
      %v1839 = vor.u32 %v1835, %v1838
      %v1840 = vrot.slane %v1839, 4
      %v1842 = vshll.u32 %v1805, 16
      %v1844 = vrot.slane %v1842, 5
      %v1845 = vsel %vm224, %v1840, %v1844
      %v1847 = vshrl.u32 %v1806, 16
      %v1849 = vrot.slane %v1847, 4
      %v1850 = vshll.u32 %v1806, 16
      %v1852 = vrot.slane %v1850, 5
      %v1853 = vor.u32 %v1849, %v1852
      %v1854 = vrot.slane %v1853, 4
      %v1856 = vshll.u32 %v1807, 16
      %v1858 = vrot.slane %v1856, 5
      %v1859 = vsel %vm224, %v1854, %v1858
      %v1861 = vshrl.u32 %v1808, 16
      %v1863 = vrot.slane %v1861, 4
      %v1864 = vshll.u32 %v1808, 16
      %v1866 = vrot.slane %v1864, 5
      %v1867 = vor.u32 %v1863, %v1866
      %v1868 = vrot.slane %v1867, 4
      %v1870 = vshll.u32 %v1809, 16
      %v1872 = vrot.slane %v1870, 5
      %v1873 = vsel %vm224, %v1868, %v1872
      %v1875 = vshrl.u32 %v1810, 16
      %v1877 = vrot.slane %v1875, 4
      %v1878 = vshll.u32 %v1810, 16
      %v1880 = vrot.slane %v1878, 5
      %v1881 = vor.u32 %v1877, %v1880
      %v1882 = vrot.slane %v1881, 4
      %v1884 = vshll.u32 %v1811, 16
      %v1886 = vrot.slane %v1884, 5
      %v1887 = vsel %vm224, %v1882, %v1886
      %v1889 = vshrl.u32 %v1812, 16
      %v1891 = vrot.slane %v1889, 4
      %v1892 = vshll.u32 %v1812, 16
      %v1894 = vrot.slane %v1892, 5
      %v1895 = vor.u32 %v1891, %v1894
      %v1896 = vrot.slane %v1895, 4
      %v1898 = vshll.u32 %v1813, 16
      %v1900 = vrot.slane %v1898, 5
      %v1901 = vsel %vm224, %v1896, %v1900
      %v1903 = vshrl.u32 %v1814, 16
      %v1905 = vrot.slane %v1903, 4
      %v1906 = vshll.u32 %v1814, 16
      %v1908 = vrot.slane %v1906, 5
      %v1909 = vor.u32 %v1905, %v1908
      %v1910 = vrot.slane %v1909, 4
      %v1912 = vshll.u32 %v1815, 16
      %v1914 = vrot.slane %v1912, 5
      %v1915 = vsel %vm224, %v1910, %v1914
      %v1917 = vshrl.u32 %v1816, 16
      %v1919 = vrot.slane %v1917, 4
      %v1920 = vshll.u32 %v1816, 16
      %v1922 = vrot.slane %v1920, 5
      %v1923 = vor.u32 %v1919, %v1922
      %v1924 = vrot.slane %v1923, 4
      %v1926 = vshll.u32 %v1817, 16
      %v1928 = vrot.slane %v1926, 5
      %v1929 = vsel %vm224, %v1924, %v1928
      %s1930 = scalar_lea.vmem %s1, 512
      %v1931 = vld [vmem:[%s1930] sm:$0xf]
      %v1932 = vld [vmem:[%s1930 + $0x4] sm:$0xf]
      %v1933 = vld [vmem:[%s1930 + $0x8] sm:$0xf]
      %v1934 = vld [vmem:[%s1930 + $0xc] sm:$0xf]
      %v1935 = vld [vmem:[%s1930 + $0x10] sm:$0xf]
      %v1936 = vld [vmem:[%s1930 + $0x14] sm:$0xf]
      %v1937 = vld [vmem:[%s1930 + $0x18] sm:$0xf]
      %v1938 = vld [vmem:[%s1930 + $0x1c] sm:$0xf]
      %v1939 = vld [vmem:[%s1930 + $0x20] sm:$0xf]
      %v1940 = vld [vmem:[%s1930 + $0x24] sm:$0xf]
      %v1941 = vld [vmem:[%s1930 + $0x28] sm:$0xf]
      %v1942 = vld [vmem:[%s1930 + $0x2c] sm:$0xf]
      %v1943 = vld [vmem:[%s1930 + $0x30] sm:$0xf]
      %v1944 = vld [vmem:[%s1930 + $0x34] sm:$0xf]
      %v1945 = vld [vmem:[%s1930 + $0x38] sm:$0xf]
      %v1946 = vld [vmem:[%s1930 + $0x3c] sm:$0xf]
      %v1947 = vunpack.c.l.b16 %v1831
      %v1948 = vunpack.c.l.b16 %v1845
      %v1949 = vunpack.c.l.b16 %v1859
      %v1950 = vunpack.c.l.b16 %v1873
      %v1951 = vunpack.c.l.b16 %v1887
      %v1952 = vunpack.c.l.b16 %v1901
      %v1953 = vunpack.c.l.b16 %v1915
      %v1954 = vunpack.c.l.b16 %v1929
      %v1955 = vpack.c.b16 %v1948, %v1947
      %v1956 = vpack.c.b16 %v1950, %v1949
      %v1957 = vpack.c.b16 %v1952, %v1951
      %v1958 = vpack.c.b16 %v1954, %v1953
      %v1979 = vunpack.c.l.b16 %v1931
      %v1980 = vunpack.c.l.b16 %v1932
      %v1981 = vunpack.c.l.b16 %v1933
      %v1982 = vunpack.c.l.b16 %v1934
      %v1983 = vunpack.c.l.b16 %v1935
      %v1984 = vunpack.c.l.b16 %v1936
      %v1985 = vunpack.c.l.b16 %v1937
      %v1986 = vunpack.c.l.b16 %v1938
      %v1987 = vunpack.c.l.b16 %v1939
      %v1988 = vunpack.c.l.b16 %v1940
      %v1989 = vunpack.c.l.b16 %v1941
      %v1990 = vunpack.c.l.b16 %v1942
      %v1991 = vunpack.c.l.b16 %v1943
      %v1992 = vunpack.c.l.b16 %v1944
      %v1993 = vunpack.c.l.b16 %v1945
      %v1994 = vunpack.c.l.b16 %v1946
      %v1995 = vpack.c.b16 %v1980, %v1979
      %v1996 = vpack.c.b16 %v1982, %v1981
      %v1997 = vpack.c.b16 %v1984, %v1983
      %v1998 = vpack.c.b16 %v1986, %v1985
      %v1999 = vpack.c.b16 %v1988, %v1987
      %v2000 = vpack.c.b16 %v1990, %v1989
      %v2001 = vpack.c.b16 %v1992, %v1991
      %v2002 = vpack.c.b16 %v1994, %v1993
      %2011 = vmatpush.bf16.msra.mxu0 %v2002
      %2012 = vmatpush.bf16.msra.mxu0 %v2001
      %2013 = vmatpush.bf16.msra.mxu0 %v2000
      %2014 = vmatpush.bf16.msra.mxu0 %v1999
      %2015 = vmatpush.bf16.msra.mxu0 %v1998
      %2016 = vmatpush.bf16.msra.mxu0 %v1997
      %2017 = vmatpush.bf16.msra.mxu0 %v1996
      %2018 = vmatpush.bf16.msra.mxu0 %v1995
      %2019 = vmatmul.bf16.gmra.mxu0 %v1955
      %v2020 = vpop.f32.mrf.mxu0
      %v2021 = vadd.f32 0.0, %v2020
      %v2022 = vpop.f32.mrf.mxu0
      %v2023 = vadd.f32 0.0, %v2022
      %2024 = vmatmul.bf16.gmra.mxu0 %v1956
      %v2025 = vpop.f32.mrf.mxu0
      %v2026 = vadd.f32 0.0, %v2025
      %v2027 = vpop.f32.mrf.mxu0
      %v2028 = vadd.f32 0.0, %v2027
      %2029 = vmatmul.bf16.gmra.mxu0 %v1957
      %v2030 = vpop.f32.mrf.mxu0
      %v2031 = vadd.f32 0.0, %v2030
      %v2032 = vpop.f32.mrf.mxu0
      %v2033 = vadd.f32 0.0, %v2032
      %2034 = vmatmul.bf16.gmra.mxu0 %v1958
      %v2035 = vpop.f32.mrf.mxu0
      %v2036 = vadd.f32 0.0, %v2035
      %v2037 = vpop.f32.mrf.mxu0
      %v2038 = vadd.f32 0.0, %v2037
      %2039 = vdwg.mxu0
      %v2040 = vadd.f32 %v1794, %v2021
      %v2041 = vadd.f32 %v1795, %v2023
      %v2042 = vadd.f32 %v1796, %v2026
      %v2043 = vadd.f32 %v1797, %v2028
      %v2044 = vadd.f32 %v1798, %v2031
      %v2045 = vadd.f32 %v1799, %v2033
      %v2046 = vadd.f32 %v1800, %v2036
      %v2047 = vadd.f32 %v1801, %v2038
      %v2048 = vpack.c.bf16 %v2040, %v2040
      %v2049 = vpack.c.bf16 %v2041, %v2041
      %v2050 = vpack.c.bf16 %v2042, %v2042
      %v2051 = vpack.c.bf16 %v2043, %v2043
      %v2052 = vpack.c.bf16 %v2044, %v2044
      %v2053 = vpack.c.bf16 %v2045, %v2045
      %v2054 = vpack.c.bf16 %v2046, %v2046
      %v2055 = vpack.c.bf16 %v2047, %v2047
      %v2056 = vunpack.c.l.bf16 %v2048
      %v2057 = vunpack.c.l.bf16 %v2049
      %v2058 = vunpack.c.l.bf16 %v2050
      %v2059 = vunpack.c.l.bf16 %v2051
      %v2060 = vunpack.c.l.bf16 %v2052
      %v2061 = vunpack.c.l.bf16 %v2053
      %v2062 = vunpack.c.l.bf16 %v2054
      %v2063 = vunpack.c.l.bf16 %v2055
      %2064 = vst [vmem:[%s177] sm:$0xf] %v2048
      %2065 = vst [vmem:[%s177 + $0x4] sm:$0xf] %v2049
      %2066 = vst [vmem:[%s177 + $0x8] sm:$0xf] %v2050
      %2067 = vst [vmem:[%s177 + $0xc] sm:$0xf] %v2051
      %2068 = vst [vmem:[%s177 + $0x10] sm:$0xf] %v2052
      %2069 = vst [vmem:[%s177 + $0x14] sm:$0xf] %v2053
      %2070 = vst [vmem:[%s177 + $0x18] sm:$0xf] %v2054
      %2071 = vst [vmem:[%s177 + $0x1c] sm:$0xf] %v2055
      %v2072 = vadd.f32 %v2056, %v2057
      %v2073 = vadd.f32 %v2072, %v2058
      %v2074 = vadd.f32 %v2073, %v2059
      %v2075 = vadd.f32 %v2074, %v2060
      %v2076 = vadd.f32 %v2075, %v2061
      %v2077 = vadd.f32 %v2076, %v2062
      %v2078 = vadd.f32 %v2077, %v2063
      %v2079 = vrot.slane %v2078, 4
      %v2080 = vadd.f32 %v2078, %v2079
      %v2081 = vrot.slane %v2080, 2
      %v2082 = vadd.f32 %v2080, %v2081
      %v2083 = vrot.slane %v2082, 1
      %v2084 = vadd.f32 %v2082, %v2083
      %v2085 = vmul.f32 %v2056, %v2056
      %v2086 = vmul.f32 %v2057, %v2057
      %v2087 = vmul.f32 %v2058, %v2058
      %v2088 = vmul.f32 %v2059, %v2059
      %v2089 = vmul.f32 %v2060, %v2060
      %v2090 = vmul.f32 %v2061, %v2061
      %v2091 = vmul.f32 %v2062, %v2062
      %v2092 = vmul.f32 %v2063, %v2063
      %v2093 = vadd.f32 %v2085, %v2086
      %v2094 = vadd.f32 %v2093, %v2087
      %v2095 = vadd.f32 %v2094, %v2088
      %v2096 = vadd.f32 %v2095, %v2089
      %v2097 = vadd.f32 %v2096, %v2090
      %v2098 = vadd.f32 %v2097, %v2091
      %v2099 = vadd.f32 %v2098, %v2092
      %v2100 = vrot.slane %v2099, 4
      %v2101 = vadd.f32 %v2099, %v2100
      %v2102 = vrot.slane %v2101, 2
      %v2103 = vadd.f32 %v2101, %v2102
      %v2104 = vrot.slane %v2103, 1
      %v2105 = vadd.f32 %v2103, %v2104
      %vm2106 = vcmask 1040384
      %v2107 = vsel %vm2106, %v2084, %v2105
      %2108 = vst [vmem:[%s181] sm:$0x3] %v2107
      %p2109 = scmp.lt.s32.totalorder %s15, 1
      %s2110 = scalar_select %p2109, %s15, 1
      %s2111 = smul.addr %s2110, 8
      %s2112 = smul.addr %s2111, 4
      %s2113 = scalar_lea.vmem %s2, %s2112
      %p2114 = scmp.lt.s32.totalorder %s15, 1
      %s2115 = scalar_select %p2114, %s15, 1
      %s2116 = smul.addr %s2115, 2
      %s2117 = scalar_lea.vmem %s3, %s2116
      // Predicated region
      $region29: #{res_bottleneck_block.7} parent=27 // pred_check
        %p2118 = pneg %p80
      $region30: #{res_bottleneck_block.7} parent=27 // pred_check_branch
        %2120 = sbr.rel (%p2118) target = $region32
      $region31: #{res_bottleneck_block.7} parent=27 // pred_region
        _
      $region32: #{res_bottleneck_block.7} parent=27 // pred_fallthru
        _
      // Predicated region
      $region33: #{res_bottleneck_block.7} parent=27 // pred_check
        %p2121 = pneg %p106
      $region34: #{res_bottleneck_block.7} parent=27 // pred_check_branch
        %2123 = sbr.rel (%p2121) target = $region36
      $region35: #{res_bottleneck_block.7} parent=27 // pred_region
        _
      $region36: #{res_bottleneck_block.7} parent=27 // pred_fallthru
        _
    $region28: #{res_bottleneck_block.7} parent=5 // pred_fallthru
      _
    %p2124 = scmp.le.s32.totalorder 2, %s10
    // Predicated region
    $region37: #{res_bottleneck_block.7} parent=5 // pred_check
      %p2125 = pneg %p2124
    $region38: #{res_bottleneck_block.7} parent=5 // pred_check_branch
      %2127 = sbr.rel (%p2125) target = $region40
    $region39: #{res_bottleneck_block.7} parent=5 // pred_region
      %s2128 = ssub.s32 %s10, 2
      // Predicated region
      $region41: #{res_bottleneck_block.7} parent=39 // pred_check
        %p2129 = pneg %p86
      $region42: #{res_bottleneck_block.7} parent=39 // pred_check_branch
        %2131 = sbr.rel (%p2129) target = $region44
      $region43: #{res_bottleneck_block.7} parent=39 // pred_region
        %p2132 = scmp.lt.s32.totalorder %s16, 1
        %s2133 = scalar_select %p2132, %s16, 1
        %s2134 = smul.addr %s2133, 8
        %s2135 = smul.addr %s2134, 4
        %s2136 = scalar_lea.vmem %s2, %s2135
      $region44: #{res_bottleneck_block.7} parent=39 // pred_fallthru
        _
      // Predicated region
      $region45: #{res_bottleneck_block.7} parent=39 // pred_check
        %p2137 = pneg %p112
      $region46: #{res_bottleneck_block.7} parent=39 // pred_check_branch
        %2139 = sbr.rel (%p2137) target = $region48
      $region47: #{res_bottleneck_block.7} parent=39 // pred_region
        %p2140 = scmp.lt.s32.totalorder %s16, 1
        %s2141 = scalar_select %p2140, %s16, 1
        %s2142 = smul.addr %s2141, 2
        %s2143 = scalar_lea.vmem %s3, %s2142
      $region48: #{res_bottleneck_block.7} parent=39 // pred_fallthru
        _
    $region40: #{res_bottleneck_block.7} parent=5 // pred_fallthru
      _
  $region6: #{res_bottleneck_block.7} parent=0 // loop_footer
    %s14 = sadd.s32 1, %s10
  $region7: #{res_bottleneck_block.7} parent=0 // loop_footer_branch
    %9 = sbr.rel target = $region3
  $region8: #{res_bottleneck_block.7} parent=0 // loop_exit
    _

// kernel: res_bottleneck_block.9
$region0: #{res_bottleneck_block.9}
  #allocation0 [shape = 'u32[]', space=smem, size = 0x4, offset = 0x4, fixed_abs, tag = 'smem constant byte address 0x4 - core index']
  #allocation1 [shape = 'u32[72,128]{1,0:T(1,128)}', space=vmem, size = 0x9000, scoped, tag = 'internal scratch']
  %s0 = inlined_call_operand.vmem [shape: bf16[128,128], index: 0, kind: input, shape index: {}]
  %s1 = inlined_call_operand.vmem [shape: f32[1,128], index: 1, kind: input, shape index: {}]
  %s2 = inlined_call_operand.vmem [shape: f32[1,128], index: 2, kind: input, shape index: {}]
  %s3 = inlined_call_operand.vmem [shape: bf16[128,128], index: 3, kind: input, shape index: {}]
  %s4 = inlined_call_operand.vmem [shape: bf16[128,128], index: 4, kind: input, shape index: {}]
  %s5 = inlined_call_operand.vmem [shape: f32[1,128], index: 5, kind: input, shape index: {}]
  %s6 = inlined_call_operand.vmem [shape: f32[128,128], index: 6, kind: output, shape index: {}]
  %s7 = sld [smem:[#allocation0]]
  $region34: #{res_bottleneck_block.9} parent=0
    _
  %s9 = ssub.s32 1, %s7
  %s10 = scalar_select 0, %s9, %s7
  // Predicated region
  $region2: #{res_bottleneck_block.9} parent=0 // pred_check
    _
  $region3: #{res_bottleneck_block.9} parent=0 // pred_check_branch
    %12 = sbr.rel (0) target = $region5
  $region4: #{res_bottleneck_block.9} parent=0 // pred_region
    _
  $region5: #{res_bottleneck_block.9} parent=0 // pred_fallthru
    _
  // Predicated region
  $region6: #{res_bottleneck_block.9} parent=0 // pred_check
    _
  $region7: #{res_bottleneck_block.9} parent=0 // pred_check_branch
    %14 = sbr.rel (0) target = $region9
  $region8: #{res_bottleneck_block.9} parent=0 // pred_region
    _
  $region9: #{res_bottleneck_block.9} parent=0 // pred_fallthru
    _
  // Predicated region
  $region10: #{res_bottleneck_block.9} parent=0 // pred_check
    _
  $region11: #{res_bottleneck_block.9} parent=0 // pred_check_branch
    %16 = sbr.rel (0) target = $region13
  $region12: #{res_bottleneck_block.9} parent=0 // pred_region
    _
  $region13: #{res_bottleneck_block.9} parent=0 // pred_fallthru
    _
  // Predicated region
  $region14: #{res_bottleneck_block.9} parent=0 // pred_check
    _
  $region15: #{res_bottleneck_block.9} parent=0 // pred_check_branch
    %18 = sbr.rel (0) target = $region17
  $region16: #{res_bottleneck_block.9} parent=0 // pred_region
    _
  $region17: #{res_bottleneck_block.9} parent=0 // pred_fallthru
    _
  // Predicated region
  $region18: #{res_bottleneck_block.9} parent=0 // pred_check
    _
  $region19: #{res_bottleneck_block.9} parent=0 // pred_check_branch
    %20 = sbr.rel (0) target = $region21
  $region20: #{res_bottleneck_block.9} parent=0 // pred_region
    _
  $region21: #{res_bottleneck_block.9} parent=0 // pred_fallthru
    _
  // Predicated region
  $region22: #{res_bottleneck_block.9} parent=0 // pred_check
    _
  $region23: #{res_bottleneck_block.9} parent=0 // pred_check_branch
    %22 = sbr.rel (0) target = $region25
  $region24: #{res_bottleneck_block.9} parent=0 // pred_region
    _
  $region25: #{res_bottleneck_block.9} parent=0 // pred_fallthru
    _
  %v23 = vld [vmem:[%s3] sm:$0xf]
  %v24 = vld [vmem:[%s3 + $0x4] sm:$0xf]
  %v25 = vld [vmem:[%s3 + $0x8] sm:$0xf]
  %v26 = vld [vmem:[%s3 + $0xc] sm:$0xf]
  %v27 = vld [vmem:[%s3 + $0x10] sm:$0xf]
  %v28 = vld [vmem:[%s3 + $0x14] sm:$0xf]
  %v29 = vld [vmem:[%s3 + $0x18] sm:$0xf]
  %v30 = vld [vmem:[%s3 + $0x1c] sm:$0xf]
  %v31 = vld [vmem:[%s3 + $0x20] sm:$0xf]
  %v32 = vld [vmem:[%s3 + $0x24] sm:$0xf]
  %v33 = vld [vmem:[%s3 + $0x28] sm:$0xf]
  %v34 = vld [vmem:[%s3 + $0x2c] sm:$0xf]
  %v35 = vld [vmem:[%s3 + $0x30] sm:$0xf]
  %v36 = vld [vmem:[%s3 + $0x34] sm:$0xf]
  %v37 = vld [vmem:[%s3 + $0x38] sm:$0xf]
  %v38 = vld [vmem:[%s3 + $0x3c] sm:$0xf]
  %v39 = vld [vmem:[%s4] sm:$0xf]
  %v40 = vld [vmem:[%s4 + $0x4] sm:$0xf]
  %v41 = vld [vmem:[%s4 + $0x8] sm:$0xf]
  %v42 = vld [vmem:[%s4 + $0xc] sm:$0xf]
  %v43 = vld [vmem:[%s4 + $0x10] sm:$0xf]
  %v44 = vld [vmem:[%s4 + $0x14] sm:$0xf]
  %v45 = vld [vmem:[%s4 + $0x18] sm:$0xf]
  %v46 = vld [vmem:[%s4 + $0x1c] sm:$0xf]
  %v47 = vld [vmem:[%s4 + $0x20] sm:$0xf]
  %v48 = vld [vmem:[%s4 + $0x24] sm:$0xf]
  %v49 = vld [vmem:[%s4 + $0x28] sm:$0xf]
  %v50 = vld [vmem:[%s4 + $0x2c] sm:$0xf]
  %v51 = vld [vmem:[%s4 + $0x30] sm:$0xf]
  %v52 = vld [vmem:[%s4 + $0x34] sm:$0xf]
  %v53 = vld [vmem:[%s4 + $0x38] sm:$0xf]
  %v54 = vld [vmem:[%s4 + $0x3c] sm:$0xf]
  %v55 = vld [vmem:[%s5] sm:$0x1]
  %v57 = vperm.slane %v55, 0
  %v75 = vunpack.c.l.b16 %v23
  %v76 = vunpack.c.l.b16 %v24
  %v77 = vunpack.c.l.b16 %v25
  %v78 = vunpack.c.l.b16 %v26
  %v79 = vunpack.c.l.b16 %v27
  %v80 = vunpack.c.l.b16 %v28
  %v81 = vunpack.c.l.b16 %v29
  %v82 = vunpack.c.l.b16 %v30
  %v83 = vunpack.c.l.b16 %v31
  %v84 = vunpack.c.l.b16 %v32
  %v85 = vunpack.c.l.b16 %v33
  %v86 = vunpack.c.l.b16 %v34
  %v87 = vunpack.c.l.b16 %v35
  %v88 = vunpack.c.l.b16 %v36
  %v89 = vunpack.c.l.b16 %v37
  %v90 = vunpack.c.l.b16 %v38
  %v91 = vpack.c.b16 %v76, %v75
  %v92 = vpack.c.b16 %v78, %v77
  %v93 = vpack.c.b16 %v80, %v79
  %v94 = vpack.c.b16 %v82, %v81
  %v95 = vpack.c.b16 %v84, %v83
  %v96 = vpack.c.b16 %v86, %v85
  %v97 = vpack.c.b16 %v88, %v87
  %v98 = vpack.c.b16 %v90, %v89
  %v123 = vunpack.c.l.b16 %v39
  %v124 = vunpack.c.l.b16 %v40
  %v125 = vunpack.c.l.b16 %v41
  %v126 = vunpack.c.l.b16 %v42
  %v127 = vunpack.c.l.b16 %v43
  %v128 = vunpack.c.l.b16 %v44
  %v129 = vunpack.c.l.b16 %v45
  %v130 = vunpack.c.l.b16 %v46
  %v131 = vunpack.c.l.b16 %v47
  %v132 = vunpack.c.l.b16 %v48
  %v133 = vunpack.c.l.b16 %v49
  %v134 = vunpack.c.l.b16 %v50
  %v135 = vunpack.c.l.b16 %v51
  %v136 = vunpack.c.l.b16 %v52
  %v137 = vunpack.c.l.b16 %v53
  %v138 = vunpack.c.l.b16 %v54
  %v139 = vpack.c.b16 %v124, %v123
  %v140 = vpack.c.b16 %v126, %v125
  %v141 = vpack.c.b16 %v128, %v127
  %v142 = vpack.c.b16 %v130, %v129
  %v143 = vpack.c.b16 %v132, %v131
  %v144 = vpack.c.b16 %v134, %v133
  %v145 = vpack.c.b16 %v136, %v135
  %v146 = vpack.c.b16 %v138, %v137
  %155 = vmatpush.bf16.msra.mxu0 %v146
  %156 = vmatpush.bf16.msra.mxu0 %v145
  %157 = vmatpush.bf16.msra.mxu0 %v144
  %158 = vmatpush.bf16.msra.mxu0 %v143
  %159 = vmatpush.bf16.msra.mxu0 %v142
  %160 = vmatpush.bf16.msra.mxu0 %v141
  %161 = vmatpush.bf16.msra.mxu0 %v140
  %162 = vmatpush.bf16.msra.mxu0 %v139
  %163 = vmatmul.bf16.gmra.mxu0 %v91
  %v164 = vpop.f32.mrf.mxu0
  %v165 = vadd.f32 %v57, %v164
  %v166 = vpop.f32.mrf.mxu0
  %v167 = vadd.f32 %v57, %v166
  %168 = vmatmul.bf16.gmra.mxu0 %v92
  %v169 = vpop.f32.mrf.mxu0
  %v170 = vadd.f32 %v57, %v169
  %v171 = vpop.f32.mrf.mxu0
  %v172 = vadd.f32 %v57, %v171
  %173 = vmatmul.bf16.gmra.mxu0 %v93
  %v174 = vpop.f32.mrf.mxu0
  %v175 = vadd.f32 %v57, %v174
  %v176 = vpop.f32.mrf.mxu0
  %v177 = vadd.f32 %v57, %v176
  %178 = vmatmul.bf16.gmra.mxu0 %v94
  %v179 = vpop.f32.mrf.mxu0
  %v180 = vadd.f32 %v57, %v179
  %v181 = vpop.f32.mrf.mxu0
  %v182 = vadd.f32 %v57, %v181
  %183 = vmatmul.bf16.gmra.mxu0 %v95
  %v184 = vpop.f32.mrf.mxu0
  %v185 = vadd.f32 %v57, %v184
  %v186 = vpop.f32.mrf.mxu0
  %v187 = vadd.f32 %v57, %v186
  %188 = vmatmul.bf16.gmra.mxu0 %v96
  %v189 = vpop.f32.mrf.mxu0
  %v190 = vadd.f32 %v57, %v189
  %v191 = vpop.f32.mrf.mxu0
  %v192 = vadd.f32 %v57, %v191
  %193 = vmatmul.bf16.gmra.mxu0 %v97
  %v194 = vpop.f32.mrf.mxu0
  %v195 = vadd.f32 %v57, %v194
  %v196 = vpop.f32.mrf.mxu0
  %v197 = vadd.f32 %v57, %v196
  %198 = vmatmul.bf16.gmra.mxu0 %v98
  %v199 = vpop.f32.mrf.mxu0
  %v200 = vadd.f32 %v57, %v199
  %v201 = vpop.f32.mrf.mxu0
  %v202 = vadd.f32 %v57, %v201
  %203 = vdwg.mxu0
  %v204 = vld [vmem:[%s0] sm:$0xf]
  %v205 = vld [vmem:[%s0 + $0x4] sm:$0xf]
  %v206 = vld [vmem:[%s0 + $0x8] sm:$0xf]
  %v207 = vld [vmem:[%s0 + $0xc] sm:$0xf]
  %v208 = vld [vmem:[%s0 + $0x10] sm:$0xf]
  %v209 = vld [vmem:[%s0 + $0x14] sm:$0xf]
  %v210 = vld [vmem:[%s0 + $0x18] sm:$0xf]
  %v211 = vld [vmem:[%s0 + $0x1c] sm:$0xf]
  %v212 = vld [vmem:[%s0 + $0x20] sm:$0xf]
  %v213 = vld [vmem:[%s0 + $0x24] sm:$0xf]
  %v214 = vld [vmem:[%s0 + $0x28] sm:$0xf]
  %v215 = vld [vmem:[%s0 + $0x2c] sm:$0xf]
  %v216 = vld [vmem:[%s0 + $0x30] sm:$0xf]
  %v217 = vld [vmem:[%s0 + $0x34] sm:$0xf]
  %v218 = vld [vmem:[%s0 + $0x38] sm:$0xf]
  %v219 = vld [vmem:[%s0 + $0x3c] sm:$0xf]
  %v220 = vunpack.c.l.bf16 %v204
  %v221 = vunpack.c.l.bf16 %v205
  %v222 = vunpack.c.l.bf16 %v206
  %v223 = vunpack.c.l.bf16 %v207
  %v224 = vunpack.c.l.bf16 %v208
  %v225 = vunpack.c.l.bf16 %v209
  %v226 = vunpack.c.l.bf16 %v210
  %v227 = vunpack.c.l.bf16 %v211
  %v228 = vunpack.c.l.bf16 %v212
  %v229 = vunpack.c.l.bf16 %v213
  %v230 = vunpack.c.l.bf16 %v214
  %v231 = vunpack.c.l.bf16 %v215
  %v232 = vunpack.c.l.bf16 %v216
  %v233 = vunpack.c.l.bf16 %v217
  %v234 = vunpack.c.l.bf16 %v218
  %v235 = vunpack.c.l.bf16 %v219
  %v236 = vld [vmem:[%s1] sm:$0x1]
  %v238 = vperm.slane %v236, 0
  %v240 = vmul.f32 %v220, %v238
  %v241 = vmul.f32 %v221, %v238
  %v242 = vmul.f32 %v222, %v238
  %v243 = vmul.f32 %v223, %v238
  %v244 = vmul.f32 %v224, %v238
  %v245 = vmul.f32 %v225, %v238
  %v246 = vmul.f32 %v226, %v238
  %v247 = vmul.f32 %v227, %v238
  %v248 = vmul.f32 %v228, %v238
  %v249 = vmul.f32 %v229, %v238
  %v250 = vmul.f32 %v230, %v238
  %v251 = vmul.f32 %v231, %v238
  %v252 = vmul.f32 %v232, %v238
  %v253 = vmul.f32 %v233, %v238
  %v254 = vmul.f32 %v234, %v238
  %v255 = vmul.f32 %v235, %v238
  %v256 = vld [vmem:[%s2] sm:$0x1]
  %v258 = vperm.slane %v256, 0
  %v260 = vadd.f32 %v240, %v258
  %v261 = vadd.f32 %v241, %v258
  %v262 = vadd.f32 %v242, %v258
  %v263 = vadd.f32 %v243, %v258
  %v264 = vadd.f32 %v244, %v258
  %v265 = vadd.f32 %v245, %v258
  %v266 = vadd.f32 %v246, %v258
  %v267 = vadd.f32 %v247, %v258
  %v268 = vadd.f32 %v248, %v258
  %v269 = vadd.f32 %v249, %v258
  %v270 = vadd.f32 %v250, %v258
  %v271 = vadd.f32 %v251, %v258
  %v272 = vadd.f32 %v252, %v258
  %v273 = vadd.f32 %v253, %v258
  %v274 = vadd.f32 %v254, %v258
  %v275 = vadd.f32 %v255, %v258
  %v276 = vadd.f32 %v260, %v165
  %v277 = vadd.f32 %v261, %v167
  %v278 = vadd.f32 %v262, %v170
  %v279 = vadd.f32 %v263, %v172
  %v280 = vadd.f32 %v264, %v175
  %v281 = vadd.f32 %v265, %v177
  %v282 = vadd.f32 %v266, %v180
  %v283 = vadd.f32 %v267, %v182
  %v284 = vadd.f32 %v268, %v185
  %v285 = vadd.f32 %v269, %v187
  %v286 = vadd.f32 %v270, %v190
  %v287 = vadd.f32 %v271, %v192
  %v288 = vadd.f32 %v272, %v195
  %v289 = vadd.f32 %v273, %v197
  %v290 = vadd.f32 %v274, %v200
  %v291 = vadd.f32 %v275, %v202
  %v292 = vmax.f32 %v276, 0.0
  %v293 = vmax.f32 %v277, 0.0
  %v294 = vmax.f32 %v278, 0.0
  %v295 = vmax.f32 %v279, 0.0
  %v296 = vmax.f32 %v280, 0.0
  %v297 = vmax.f32 %v281, 0.0
  %v298 = vmax.f32 %v282, 0.0
  %v299 = vmax.f32 %v283, 0.0
  %v300 = vmax.f32 %v284, 0.0
  %v301 = vmax.f32 %v285, 0.0
  %v302 = vmax.f32 %v286, 0.0
  %v303 = vmax.f32 %v287, 0.0
  %v304 = vmax.f32 %v288, 0.0
  %v305 = vmax.f32 %v289, 0.0
  %v306 = vmax.f32 %v290, 0.0
  %v307 = vmax.f32 %v291, 0.0
  %308 = vst [vmem:[%s6] sm:$0xff] %v292
  %309 = vst [vmem:[%s6 + $0x8] sm:$0xff] %v293
  %310 = vst [vmem:[%s6 + $0x10] sm:$0xff] %v294
  %311 = vst [vmem:[%s6 + $0x18] sm:$0xff] %v295
  %312 = vst [vmem:[%s6 + $0x20] sm:$0xff] %v296
  %313 = vst [vmem:[%s6 + $0x28] sm:$0xff] %v297
  %314 = vst [vmem:[%s6 + $0x30] sm:$0xff] %v298
  %315 = vst [vmem:[%s6 + $0x38] sm:$0xff] %v299
  %316 = vst [vmem:[%s6 + $0x40] sm:$0xff] %v300
  %317 = vst [vmem:[%s6 + $0x48] sm:$0xff] %v301
  %318 = vst [vmem:[%s6 + $0x50] sm:$0xff] %v302
  %319 = vst [vmem:[%s6 + $0x58] sm:$0xff] %v303
  %320 = vst [vmem:[%s6 + $0x60] sm:$0xff] %v304
  %321 = vst [vmem:[%s6 + $0x68] sm:$0xff] %v305
  %322 = vst [vmem:[%s6 + $0x70] sm:$0xff] %v306
  %323 = vst [vmem:[%s6 + $0x78] sm:$0xff] %v307
  // Predicated region
  $region26: #{res_bottleneck_block.9} parent=0 // pred_check
    _
  $region27: #{res_bottleneck_block.9} parent=0 // pred_check_branch
    %325 = sbr.rel (0) target = $region29
  $region28: #{res_bottleneck_block.9} parent=0 // pred_region
    _
  $region29: #{res_bottleneck_block.9} parent=0 // pred_fallthru
    _
  // Predicated region
  $region30: #{res_bottleneck_block.9} parent=0 // pred_check
    _
  $region31: #{res_bottleneck_block.9} parent=0 // pred_check_branch
    %327 = sbr.rel (0) target = $region33
  $region32: #{res_bottleneck_block.9} parent=0 // pred_region
    _
  $region33: #{res_bottleneck_block.9} parent=0 // pred_fallthru
    _

</llo_original>
